<compile_context>
chip_gen: v7x
topology: tpu7x:2x2x1
jax: 0.10.0
libtpu: 0.0.40
codegen_flags: <defaults>
</compile_context>

<pallas_src>
import jax
import jax.numpy as jnp
from jax.experimental import pallas as pl
from jax.experimental.pallas import tpu as pltpu


def _lstm_fc_kernel(x_ref,        # (Tb, Ts, I)  f32 input chunk (batch-first)
                    w_ih0_ref,    # (I, 4H)   bf16
                    w_hh0_ref,    # (H, 4H)   bf16
                    b0_ref,       # (1, 4H)   f32   (= b_ih0 + b_hh0)
                    w_cat1_ref,   # (2H, 4H)  bf16  (= [W_ih1; W_hh1] stacked)
                    b1_ref,       # (1, 4H)   f32   (= b_ih1 + b_hh1)
                    w_fc_ref,     # (1, H)    f32
                    b_fc_ref,     # (1, 1)    f32
                    out_ref,      # (Tb, 1)   f32
                    h0_ref, c0_ref, h1_ref, c1_ref):   # (Tb, H) f32 VMEM scratch (state carry)
    t_blk = pl.program_id(1)
    Tb, Ts, I = x_ref.shape
    H = w_hh0_ref.shape[0]
    mxu_dt = w_hh0_ref.dtype

    @pl.when(t_blk == 0)
    def _init_state():
        z = jnp.zeros((Tb, H), jnp.float32)
        h0_ref[...] = z
        c0_ref[...] = z
        h1_ref[...] = z
        c1_ref[...] = z

    # ---- hoisted layer-0 input projection: ONE MXU matmul for the whole time chunk ----
    x2d = x_ref[...].reshape(Tb * Ts, I).astype(mxu_dt)
    gx0 = jnp.dot(x2d, w_ih0_ref[...], preferred_element_type=jnp.float32)
    gx0 = (gx0 + b0_ref[...]).reshape(Tb, Ts, 4 * H)        # bias folded once per chunk

    # hoisted loads / broadcasts (never re-materialized inside the serial loop)
    w_hh0 = w_hh0_ref[...]
    w_cat1 = w_cat1_ref[...]
    b1 = jnp.broadcast_to(b1_ref[...], (Tb, 4 * H))

    h0 = h0_ref[...]
    c0 = c0_ref[...]
    h1 = h1_ref[...]
    c1 = c1_ref[...]

    def gate_act(g):  # PyTorch gate order [i, f, g, o]; all elementwise math in f32
        i = jax.nn.sigmoid(g[:, 0 * H:1 * H])
        f = jax.nn.sigmoid(g[:, 1 * H:2 * H])
        gg = jnp.tanh(g[:, 2 * H:3 * H])
        o = jax.nn.sigmoid(g[:, 3 * H:4 * H])
        return i, f, gg, o

    # static (fully unrolled) time loop over this chunk — LLO can interleave adjacent steps
    for t in range(Ts):
        # layer 0: only the recurrent matmul remains on the serial path
        g0 = gx0[:, t, :] + jnp.dot(h0.astype(mxu_dt), w_hh0,
                                    preferred_element_type=jnp.float32)
        i0, f0, gg0, o0 = gate_act(g0)
        c0 = f0 * c0 + i0 * gg0
        h0 = o0 * jnp.tanh(c0)

        # layer 1: single fused matmul on [x_t(=h0), h1]  (inter-layer dropout = identity in eval)
        hcat = jnp.concatenate([h0, h1], axis=-1).astype(mxu_dt)   # (Tb, 2H), 128-lane aligned
        g1 = jnp.dot(hcat, w_cat1, preferred_element_type=jnp.float32) + b1
        i1, f1, gg1, o1 = gate_act(g1)
        c1 = f1 * c1 + i1 * gg1
        h1 = o1 * jnp.tanh(c1)

    # carry state to the next seq chunk
    h0_ref[...] = h0
    c0_ref[...] = c0
    h1_ref[...] = h1
    c1_ref[...] = c1

    @pl.when(t_blk == pl.num_programs(1) - 1)
    def _finalize():
        # fc(last_output): Linear(H -> 1) as a VPU multiply + lane reduction
        out = jnp.sum(h1 * w_fc_ref[...], axis=-1, keepdims=True) + b_fc_ref[...]
        out_ref[...] = out.astype(out_ref.dtype)


def lstm_model_forward(x, params, *, block_b=None, block_s=None):
    """x: (batch, seq, input_size) float32, batch_first  ->  (batch, 1) float32."""
    B, S, I = x.shape
    H = params["w_hh0"].shape[0]
    Tb = B if block_b is None else block_b
    Ts = S if block_s is None else block_s
    assert B % Tb == 0 and S % Ts == 0
    # (8,128) tiling rule: sublane dims of the x / out blocks must be full-extent or % 8 == 0.
    assert Tb == B or Tb % 8 == 0
    assert Ts == S or Ts % 8 == 0

    grid = (B // Tb, S // Ts)

    def resident(arr):
        zeros = (0,) * arr.ndim
        return pl.BlockSpec(arr.shape, lambda b, t, _z=zeros: _z)   # stays in VMEM all grid steps

    return pl.pallas_call(
        _lstm_fc_kernel,
        out_shape=jax.ShapeDtypeStruct((B, 1), jnp.float32),
        grid_spec=pltpu.PrefetchScalarGridSpec(
            num_scalar_prefetch=0,
            grid=grid,
            in_specs=[
                pl.BlockSpec((Tb, Ts, I), lambda b, t: (b, t, 0)),   # x streams, double-buffered
                resident(params["w_ih0"]),
                resident(params["w_hh0"]),
                resident(params["b0"]),
                resident(params["w_cat1"]),
                resident(params["b1"]),
                resident(params["w_fc"]),
                resident(params["b_fc"]),
            ],
            out_specs=pl.BlockSpec((Tb, 1), lambda b, t: (b, 0)),    # resident across seq axis
            scratch_shapes=[pltpu.VMEM((Tb, H), jnp.float32)] * 4,   # h0, c0, h1, c1
        ),
        compiler_params=pltpu.CompilerParams(
            dimension_semantics=("parallel", "arbitrary"),
            vmem_limit_bytes=16 * 1024 * 1024,
        ),
    )(x,
      params["w_ih0"], params["w_hh0"], params["b0"],
      params["w_cat1"], params["b1"],
      params["w_fc"], params["b_fc"])


def _xavier_uniform(key, shape):
    # Matches torch.nn.init.xavier_uniform_ on the equivalent (fan_out, fan_in) matrix;
    # we build the already-transposed (fan_in, fan_out) layout with the same bound.
    fan_in, fan_out = shape
    bound = (6.0 / (fan_in + fan_out)) ** 0.5
    return jax.random.uniform(key, shape, jnp.float32, -bound, bound)


def init_params(key, input_size, hidden_size, mxu_dtype=jnp.bfloat16):
    H = hidden_size
    k = jax.random.split(key, 5)
    w_ih1 = _xavier_uniform(k[2], (H, 4 * H))
    w_hh1 = _xavier_uniform(k[3], (H, 4 * H))
    return {
        # weights pre-transposed so rows @ W -> (rows, 4H); MXU operands stored in bf16
        "w_ih0": _xavier_uniform(k[0], (input_size, 4 * H)).astype(mxu_dtype),
        "w_hh0": _xavier_uniform(k[1], (H, 4 * H)).astype(mxu_dtype),
        "b0": jnp.zeros((1, 4 * H), jnp.float32),                    # b_ih0 + b_hh0 (zero init)
        # layer-1 matmuls fused: [x_t ; h] @ [W_ih1 ; W_hh1]
        "w_cat1": jnp.concatenate([w_ih1, w_hh1], axis=0).astype(mxu_dtype),
        "b1": jnp.zeros((1, 4 * H), jnp.float32),                    # b_ih1 + b_hh1
        # fc kept f32: applied as a VPU multiply + lane reduction, not an MXU matmul
        "w_fc": _xavier_uniform(k[4], (H, 1)).reshape(1, H),
        "b_fc": jnp.zeros((1, 1), jnp.float32),
    }


def _reference_forward(x, params):
    """Pure-JAX mirror of the kernel math (PyTorch eval-mode LSTM -> fc semantics: gate
    order [i,f,g,o], combined b_ih+b_hh, zero initial state, h of the top layer at the last
    step; same intentional bf16 cast on MXU operands with f32 accumulation)."""
    B, S, I = x.shape
    H = params["w_hh0"].shape[0]
    mxu_dt = params["w_hh0"].dtype

    gx0 = jnp.dot(x.reshape(B * S, I).astype(mxu_dt), params["w_ih0"],
                  preferred_element_type=jnp.float32)
    gx0 = (gx0 + params["b0"]).reshape(B, S, 4 * H)

    def gate_act(g):
        return (jax.nn.sigmoid(g[:, :H]), jax.nn.sigmoid(g[:, H:2 * H]),
                jnp.tanh(g[:, 2 * H:3 * H]), jax.nn.sigmoid(g[:, 3 * H:]))

    h0 = c0 = h1 = c1 = jnp.zeros((B, H), jnp.float32)
    for t in range(S):
        g0 = gx0[:, t, :] + jnp.dot(h0.astype(mxu_dt), params["w_hh0"],
                                    preferred_element_type=jnp.float32)
        i0, f0, gg0, o0 = gate_act(g0)
        c0 = f0 * c0 + i0 * gg0
        h0 = o0 * jnp.tanh(c0)

        hcat = jnp.concatenate([h0, h1], axis=-1).astype(mxu_dt)
        g1 = (jnp.dot(hcat, params["w_cat1"], preferred_element_type=jnp.float32)
              + params["b1"])
        i1, f1, gg1, o1 = gate_act(g1)
        c1 = f1 * c1 + i1 * gg1
        h1 = o1 * jnp.tanh(c1)

    return jnp.sum(h1 * params["w_fc"], axis=-1, keepdims=True) + params["b_fc"]


if __name__ == "__main__":
    batch, seq, input_size, hidden_size = 16, 16, 8, 128

    key = jax.random.PRNGKey(0)
    k_x, k_p = jax.random.split(key)
    x = jax.random.normal(k_x, (batch, seq, input_size), jnp.float32)
    params = init_params(k_p, input_size, hidden_size)

    out = lstm_model_forward(x, params, block_b=8, block_s=8)   # grid = (2 batch, 2 seq chunks)
    out = jax.block_until_ready(out)

    ref = _reference_forward(x, params)
    assert out.shape == (batch, 1)
    assert jnp.allclose(out, ref, atol=1e-3, rtol=1e-3), (out, ref)

    print("KERNEL_OK")
</pallas_src>

<mosaic_0001>
module attributes {stable_mosaic.version = 11 : i64} {
  func.func @_lstm_fc_kernel(%arg0: i32, %arg1: i32, %arg2: memref<8x8x8xf32, #tpu.memory_space<vmem>>, %arg3: memref<8x512xbf16, #tpu.memory_space<vmem>>, %arg4: memref<128x512xbf16, #tpu.memory_space<vmem>>, %arg5: memref<1x512xf32, #tpu.memory_space<vmem>>, %arg6: memref<256x512xbf16, #tpu.memory_space<vmem>>, %arg7: memref<1x512xf32, #tpu.memory_space<vmem>>, %arg8: memref<1x128xf32, #tpu.memory_space<vmem>>, %arg9: memref<1x1xf32, #tpu.memory_space<vmem>>, %arg10: memref<8x1xf32, #tpu.memory_space<vmem>>, %arg11: memref<8x128xf32, #tpu.memory_space<vmem>>, %arg12: memref<8x128xf32, #tpu.memory_space<vmem>>, %arg13: memref<8x128xf32, #tpu.memory_space<vmem>>, %arg14: memref<8x128xf32, #tpu.memory_space<vmem>>) attributes {dimension_semantics = [#tpu.dimension_semantics<parallel>, #tpu.dimension_semantics<arbitrary>], iteration_bounds = array<i64: 2, 2>, scalar_prefetch = 0 : i64, scratch_operands = 4 : i64, tpu.core_type = #tpu.core_type<tc>, window_params = [{transform_indices = @transform_0, window_bounds = array<i64: 8, 8, 8>}, {pipeline_mode = #tpu.pipeline_mode<synchronous>, transform_indices = @transform_1, window_bounds = array<i64: 8, 512>}, {pipeline_mode = #tpu.pipeline_mode<synchronous>, transform_indices = @transform_2, window_bounds = array<i64: 128, 512>}, {pipeline_mode = #tpu.pipeline_mode<synchronous>, transform_indices = @transform_3, window_bounds = array<i64: 1, 512>}, {pipeline_mode = #tpu.pipeline_mode<synchronous>, transform_indices = @transform_4, window_bounds = array<i64: 256, 512>}, {pipeline_mode = #tpu.pipeline_mode<synchronous>, transform_indices = @transform_5, window_bounds = array<i64: 1, 512>}, {pipeline_mode = #tpu.pipeline_mode<synchronous>, transform_indices = @transform_6, window_bounds = array<i64: 1, 128>}, {pipeline_mode = #tpu.pipeline_mode<synchronous>, transform_indices = @transform_7, window_bounds = array<i64: 1, 1>}, {transform_indices = @transform_8, window_bounds = array<i64: 8, 1>}]} {
    %c0_i32 = arith.constant 0 : i32
    %0 = arith.cmpi eq, %arg1, %c0_i32 : i32
    %1 = arith.extui %0 : i1 to i32
    %c0_i32_0 = arith.constant 0 : i32
    %2 = arith.cmpi ne, %1, %c0_i32_0 : i32
    scf.if %2 {
      %cst_94 = arith.constant 0.000000e+00 : f32
      %500 = vector.broadcast %cst_94 : f32 to vector<8x128xf32>
      %c0_95 = arith.constant 0 : index
      %c0_96 = arith.constant 0 : index
      %501 = vector.load %arg11[%c0_95, %c0_96] : memref<8x128xf32, #tpu.memory_space<vmem>>, vector<8x128xf32>
      tpu.vector_store %arg11[%c0_95, %c0_96], %500 {strides = array<i32>} : memref<8x128xf32, #tpu.memory_space<vmem>>, vector<8x128xf32>,
      %c0_97 = arith.constant 0 : index
      %c0_98 = arith.constant 0 : index
      %502 = vector.load %arg12[%c0_97, %c0_98] : memref<8x128xf32, #tpu.memory_space<vmem>>, vector<8x128xf32>
      tpu.vector_store %arg12[%c0_97, %c0_98], %500 {strides = array<i32>} : memref<8x128xf32, #tpu.memory_space<vmem>>, vector<8x128xf32>,
      %c0_99 = arith.constant 0 : index
      %c0_100 = arith.constant 0 : index
      %503 = vector.load %arg13[%c0_99, %c0_100] : memref<8x128xf32, #tpu.memory_space<vmem>>, vector<8x128xf32>
      tpu.vector_store %arg13[%c0_99, %c0_100], %500 {strides = array<i32>} : memref<8x128xf32, #tpu.memory_space<vmem>>, vector<8x128xf32>,
      %c0_101 = arith.constant 0 : index
      %c0_102 = arith.constant 0 : index
      %504 = vector.load %arg14[%c0_101, %c0_102] : memref<8x128xf32, #tpu.memory_space<vmem>>, vector<8x128xf32>
      tpu.vector_store %arg14[%c0_101, %c0_102], %500 {strides = array<i32>} : memref<8x128xf32, #tpu.memory_space<vmem>>, vector<8x128xf32>,
    } else {
    }
    %c0 = arith.constant 0 : index
    %c0_1 = arith.constant 0 : index
    %c0_2 = arith.constant 0 : index
    %3 = vector.load %arg2[%c0, %c0_1, %c0_2] : memref<8x8x8xf32, #tpu.memory_space<vmem>>, vector<8x8x8xf32>
    %4 = vector.shape_cast %3 : vector<8x8x8xf32> to vector<64x8xf32>
    %5 = arith.truncf %4 : vector<64x8xf32> to vector<64x8xbf16>
    %c0_3 = arith.constant 0 : index
    %c0_4 = arith.constant 0 : index
    %6 = vector.load %arg3[%c0_3, %c0_4] : memref<8x512xbf16, #tpu.memory_space<vmem>>, vector<8x512xbf16>
    %cst = arith.constant dense<0.000000e+00> : vector<64x512xf32>
    %7 = tpu.matmul %5, %6, %cst {dimension_numbers = #tpu.dot_dimension_numbers<[1], [0], [0], [1], [0, 0, 1, 1], [], []>} : vector<64x8xbf16>, vector<8x512xbf16>, vector<64x512xf32> -> vector<64x512xf32>
    %c0_5 = arith.constant 0 : index
    %c0_6 = arith.constant 0 : index
    %8 = vector.load %arg5[%c0_5, %c0_6] : memref<1x512xf32, #tpu.memory_space<vmem>>, vector<1x512xf32>
    %9 = vector.broadcast %8 : vector<1x512xf32> to vector<64x512xf32>
    %10 = arith.addf %7, %9 : vector<64x512xf32>
    %11 = vector.shape_cast %10 : vector<64x512xf32> to vector<8x8x512xf32>
    %c0_7 = arith.constant 0 : index
    %c0_8 = arith.constant 0 : index
    %12 = vector.load %arg4[%c0_7, %c0_8] : memref<128x512xbf16, #tpu.memory_space<vmem>>, vector<128x512xbf16>
    %c0_9 = arith.constant 0 : index
    %c0_10 = arith.constant 0 : index
    %13 = vector.load %arg6[%c0_9, %c0_10] : memref<256x512xbf16, #tpu.memory_space<vmem>>, vector<256x512xbf16>
    %c0_11 = arith.constant 0 : index
    %c0_12 = arith.constant 0 : index
    %14 = vector.load %arg7[%c0_11, %c0_12] : memref<1x512xf32, #tpu.memory_space<vmem>>, vector<1x512xf32>
    %15 = vector.shape_cast %14 : vector<1x512xf32> to vector<1x512xf32>
    %16 = vector.broadcast %15 : vector<1x512xf32> to vector<8x512xf32>
    %c0_13 = arith.constant 0 : index
    %c0_14 = arith.constant 0 : index
    %17 = vector.load %arg11[%c0_13, %c0_14] : memref<8x128xf32, #tpu.memory_space<vmem>>, vector<8x128xf32>
    %c0_15 = arith.constant 0 : index
    %c0_16 = arith.constant 0 : index
    %18 = vector.load %arg12[%c0_15, %c0_16] : memref<8x128xf32, #tpu.memory_space<vmem>>, vector<8x128xf32>
    %c0_17 = arith.constant 0 : index
    %c0_18 = arith.constant 0 : index
    %19 = vector.load %arg13[%c0_17, %c0_18] : memref<8x128xf32, #tpu.memory_space<vmem>>, vector<8x128xf32>
    %c0_19 = arith.constant 0 : index
    %c0_20 = arith.constant 0 : index
    %20 = vector.load %arg14[%c0_19, %c0_20] : memref<8x128xf32, #tpu.memory_space<vmem>>, vector<8x128xf32>
    %21 = vector.extract_strided_slice %11 {offsets = [0, 0, 0], sizes = [8, 1, 512], strides = [1, 1, 1]} : vector<8x8x512xf32> to vector<8x1x512xf32>
    %22 = vector.shape_cast %21 : vector<8x1x512xf32> to vector<8x512xf32>
    %23 = arith.truncf %17 : vector<8x128xf32> to vector<8x128xbf16>
    %cst_21 = arith.constant dense<0.000000e+00> : vector<8x512xf32>
    %24 = tpu.matmul %23, %12, %cst_21 {dimension_numbers = #tpu.dot_dimension_numbers<[1], [0], [0], [1], [0, 0, 1, 1], [], []>} : vector<8x128xbf16>, vector<128x512xbf16>, vector<8x512xf32> -> vector<8x512xf32>
    %25 = arith.addf %22, %24 : vector<8x512xf32>
    %26 = vector.extract_strided_slice %25 {offsets = [0, 0], sizes = [8, 128], strides = [1, 1]} : vector<8x512xf32> to vector<8x128xf32>
    %27 = arith.negf %26 : vector<8x128xf32>
    %28 = math.exp %27 : vector<8x128xf32>
    %cst_22 = arith.constant 1.000000e+00 : f32
    %29 = vector.broadcast %cst_22 : f32 to vector<8x128xf32>
    %30 = arith.addf %29, %28 : vector<8x128xf32>
    %31 = arith.divf %29, %30 : vector<8x128xf32>
    %32 = vector.extract_strided_slice %25 {offsets = [0, 128], sizes = [8, 128], strides = [1, 1]} : vector<8x512xf32> to vector<8x128xf32>
    %33 = arith.negf %32 : vector<8x128xf32>
    %34 = math.exp %33 : vector<8x128xf32>
    %cst_23 = arith.constant 1.000000e+00 : f32
    %35 = vector.broadcast %cst_23 : f32 to vector<8x128xf32>
    %36 = arith.addf %35, %34 : vector<8x128xf32>
    %37 = arith.divf %35, %36 : vector<8x128xf32>
    %38 = vector.extract_strided_slice %25 {offsets = [0, 256], sizes = [8, 128], strides = [1, 1]} : vector<8x512xf32> to vector<8x128xf32>
    %39 = math.tanh %38 : vector<8x128xf32>
    %40 = vector.extract_strided_slice %25 {offsets = [0, 384], sizes = [8, 128], strides = [1, 1]} : vector<8x512xf32> to vector<8x128xf32>
    %41 = arith.negf %40 : vector<8x128xf32>
    %42 = math.exp %41 : vector<8x128xf32>
    %cst_24 = arith.constant 1.000000e+00 : f32
    %43 = vector.broadcast %cst_24 : f32 to vector<8x128xf32>
    %44 = arith.addf %43, %42 : vector<8x128xf32>
    %45 = arith.divf %43, %44 : vector<8x128xf32>
    %46 = arith.mulf %37, %18 : vector<8x128xf32>
    %47 = arith.mulf %31, %39 : vector<8x128xf32>
    %48 = arith.addf %46, %47 : vector<8x128xf32>
    %49 = math.tanh %48 : vector<8x128xf32>
    %50 = arith.mulf %45, %49 : vector<8x128xf32>
    %51 = tpu.concatenate %50, %19 in 1 : vector<8x128xf32>, vector<8x128xf32> -> vector<8x256xf32>
    %52 = arith.truncf %51 : vector<8x256xf32> to vector<8x256xbf16>
    %cst_25 = arith.constant dense<0.000000e+00> : vector<8x512xf32>
    %53 = tpu.matmul %52, %13, %cst_25 {dimension_numbers = #tpu.dot_dimension_numbers<[1], [0], [0], [1], [0, 0, 1, 1], [], []>} : vector<8x256xbf16>, vector<256x512xbf16>, vector<8x512xf32> -> vector<8x512xf32>
    %54 = arith.addf %53, %16 : vector<8x512xf32>
    %55 = vector.extract_strided_slice %54 {offsets = [0, 0], sizes = [8, 128], strides = [1, 1]} : vector<8x512xf32> to vector<8x128xf32>
    %56 = arith.negf %55 : vector<8x128xf32>
    %57 = math.exp %56 : vector<8x128xf32>
    %cst_26 = arith.constant 1.000000e+00 : f32
    %58 = vector.broadcast %cst_26 : f32 to vector<8x128xf32>
    %59 = arith.addf %58, %57 : vector<8x128xf32>
    %60 = arith.divf %58, %59 : vector<8x128xf32>
    %61 = vector.extract_strided_slice %54 {offsets = [0, 128], sizes = [8, 128], strides = [1, 1]} : vector<8x512xf32> to vector<8x128xf32>
    %62 = arith.negf %61 : vector<8x128xf32>
    %63 = math.exp %62 : vector<8x128xf32>
    %cst_27 = arith.constant 1.000000e+00 : f32
    %64 = vector.broadcast %cst_27 : f32 to vector<8x128xf32>
    %65 = arith.addf %64, %63 : vector<8x128xf32>
    %66 = arith.divf %64, %65 : vector<8x128xf32>
    %67 = vector.extract_strided_slice %54 {offsets = [0, 256], sizes = [8, 128], strides = [1, 1]} : vector<8x512xf32> to vector<8x128xf32>
    %68 = math.tanh %67 : vector<8x128xf32>
    %69 = vector.extract_strided_slice %54 {offsets = [0, 384], sizes = [8, 128], strides = [1, 1]} : vector<8x512xf32> to vector<8x128xf32>
    %70 = arith.negf %69 : vector<8x128xf32>
    %71 = math.exp %70 : vector<8x128xf32>
    %cst_28 = arith.constant 1.000000e+00 : f32
    %72 = vector.broadcast %cst_28 : f32 to vector<8x128xf32>
    %73 = arith.addf %72, %71 : vector<8x128xf32>
    %74 = arith.divf %72, %73 : vector<8x128xf32>
    %75 = arith.mulf %66, %20 : vector<8x128xf32>
    %76 = arith.mulf %60, %68 : vector<8x128xf32>
    %77 = arith.addf %75, %76 : vector<8x128xf32>
    %78 = math.tanh %77 : vector<8x128xf32>
    %79 = arith.mulf %74, %78 : vector<8x128xf32>
    %80 = vector.extract_strided_slice %11 {offsets = [0, 1, 0], sizes = [8, 1, 512], strides = [1, 1, 1]} : vector<8x8x512xf32> to vector<8x1x512xf32>
    %81 = vector.shape_cast %80 : vector<8x1x512xf32> to vector<8x512xf32>
    %82 = arith.truncf %50 : vector<8x128xf32> to vector<8x128xbf16>
    %cst_29 = arith.constant dense<0.000000e+00> : vector<8x512xf32>
    %83 = tpu.matmul %82, %12, %cst_29 {dimension_numbers = #tpu.dot_dimension_numbers<[1], [0], [0], [1], [0, 0, 1, 1], [], []>} : vector<8x128xbf16>, vector<128x512xbf16>, vector<8x512xf32> -> vector<8x512xf32>
    %84 = arith.addf %81, %83 : vector<8x512xf32>
    %85 = vector.extract_strided_slice %84 {offsets = [0, 0], sizes = [8, 128], strides = [1, 1]} : vector<8x512xf32> to vector<8x128xf32>
    %86 = arith.negf %85 : vector<8x128xf32>
    %87 = math.exp %86 : vector<8x128xf32>
    %cst_30 = arith.constant 1.000000e+00 : f32
    %88 = vector.broadcast %cst_30 : f32 to vector<8x128xf32>
    %89 = arith.addf %88, %87 : vector<8x128xf32>
    %90 = arith.divf %88, %89 : vector<8x128xf32>
    %91 = vector.extract_strided_slice %84 {offsets = [0, 128], sizes = [8, 128], strides = [1, 1]} : vector<8x512xf32> to vector<8x128xf32>
    %92 = arith.negf %91 : vector<8x128xf32>
    %93 = math.exp %92 : vector<8x128xf32>
    %cst_31 = arith.constant 1.000000e+00 : f32
    %94 = vector.broadcast %cst_31 : f32 to vector<8x128xf32>
    %95 = arith.addf %94, %93 : vector<8x128xf32>
    %96 = arith.divf %94, %95 : vector<8x128xf32>
    %97 = vector.extract_strided_slice %84 {offsets = [0, 256], sizes = [8, 128], strides = [1, 1]} : vector<8x512xf32> to vector<8x128xf32>
    %98 = math.tanh %97 : vector<8x128xf32>
    %99 = vector.extract_strided_slice %84 {offsets = [0, 384], sizes = [8, 128], strides = [1, 1]} : vector<8x512xf32> to vector<8x128xf32>
    %100 = arith.negf %99 : vector<8x128xf32>
    %101 = math.exp %100 : vector<8x128xf32>
    %cst_32 = arith.constant 1.000000e+00 : f32
    %102 = vector.broadcast %cst_32 : f32 to vector<8x128xf32>
    %103 = arith.addf %102, %101 : vector<8x128xf32>
    %104 = arith.divf %102, %103 : vector<8x128xf32>
    %105 = arith.mulf %96, %48 : vector<8x128xf32>
    %106 = arith.mulf %90, %98 : vector<8x128xf32>
    %107 = arith.addf %105, %106 : vector<8x128xf32>
    %108 = math.tanh %107 : vector<8x128xf32>
    %109 = arith.mulf %104, %108 : vector<8x128xf32>
    %110 = tpu.concatenate %109, %79 in 1 : vector<8x128xf32>, vector<8x128xf32> -> vector<8x256xf32>
    %111 = arith.truncf %110 : vector<8x256xf32> to vector<8x256xbf16>
    %cst_33 = arith.constant dense<0.000000e+00> : vector<8x512xf32>
    %112 = tpu.matmul %111, %13, %cst_33 {dimension_numbers = #tpu.dot_dimension_numbers<[1], [0], [0], [1], [0, 0, 1, 1], [], []>} : vector<8x256xbf16>, vector<256x512xbf16>, vector<8x512xf32> -> vector<8x512xf32>
    %113 = arith.addf %112, %16 : vector<8x512xf32>
    %114 = vector.extract_strided_slice %113 {offsets = [0, 0], sizes = [8, 128], strides = [1, 1]} : vector<8x512xf32> to vector<8x128xf32>
    %115 = arith.negf %114 : vector<8x128xf32>
    %116 = math.exp %115 : vector<8x128xf32>
    %cst_34 = arith.constant 1.000000e+00 : f32
    %117 = vector.broadcast %cst_34 : f32 to vector<8x128xf32>
    %118 = arith.addf %117, %116 : vector<8x128xf32>
    %119 = arith.divf %117, %118 : vector<8x128xf32>
    %120 = vector.extract_strided_slice %113 {offsets = [0, 128], sizes = [8, 128], strides = [1, 1]} : vector<8x512xf32> to vector<8x128xf32>
    %121 = arith.negf %120 : vector<8x128xf32>
    %122 = math.exp %121 : vector<8x128xf32>
    %cst_35 = arith.constant 1.000000e+00 : f32
    %123 = vector.broadcast %cst_35 : f32 to vector<8x128xf32>
    %124 = arith.addf %123, %122 : vector<8x128xf32>
    %125 = arith.divf %123, %124 : vector<8x128xf32>
    %126 = vector.extract_strided_slice %113 {offsets = [0, 256], sizes = [8, 128], strides = [1, 1]} : vector<8x512xf32> to vector<8x128xf32>
    %127 = math.tanh %126 : vector<8x128xf32>
    %128 = vector.extract_strided_slice %113 {offsets = [0, 384], sizes = [8, 128], strides = [1, 1]} : vector<8x512xf32> to vector<8x128xf32>
    %129 = arith.negf %128 : vector<8x128xf32>
    %130 = math.exp %129 : vector<8x128xf32>
    %cst_36 = arith.constant 1.000000e+00 : f32
    %131 = vector.broadcast %cst_36 : f32 to vector<8x128xf32>
    %132 = arith.addf %131, %130 : vector<8x128xf32>
    %133 = arith.divf %131, %132 : vector<8x128xf32>
    %134 = arith.mulf %125, %77 : vector<8x128xf32>
    %135 = arith.mulf %119, %127 : vector<8x128xf32>
    %136 = arith.addf %134, %135 : vector<8x128xf32>
    %137 = math.tanh %136 : vector<8x128xf32>
    %138 = arith.mulf %133, %137 : vector<8x128xf32>
    %139 = vector.extract_strided_slice %11 {offsets = [0, 2, 0], sizes = [8, 1, 512], strides = [1, 1, 1]} : vector<8x8x512xf32> to vector<8x1x512xf32>
    %140 = vector.shape_cast %139 : vector<8x1x512xf32> to vector<8x512xf32>
    %141 = arith.truncf %109 : vector<8x128xf32> to vector<8x128xbf16>
    %cst_37 = arith.constant dense<0.000000e+00> : vector<8x512xf32>
    %142 = tpu.matmul %141, %12, %cst_37 {dimension_numbers = #tpu.dot_dimension_numbers<[1], [0], [0], [1], [0, 0, 1, 1], [], []>} : vector<8x128xbf16>, vector<128x512xbf16>, vector<8x512xf32> -> vector<8x512xf32>
    %143 = arith.addf %140, %142 : vector<8x512xf32>
    %144 = vector.extract_strided_slice %143 {offsets = [0, 0], sizes = [8, 128], strides = [1, 1]} : vector<8x512xf32> to vector<8x128xf32>
    %145 = arith.negf %144 : vector<8x128xf32>
    %146 = math.exp %145 : vector<8x128xf32>
    %cst_38 = arith.constant 1.000000e+00 : f32
    %147 = vector.broadcast %cst_38 : f32 to vector<8x128xf32>
    %148 = arith.addf %147, %146 : vector<8x128xf32>
    %149 = arith.divf %147, %148 : vector<8x128xf32>
    %150 = vector.extract_strided_slice %143 {offsets = [0, 128], sizes = [8, 128], strides = [1, 1]} : vector<8x512xf32> to vector<8x128xf32>
    %151 = arith.negf %150 : vector<8x128xf32>
    %152 = math.exp %151 : vector<8x128xf32>
    %cst_39 = arith.constant 1.000000e+00 : f32
    %153 = vector.broadcast %cst_39 : f32 to vector<8x128xf32>
    %154 = arith.addf %153, %152 : vector<8x128xf32>
    %155 = arith.divf %153, %154 : vector<8x128xf32>
    %156 = vector.extract_strided_slice %143 {offsets = [0, 256], sizes = [8, 128], strides = [1, 1]} : vector<8x512xf32> to vector<8x128xf32>
    %157 = math.tanh %156 : vector<8x128xf32>
    %158 = vector.extract_strided_slice %143 {offsets = [0, 384], sizes = [8, 128], strides = [1, 1]} : vector<8x512xf32> to vector<8x128xf32>
    %159 = arith.negf %158 : vector<8x128xf32>
    %160 = math.exp %159 : vector<8x128xf32>
    %cst_40 = arith.constant 1.000000e+00 : f32
    %161 = vector.broadcast %cst_40 : f32 to vector<8x128xf32>
    %162 = arith.addf %161, %160 : vector<8x128xf32>
    %163 = arith.divf %161, %162 : vector<8x128xf32>
    %164 = arith.mulf %155, %107 : vector<8x128xf32>
    %165 = arith.mulf %149, %157 : vector<8x128xf32>
    %166 = arith.addf %164, %165 : vector<8x128xf32>
    %167 = math.tanh %166 : vector<8x128xf32>
    %168 = arith.mulf %163, %167 : vector<8x128xf32>
    %169 = tpu.concatenate %168, %138 in 1 : vector<8x128xf32>, vector<8x128xf32> -> vector<8x256xf32>
    %170 = arith.truncf %169 : vector<8x256xf32> to vector<8x256xbf16>
    %cst_41 = arith.constant dense<0.000000e+00> : vector<8x512xf32>
    %171 = tpu.matmul %170, %13, %cst_41 {dimension_numbers = #tpu.dot_dimension_numbers<[1], [0], [0], [1], [0, 0, 1, 1], [], []>} : vector<8x256xbf16>, vector<256x512xbf16>, vector<8x512xf32> -> vector<8x512xf32>
    %172 = arith.addf %171, %16 : vector<8x512xf32>
    %173 = vector.extract_strided_slice %172 {offsets = [0, 0], sizes = [8, 128], strides = [1, 1]} : vector<8x512xf32> to vector<8x128xf32>
    %174 = arith.negf %173 : vector<8x128xf32>
    %175 = math.exp %174 : vector<8x128xf32>
    %cst_42 = arith.constant 1.000000e+00 : f32
    %176 = vector.broadcast %cst_42 : f32 to vector<8x128xf32>
    %177 = arith.addf %176, %175 : vector<8x128xf32>
    %178 = arith.divf %176, %177 : vector<8x128xf32>
    %179 = vector.extract_strided_slice %172 {offsets = [0, 128], sizes = [8, 128], strides = [1, 1]} : vector<8x512xf32> to vector<8x128xf32>
    %180 = arith.negf %179 : vector<8x128xf32>
    %181 = math.exp %180 : vector<8x128xf32>
    %cst_43 = arith.constant 1.000000e+00 : f32
    %182 = vector.broadcast %cst_43 : f32 to vector<8x128xf32>
    %183 = arith.addf %182, %181 : vector<8x128xf32>
    %184 = arith.divf %182, %183 : vector<8x128xf32>
    %185 = vector.extract_strided_slice %172 {offsets = [0, 256], sizes = [8, 128], strides = [1, 1]} : vector<8x512xf32> to vector<8x128xf32>
    %186 = math.tanh %185 : vector<8x128xf32>
    %187 = vector.extract_strided_slice %172 {offsets = [0, 384], sizes = [8, 128], strides = [1, 1]} : vector<8x512xf32> to vector<8x128xf32>
    %188 = arith.negf %187 : vector<8x128xf32>
    %189 = math.exp %188 : vector<8x128xf32>
    %cst_44 = arith.constant 1.000000e+00 : f32
    %190 = vector.broadcast %cst_44 : f32 to vector<8x128xf32>
    %191 = arith.addf %190, %189 : vector<8x128xf32>
    %192 = arith.divf %190, %191 : vector<8x128xf32>
    %193 = arith.mulf %184, %136 : vector<8x128xf32>
    %194 = arith.mulf %178, %186 : vector<8x128xf32>
    %195 = arith.addf %193, %194 : vector<8x128xf32>
    %196 = math.tanh %195 : vector<8x128xf32>
    %197 = arith.mulf %192, %196 : vector<8x128xf32>
    %198 = vector.extract_strided_slice %11 {offsets = [0, 3, 0], sizes = [8, 1, 512], strides = [1, 1, 1]} : vector<8x8x512xf32> to vector<8x1x512xf32>
    %199 = vector.shape_cast %198 : vector<8x1x512xf32> to vector<8x512xf32>
    %200 = arith.truncf %168 : vector<8x128xf32> to vector<8x128xbf16>
    %cst_45 = arith.constant dense<0.000000e+00> : vector<8x512xf32>
    %201 = tpu.matmul %200, %12, %cst_45 {dimension_numbers = #tpu.dot_dimension_numbers<[1], [0], [0], [1], [0, 0, 1, 1], [], []>} : vector<8x128xbf16>, vector<128x512xbf16>, vector<8x512xf32> -> vector<8x512xf32>
    %202 = arith.addf %199, %201 : vector<8x512xf32>
    %203 = vector.extract_strided_slice %202 {offsets = [0, 0], sizes = [8, 128], strides = [1, 1]} : vector<8x512xf32> to vector<8x128xf32>
    %204 = arith.negf %203 : vector<8x128xf32>
    %205 = math.exp %204 : vector<8x128xf32>
    %cst_46 = arith.constant 1.000000e+00 : f32
    %206 = vector.broadcast %cst_46 : f32 to vector<8x128xf32>
    %207 = arith.addf %206, %205 : vector<8x128xf32>
    %208 = arith.divf %206, %207 : vector<8x128xf32>
    %209 = vector.extract_strided_slice %202 {offsets = [0, 128], sizes = [8, 128], strides = [1, 1]} : vector<8x512xf32> to vector<8x128xf32>
    %210 = arith.negf %209 : vector<8x128xf32>
    %211 = math.exp %210 : vector<8x128xf32>
    %cst_47 = arith.constant 1.000000e+00 : f32
    %212 = vector.broadcast %cst_47 : f32 to vector<8x128xf32>
    %213 = arith.addf %212, %211 : vector<8x128xf32>
    %214 = arith.divf %212, %213 : vector<8x128xf32>
    %215 = vector.extract_strided_slice %202 {offsets = [0, 256], sizes = [8, 128], strides = [1, 1]} : vector<8x512xf32> to vector<8x128xf32>
    %216 = math.tanh %215 : vector<8x128xf32>
    %217 = vector.extract_strided_slice %202 {offsets = [0, 384], sizes = [8, 128], strides = [1, 1]} : vector<8x512xf32> to vector<8x128xf32>
    %218 = arith.negf %217 : vector<8x128xf32>
    %219 = math.exp %218 : vector<8x128xf32>
    %cst_48 = arith.constant 1.000000e+00 : f32
    %220 = vector.broadcast %cst_48 : f32 to vector<8x128xf32>
    %221 = arith.addf %220, %219 : vector<8x128xf32>
    %222 = arith.divf %220, %221 : vector<8x128xf32>
    %223 = arith.mulf %214, %166 : vector<8x128xf32>
    %224 = arith.mulf %208, %216 : vector<8x128xf32>
    %225 = arith.addf %223, %224 : vector<8x128xf32>
    %226 = math.tanh %225 : vector<8x128xf32>
    %227 = arith.mulf %222, %226 : vector<8x128xf32>
    %228 = tpu.concatenate %227, %197 in 1 : vector<8x128xf32>, vector<8x128xf32> -> vector<8x256xf32>
    %229 = arith.truncf %228 : vector<8x256xf32> to vector<8x256xbf16>
    %cst_49 = arith.constant dense<0.000000e+00> : vector<8x512xf32>
    %230 = tpu.matmul %229, %13, %cst_49 {dimension_numbers = #tpu.dot_dimension_numbers<[1], [0], [0], [1], [0, 0, 1, 1], [], []>} : vector<8x256xbf16>, vector<256x512xbf16>, vector<8x512xf32> -> vector<8x512xf32>
    %231 = arith.addf %230, %16 : vector<8x512xf32>
    %232 = vector.extract_strided_slice %231 {offsets = [0, 0], sizes = [8, 128], strides = [1, 1]} : vector<8x512xf32> to vector<8x128xf32>
    %233 = arith.negf %232 : vector<8x128xf32>
    %234 = math.exp %233 : vector<8x128xf32>
    %cst_50 = arith.constant 1.000000e+00 : f32
    %235 = vector.broadcast %cst_50 : f32 to vector<8x128xf32>
    %236 = arith.addf %235, %234 : vector<8x128xf32>
    %237 = arith.divf %235, %236 : vector<8x128xf32>
    %238 = vector.extract_strided_slice %231 {offsets = [0, 128], sizes = [8, 128], strides = [1, 1]} : vector<8x512xf32> to vector<8x128xf32>
    %239 = arith.negf %238 : vector<8x128xf32>
    %240 = math.exp %239 : vector<8x128xf32>
    %cst_51 = arith.constant 1.000000e+00 : f32
    %241 = vector.broadcast %cst_51 : f32 to vector<8x128xf32>
    %242 = arith.addf %241, %240 : vector<8x128xf32>
    %243 = arith.divf %241, %242 : vector<8x128xf32>
    %244 = vector.extract_strided_slice %231 {offsets = [0, 256], sizes = [8, 128], strides = [1, 1]} : vector<8x512xf32> to vector<8x128xf32>
    %245 = math.tanh %244 : vector<8x128xf32>
    %246 = vector.extract_strided_slice %231 {offsets = [0, 384], sizes = [8, 128], strides = [1, 1]} : vector<8x512xf32> to vector<8x128xf32>
    %247 = arith.negf %246 : vector<8x128xf32>
    %248 = math.exp %247 : vector<8x128xf32>
    %cst_52 = arith.constant 1.000000e+00 : f32
    %249 = vector.broadcast %cst_52 : f32 to vector<8x128xf32>
    %250 = arith.addf %249, %248 : vector<8x128xf32>
    %251 = arith.divf %249, %250 : vector<8x128xf32>
    %252 = arith.mulf %243, %195 : vector<8x128xf32>
    %253 = arith.mulf %237, %245 : vector<8x128xf32>
    %254 = arith.addf %252, %253 : vector<8x128xf32>
    %255 = math.tanh %254 : vector<8x128xf32>
    %256 = arith.mulf %251, %255 : vector<8x128xf32>
    %257 = vector.extract_strided_slice %11 {offsets = [0, 4, 0], sizes = [8, 1, 512], strides = [1, 1, 1]} : vector<8x8x512xf32> to vector<8x1x512xf32>
    %258 = vector.shape_cast %257 : vector<8x1x512xf32> to vector<8x512xf32>
    %259 = arith.truncf %227 : vector<8x128xf32> to vector<8x128xbf16>
    %cst_53 = arith.constant dense<0.000000e+00> : vector<8x512xf32>
    %260 = tpu.matmul %259, %12, %cst_53 {dimension_numbers = #tpu.dot_dimension_numbers<[1], [0], [0], [1], [0, 0, 1, 1], [], []>} : vector<8x128xbf16>, vector<128x512xbf16>, vector<8x512xf32> -> vector<8x512xf32>
    %261 = arith.addf %258, %260 : vector<8x512xf32>
    %262 = vector.extract_strided_slice %261 {offsets = [0, 0], sizes = [8, 128], strides = [1, 1]} : vector<8x512xf32> to vector<8x128xf32>
    %263 = arith.negf %262 : vector<8x128xf32>
    %264 = math.exp %263 : vector<8x128xf32>
    %cst_54 = arith.constant 1.000000e+00 : f32
    %265 = vector.broadcast %cst_54 : f32 to vector<8x128xf32>
    %266 = arith.addf %265, %264 : vector<8x128xf32>
    %267 = arith.divf %265, %266 : vector<8x128xf32>
    %268 = vector.extract_strided_slice %261 {offsets = [0, 128], sizes = [8, 128], strides = [1, 1]} : vector<8x512xf32> to vector<8x128xf32>
    %269 = arith.negf %268 : vector<8x128xf32>
    %270 = math.exp %269 : vector<8x128xf32>
    %cst_55 = arith.constant 1.000000e+00 : f32
    %271 = vector.broadcast %cst_55 : f32 to vector<8x128xf32>
    %272 = arith.addf %271, %270 : vector<8x128xf32>
    %273 = arith.divf %271, %272 : vector<8x128xf32>
    %274 = vector.extract_strided_slice %261 {offsets = [0, 256], sizes = [8, 128], strides = [1, 1]} : vector<8x512xf32> to vector<8x128xf32>
    %275 = math.tanh %274 : vector<8x128xf32>
    %276 = vector.extract_strided_slice %261 {offsets = [0, 384], sizes = [8, 128], strides = [1, 1]} : vector<8x512xf32> to vector<8x128xf32>
    %277 = arith.negf %276 : vector<8x128xf32>
    %278 = math.exp %277 : vector<8x128xf32>
    %cst_56 = arith.constant 1.000000e+00 : f32
    %279 = vector.broadcast %cst_56 : f32 to vector<8x128xf32>
    %280 = arith.addf %279, %278 : vector<8x128xf32>
    %281 = arith.divf %279, %280 : vector<8x128xf32>
    %282 = arith.mulf %273, %225 : vector<8x128xf32>
    %283 = arith.mulf %267, %275 : vector<8x128xf32>
    %284 = arith.addf %282, %283 : vector<8x128xf32>
    %285 = math.tanh %284 : vector<8x128xf32>
    %286 = arith.mulf %281, %285 : vector<8x128xf32>
    %287 = tpu.concatenate %286, %256 in 1 : vector<8x128xf32>, vector<8x128xf32> -> vector<8x256xf32>
    %288 = arith.truncf %287 : vector<8x256xf32> to vector<8x256xbf16>
    %cst_57 = arith.constant dense<0.000000e+00> : vector<8x512xf32>
    %289 = tpu.matmul %288, %13, %cst_57 {dimension_numbers = #tpu.dot_dimension_numbers<[1], [0], [0], [1], [0, 0, 1, 1], [], []>} : vector<8x256xbf16>, vector<256x512xbf16>, vector<8x512xf32> -> vector<8x512xf32>
    %290 = arith.addf %289, %16 : vector<8x512xf32>
    %291 = vector.extract_strided_slice %290 {offsets = [0, 0], sizes = [8, 128], strides = [1, 1]} : vector<8x512xf32> to vector<8x128xf32>
    %292 = arith.negf %291 : vector<8x128xf32>
    %293 = math.exp %292 : vector<8x128xf32>
    %cst_58 = arith.constant 1.000000e+00 : f32
    %294 = vector.broadcast %cst_58 : f32 to vector<8x128xf32>
    %295 = arith.addf %294, %293 : vector<8x128xf32>
    %296 = arith.divf %294, %295 : vector<8x128xf32>
    %297 = vector.extract_strided_slice %290 {offsets = [0, 128], sizes = [8, 128], strides = [1, 1]} : vector<8x512xf32> to vector<8x128xf32>
    %298 = arith.negf %297 : vector<8x128xf32>
    %299 = math.exp %298 : vector<8x128xf32>
    %cst_59 = arith.constant 1.000000e+00 : f32
    %300 = vector.broadcast %cst_59 : f32 to vector<8x128xf32>
    %301 = arith.addf %300, %299 : vector<8x128xf32>
    %302 = arith.divf %300, %301 : vector<8x128xf32>
    %303 = vector.extract_strided_slice %290 {offsets = [0, 256], sizes = [8, 128], strides = [1, 1]} : vector<8x512xf32> to vector<8x128xf32>
    %304 = math.tanh %303 : vector<8x128xf32>
    %305 = vector.extract_strided_slice %290 {offsets = [0, 384], sizes = [8, 128], strides = [1, 1]} : vector<8x512xf32> to vector<8x128xf32>
    %306 = arith.negf %305 : vector<8x128xf32>
    %307 = math.exp %306 : vector<8x128xf32>
    %cst_60 = arith.constant 1.000000e+00 : f32
    %308 = vector.broadcast %cst_60 : f32 to vector<8x128xf32>
    %309 = arith.addf %308, %307 : vector<8x128xf32>
    %310 = arith.divf %308, %309 : vector<8x128xf32>
    %311 = arith.mulf %302, %254 : vector<8x128xf32>
    %312 = arith.mulf %296, %304 : vector<8x128xf32>
    %313 = arith.addf %311, %312 : vector<8x128xf32>
    %314 = math.tanh %313 : vector<8x128xf32>
    %315 = arith.mulf %310, %314 : vector<8x128xf32>
    %316 = vector.extract_strided_slice %11 {offsets = [0, 5, 0], sizes = [8, 1, 512], strides = [1, 1, 1]} : vector<8x8x512xf32> to vector<8x1x512xf32>
    %317 = vector.shape_cast %316 : vector<8x1x512xf32> to vector<8x512xf32>
    %318 = arith.truncf %286 : vector<8x128xf32> to vector<8x128xbf16>
    %cst_61 = arith.constant dense<0.000000e+00> : vector<8x512xf32>
    %319 = tpu.matmul %318, %12, %cst_61 {dimension_numbers = #tpu.dot_dimension_numbers<[1], [0], [0], [1], [0, 0, 1, 1], [], []>} : vector<8x128xbf16>, vector<128x512xbf16>, vector<8x512xf32> -> vector<8x512xf32>
    %320 = arith.addf %317, %319 : vector<8x512xf32>
    %321 = vector.extract_strided_slice %320 {offsets = [0, 0], sizes = [8, 128], strides = [1, 1]} : vector<8x512xf32> to vector<8x128xf32>
    %322 = arith.negf %321 : vector<8x128xf32>
    %323 = math.exp %322 : vector<8x128xf32>
    %cst_62 = arith.constant 1.000000e+00 : f32
    %324 = vector.broadcast %cst_62 : f32 to vector<8x128xf32>
    %325 = arith.addf %324, %323 : vector<8x128xf32>
    %326 = arith.divf %324, %325 : vector<8x128xf32>
    %327 = vector.extract_strided_slice %320 {offsets = [0, 128], sizes = [8, 128], strides = [1, 1]} : vector<8x512xf32> to vector<8x128xf32>
    %328 = arith.negf %327 : vector<8x128xf32>
    %329 = math.exp %328 : vector<8x128xf32>
    %cst_63 = arith.constant 1.000000e+00 : f32
    %330 = vector.broadcast %cst_63 : f32 to vector<8x128xf32>
    %331 = arith.addf %330, %329 : vector<8x128xf32>
    %332 = arith.divf %330, %331 : vector<8x128xf32>
    %333 = vector.extract_strided_slice %320 {offsets = [0, 256], sizes = [8, 128], strides = [1, 1]} : vector<8x512xf32> to vector<8x128xf32>
    %334 = math.tanh %333 : vector<8x128xf32>
    %335 = vector.extract_strided_slice %320 {offsets = [0, 384], sizes = [8, 128], strides = [1, 1]} : vector<8x512xf32> to vector<8x128xf32>
    %336 = arith.negf %335 : vector<8x128xf32>
    %337 = math.exp %336 : vector<8x128xf32>
    %cst_64 = arith.constant 1.000000e+00 : f32
    %338 = vector.broadcast %cst_64 : f32 to vector<8x128xf32>
    %339 = arith.addf %338, %337 : vector<8x128xf32>
    %340 = arith.divf %338, %339 : vector<8x128xf32>
    %341 = arith.mulf %332, %284 : vector<8x128xf32>
    %342 = arith.mulf %326, %334 : vector<8x128xf32>
    %343 = arith.addf %341, %342 : vector<8x128xf32>
    %344 = math.tanh %343 : vector<8x128xf32>
    %345 = arith.mulf %340, %344 : vector<8x128xf32>
    %346 = tpu.concatenate %345, %315 in 1 : vector<8x128xf32>, vector<8x128xf32> -> vector<8x256xf32>
    %347 = arith.truncf %346 : vector<8x256xf32> to vector<8x256xbf16>
    %cst_65 = arith.constant dense<0.000000e+00> : vector<8x512xf32>
    %348 = tpu.matmul %347, %13, %cst_65 {dimension_numbers = #tpu.dot_dimension_numbers<[1], [0], [0], [1], [0, 0, 1, 1], [], []>} : vector<8x256xbf16>, vector<256x512xbf16>, vector<8x512xf32> -> vector<8x512xf32>
    %349 = arith.addf %348, %16 : vector<8x512xf32>
    %350 = vector.extract_strided_slice %349 {offsets = [0, 0], sizes = [8, 128], strides = [1, 1]} : vector<8x512xf32> to vector<8x128xf32>
    %351 = arith.negf %350 : vector<8x128xf32>
    %352 = math.exp %351 : vector<8x128xf32>
    %cst_66 = arith.constant 1.000000e+00 : f32
    %353 = vector.broadcast %cst_66 : f32 to vector<8x128xf32>
    %354 = arith.addf %353, %352 : vector<8x128xf32>
    %355 = arith.divf %353, %354 : vector<8x128xf32>
    %356 = vector.extract_strided_slice %349 {offsets = [0, 128], sizes = [8, 128], strides = [1, 1]} : vector<8x512xf32> to vector<8x128xf32>
    %357 = arith.negf %356 : vector<8x128xf32>
    %358 = math.exp %357 : vector<8x128xf32>
    %cst_67 = arith.constant 1.000000e+00 : f32
    %359 = vector.broadcast %cst_67 : f32 to vector<8x128xf32>
    %360 = arith.addf %359, %358 : vector<8x128xf32>
    %361 = arith.divf %359, %360 : vector<8x128xf32>
    %362 = vector.extract_strided_slice %349 {offsets = [0, 256], sizes = [8, 128], strides = [1, 1]} : vector<8x512xf32> to vector<8x128xf32>
    %363 = math.tanh %362 : vector<8x128xf32>
    %364 = vector.extract_strided_slice %349 {offsets = [0, 384], sizes = [8, 128], strides = [1, 1]} : vector<8x512xf32> to vector<8x128xf32>
    %365 = arith.negf %364 : vector<8x128xf32>
    %366 = math.exp %365 : vector<8x128xf32>
    %cst_68 = arith.constant 1.000000e+00 : f32
    %367 = vector.broadcast %cst_68 : f32 to vector<8x128xf32>
    %368 = arith.addf %367, %366 : vector<8x128xf32>
    %369 = arith.divf %367, %368 : vector<8x128xf32>
    %370 = arith.mulf %361, %313 : vector<8x128xf32>
    %371 = arith.mulf %355, %363 : vector<8x128xf32>
    %372 = arith.addf %370, %371 : vector<8x128xf32>
    %373 = math.tanh %372 : vector<8x128xf32>
    %374 = arith.mulf %369, %373 : vector<8x128xf32>
    %375 = vector.extract_strided_slice %11 {offsets = [0, 6, 0], sizes = [8, 1, 512], strides = [1, 1, 1]} : vector<8x8x512xf32> to vector<8x1x512xf32>
    %376 = vector.shape_cast %375 : vector<8x1x512xf32> to vector<8x512xf32>
    %377 = arith.truncf %345 : vector<8x128xf32> to vector<8x128xbf16>
    %cst_69 = arith.constant dense<0.000000e+00> : vector<8x512xf32>
    %378 = tpu.matmul %377, %12, %cst_69 {dimension_numbers = #tpu.dot_dimension_numbers<[1], [0], [0], [1], [0, 0, 1, 1], [], []>} : vector<8x128xbf16>, vector<128x512xbf16>, vector<8x512xf32> -> vector<8x512xf32>
    %379 = arith.addf %376, %378 : vector<8x512xf32>
    %380 = vector.extract_strided_slice %379 {offsets = [0, 0], sizes = [8, 128], strides = [1, 1]} : vector<8x512xf32> to vector<8x128xf32>
    %381 = arith.negf %380 : vector<8x128xf32>
    %382 = math.exp %381 : vector<8x128xf32>
    %cst_70 = arith.constant 1.000000e+00 : f32
    %383 = vector.broadcast %cst_70 : f32 to vector<8x128xf32>
    %384 = arith.addf %383, %382 : vector<8x128xf32>
    %385 = arith.divf %383, %384 : vector<8x128xf32>
    %386 = vector.extract_strided_slice %379 {offsets = [0, 128], sizes = [8, 128], strides = [1, 1]} : vector<8x512xf32> to vector<8x128xf32>
    %387 = arith.negf %386 : vector<8x128xf32>
    %388 = math.exp %387 : vector<8x128xf32>
    %cst_71 = arith.constant 1.000000e+00 : f32
    %389 = vector.broadcast %cst_71 : f32 to vector<8x128xf32>
    %390 = arith.addf %389, %388 : vector<8x128xf32>
    %391 = arith.divf %389, %390 : vector<8x128xf32>
    %392 = vector.extract_strided_slice %379 {offsets = [0, 256], sizes = [8, 128], strides = [1, 1]} : vector<8x512xf32> to vector<8x128xf32>
    %393 = math.tanh %392 : vector<8x128xf32>
    %394 = vector.extract_strided_slice %379 {offsets = [0, 384], sizes = [8, 128], strides = [1, 1]} : vector<8x512xf32> to vector<8x128xf32>
    %395 = arith.negf %394 : vector<8x128xf32>
    %396 = math.exp %395 : vector<8x128xf32>
    %cst_72 = arith.constant 1.000000e+00 : f32
    %397 = vector.broadcast %cst_72 : f32 to vector<8x128xf32>
    %398 = arith.addf %397, %396 : vector<8x128xf32>
    %399 = arith.divf %397, %398 : vector<8x128xf32>
    %400 = arith.mulf %391, %343 : vector<8x128xf32>
    %401 = arith.mulf %385, %393 : vector<8x128xf32>
    %402 = arith.addf %400, %401 : vector<8x128xf32>
    %403 = math.tanh %402 : vector<8x128xf32>
    %404 = arith.mulf %399, %403 : vector<8x128xf32>
    %405 = tpu.concatenate %404, %374 in 1 : vector<8x128xf32>, vector<8x128xf32> -> vector<8x256xf32>
    %406 = arith.truncf %405 : vector<8x256xf32> to vector<8x256xbf16>
    %cst_73 = arith.constant dense<0.000000e+00> : vector<8x512xf32>
    %407 = tpu.matmul %406, %13, %cst_73 {dimension_numbers = #tpu.dot_dimension_numbers<[1], [0], [0], [1], [0, 0, 1, 1], [], []>} : vector<8x256xbf16>, vector<256x512xbf16>, vector<8x512xf32> -> vector<8x512xf32>
    %408 = arith.addf %407, %16 : vector<8x512xf32>
    %409 = vector.extract_strided_slice %408 {offsets = [0, 0], sizes = [8, 128], strides = [1, 1]} : vector<8x512xf32> to vector<8x128xf32>
    %410 = arith.negf %409 : vector<8x128xf32>
    %411 = math.exp %410 : vector<8x128xf32>
    %cst_74 = arith.constant 1.000000e+00 : f32
    %412 = vector.broadcast %cst_74 : f32 to vector<8x128xf32>
    %413 = arith.addf %412, %411 : vector<8x128xf32>
    %414 = arith.divf %412, %413 : vector<8x128xf32>
    %415 = vector.extract_strided_slice %408 {offsets = [0, 128], sizes = [8, 128], strides = [1, 1]} : vector<8x512xf32> to vector<8x128xf32>
    %416 = arith.negf %415 : vector<8x128xf32>
    %417 = math.exp %416 : vector<8x128xf32>
    %cst_75 = arith.constant 1.000000e+00 : f32
    %418 = vector.broadcast %cst_75 : f32 to vector<8x128xf32>
    %419 = arith.addf %418, %417 : vector<8x128xf32>
    %420 = arith.divf %418, %419 : vector<8x128xf32>
    %421 = vector.extract_strided_slice %408 {offsets = [0, 256], sizes = [8, 128], strides = [1, 1]} : vector<8x512xf32> to vector<8x128xf32>
    %422 = math.tanh %421 : vector<8x128xf32>
    %423 = vector.extract_strided_slice %408 {offsets = [0, 384], sizes = [8, 128], strides = [1, 1]} : vector<8x512xf32> to vector<8x128xf32>
    %424 = arith.negf %423 : vector<8x128xf32>
    %425 = math.exp %424 : vector<8x128xf32>
    %cst_76 = arith.constant 1.000000e+00 : f32
    %426 = vector.broadcast %cst_76 : f32 to vector<8x128xf32>
    %427 = arith.addf %426, %425 : vector<8x128xf32>
    %428 = arith.divf %426, %427 : vector<8x128xf32>
    %429 = arith.mulf %420, %372 : vector<8x128xf32>
    %430 = arith.mulf %414, %422 : vector<8x128xf32>
    %431 = arith.addf %429, %430 : vector<8x128xf32>
    %432 = math.tanh %431 : vector<8x128xf32>
    %433 = arith.mulf %428, %432 : vector<8x128xf32>
    %434 = vector.extract_strided_slice %11 {offsets = [0, 7, 0], sizes = [8, 1, 512], strides = [1, 1, 1]} : vector<8x8x512xf32> to vector<8x1x512xf32>
    %435 = vector.shape_cast %434 : vector<8x1x512xf32> to vector<8x512xf32>
    %436 = arith.truncf %404 : vector<8x128xf32> to vector<8x128xbf16>
    %cst_77 = arith.constant dense<0.000000e+00> : vector<8x512xf32>
    %437 = tpu.matmul %436, %12, %cst_77 {dimension_numbers = #tpu.dot_dimension_numbers<[1], [0], [0], [1], [0, 0, 1, 1], [], []>} : vector<8x128xbf16>, vector<128x512xbf16>, vector<8x512xf32> -> vector<8x512xf32>
    %438 = arith.addf %435, %437 : vector<8x512xf32>
    %439 = vector.extract_strided_slice %438 {offsets = [0, 0], sizes = [8, 128], strides = [1, 1]} : vector<8x512xf32> to vector<8x128xf32>
    %440 = arith.negf %439 : vector<8x128xf32>
    %441 = math.exp %440 : vector<8x128xf32>
    %cst_78 = arith.constant 1.000000e+00 : f32
    %442 = vector.broadcast %cst_78 : f32 to vector<8x128xf32>
    %443 = arith.addf %442, %441 : vector<8x128xf32>
    %444 = arith.divf %442, %443 : vector<8x128xf32>
    %445 = vector.extract_strided_slice %438 {offsets = [0, 128], sizes = [8, 128], strides = [1, 1]} : vector<8x512xf32> to vector<8x128xf32>
    %446 = arith.negf %445 : vector<8x128xf32>
    %447 = math.exp %446 : vector<8x128xf32>
    %cst_79 = arith.constant 1.000000e+00 : f32
    %448 = vector.broadcast %cst_79 : f32 to vector<8x128xf32>
    %449 = arith.addf %448, %447 : vector<8x128xf32>
    %450 = arith.divf %448, %449 : vector<8x128xf32>
    %451 = vector.extract_strided_slice %438 {offsets = [0, 256], sizes = [8, 128], strides = [1, 1]} : vector<8x512xf32> to vector<8x128xf32>
    %452 = math.tanh %451 : vector<8x128xf32>
    %453 = vector.extract_strided_slice %438 {offsets = [0, 384], sizes = [8, 128], strides = [1, 1]} : vector<8x512xf32> to vector<8x128xf32>
    %454 = arith.negf %453 : vector<8x128xf32>
    %455 = math.exp %454 : vector<8x128xf32>
    %cst_80 = arith.constant 1.000000e+00 : f32
    %456 = vector.broadcast %cst_80 : f32 to vector<8x128xf32>
    %457 = arith.addf %456, %455 : vector<8x128xf32>
    %458 = arith.divf %456, %457 : vector<8x128xf32>
    %459 = arith.mulf %450, %402 : vector<8x128xf32>
    %460 = arith.mulf %444, %452 : vector<8x128xf32>
    %461 = arith.addf %459, %460 : vector<8x128xf32>
    %462 = math.tanh %461 : vector<8x128xf32>
    %463 = arith.mulf %458, %462 : vector<8x128xf32>
    %464 = tpu.concatenate %463, %433 in 1 : vector<8x128xf32>, vector<8x128xf32> -> vector<8x256xf32>
    %465 = arith.truncf %464 : vector<8x256xf32> to vector<8x256xbf16>
    %cst_81 = arith.constant dense<0.000000e+00> : vector<8x512xf32>
    %466 = tpu.matmul %465, %13, %cst_81 {dimension_numbers = #tpu.dot_dimension_numbers<[1], [0], [0], [1], [0, 0, 1, 1], [], []>} : vector<8x256xbf16>, vector<256x512xbf16>, vector<8x512xf32> -> vector<8x512xf32>
    %467 = arith.addf %466, %16 : vector<8x512xf32>
    %468 = vector.extract_strided_slice %467 {offsets = [0, 0], sizes = [8, 128], strides = [1, 1]} : vector<8x512xf32> to vector<8x128xf32>
    %469 = arith.negf %468 : vector<8x128xf32>
    %470 = math.exp %469 : vector<8x128xf32>
    %cst_82 = arith.constant 1.000000e+00 : f32
    %471 = vector.broadcast %cst_82 : f32 to vector<8x128xf32>
    %472 = arith.addf %471, %470 : vector<8x128xf32>
    %473 = arith.divf %471, %472 : vector<8x128xf32>
    %474 = vector.extract_strided_slice %467 {offsets = [0, 128], sizes = [8, 128], strides = [1, 1]} : vector<8x512xf32> to vector<8x128xf32>
    %475 = arith.negf %474 : vector<8x128xf32>
    %476 = math.exp %475 : vector<8x128xf32>
    %cst_83 = arith.constant 1.000000e+00 : f32
    %477 = vector.broadcast %cst_83 : f32 to vector<8x128xf32>
    %478 = arith.addf %477, %476 : vector<8x128xf32>
    %479 = arith.divf %477, %478 : vector<8x128xf32>
    %480 = vector.extract_strided_slice %467 {offsets = [0, 256], sizes = [8, 128], strides = [1, 1]} : vector<8x512xf32> to vector<8x128xf32>
    %481 = math.tanh %480 : vector<8x128xf32>
    %482 = vector.extract_strided_slice %467 {offsets = [0, 384], sizes = [8, 128], strides = [1, 1]} : vector<8x512xf32> to vector<8x128xf32>
    %483 = arith.negf %482 : vector<8x128xf32>
    %484 = math.exp %483 : vector<8x128xf32>
    %cst_84 = arith.constant 1.000000e+00 : f32
    %485 = vector.broadcast %cst_84 : f32 to vector<8x128xf32>
    %486 = arith.addf %485, %484 : vector<8x128xf32>
    %487 = arith.divf %485, %486 : vector<8x128xf32>
    %488 = arith.mulf %479, %431 : vector<8x128xf32>
    %489 = arith.mulf %473, %481 : vector<8x128xf32>
    %490 = arith.addf %488, %489 : vector<8x128xf32>
    %491 = math.tanh %490 : vector<8x128xf32>
    %492 = arith.mulf %487, %491 : vector<8x128xf32>
    %c0_85 = arith.constant 0 : index
    %c0_86 = arith.constant 0 : index
    %493 = vector.load %arg11[%c0_85, %c0_86] : memref<8x128xf32, #tpu.memory_space<vmem>>, vector<8x128xf32>
    tpu.vector_store %arg11[%c0_85, %c0_86], %463 {strides = array<i32>} : memref<8x128xf32, #tpu.memory_space<vmem>>, vector<8x128xf32>,
    %c0_87 = arith.constant 0 : index
    %c0_88 = arith.constant 0 : index
    %494 = vector.load %arg12[%c0_87, %c0_88] : memref<8x128xf32, #tpu.memory_space<vmem>>, vector<8x128xf32>
    tpu.vector_store %arg12[%c0_87, %c0_88], %461 {strides = array<i32>} : memref<8x128xf32, #tpu.memory_space<vmem>>, vector<8x128xf32>,
    %c0_89 = arith.constant 0 : index
    %c0_90 = arith.constant 0 : index
    %495 = vector.load %arg13[%c0_89, %c0_90] : memref<8x128xf32, #tpu.memory_space<vmem>>, vector<8x128xf32>
    tpu.vector_store %arg13[%c0_89, %c0_90], %492 {strides = array<i32>} : memref<8x128xf32, #tpu.memory_space<vmem>>, vector<8x128xf32>,
    %c0_91 = arith.constant 0 : index
    %c0_92 = arith.constant 0 : index
    %496 = vector.load %arg14[%c0_91, %c0_92] : memref<8x128xf32, #tpu.memory_space<vmem>>, vector<8x128xf32>
    tpu.vector_store %arg14[%c0_91, %c0_92], %490 {strides = array<i32>} : memref<8x128xf32, #tpu.memory_space<vmem>>, vector<8x128xf32>,
    %c1_i32 = arith.constant 1 : i32
    %497 = arith.cmpi eq, %arg1, %c1_i32 : i32
    %498 = arith.extui %497 : i1 to i32
    %c0_i32_93 = arith.constant 0 : i32
    %499 = arith.cmpi ne, %498, %c0_i32_93 : i32
    scf.if %499 {
      %c0_94 = arith.constant 0 : index
      %c0_95 = arith.constant 0 : index
      %500 = vector.load %arg8[%c0_94, %c0_95] : memref<1x128xf32, #tpu.memory_space<vmem>>, vector<1x128xf32>
      %501 = vector.broadcast %500 : vector<1x128xf32> to vector<8x128xf32>
      %502 = arith.mulf %492, %501 : vector<8x128xf32>
      %cst_96 = arith.constant dense<0.000000e+00> : vector<8xf32>
      %503 = vector.multi_reduction <add>, %502, %cst_96 [1] : vector<8x128xf32> to vector<8xf32>
      %504 = vector.shape_cast %503 : vector<8xf32> to vector<8x1xf32>
      %c0_97 = arith.constant 0 : index
      %c0_98 = arith.constant 0 : index
      %505 = vector.load %arg9[%c0_97, %c0_98] : memref<1x1xf32, #tpu.memory_space<vmem>>, vector<1x1xf32>
      %506 = vector.broadcast %505 : vector<1x1xf32> to vector<8x1xf32>
      %507 = arith.addf %504, %506 : vector<8x1xf32>
      %c0_99 = arith.constant 0 : index
      %c0_100 = arith.constant 0 : index
      %508 = vector.load %arg10[%c0_99, %c0_100] : memref<8x1xf32, #tpu.memory_space<vmem>>, vector<8x1xf32>
      tpu.vector_store %arg10[%c0_99, %c0_100], %507 {strides = array<i32>} : memref<8x1xf32, #tpu.memory_space<vmem>>, vector<8x1xf32>,
    } else {
    }
    return
  }
  func.func @transform_0(%arg0: i32, %arg1: i32) -> (i32, i32, i32) {
    %c0_i32 = arith.constant 0 : i32
    %c0_i32_0 = arith.constant 0 : i32
    return %arg0, %arg1, %c0_i32 : i32, i32, i32
  }
  func.func @transform_1(%arg0: i32, %arg1: i32) -> (i32, i32) {
    %c0_i32 = arith.constant 0 : i32
    %c0_i32_0 = arith.constant 0 : i32
    %c0_i32_1 = arith.constant 0 : i32
    return %c0_i32, %c0_i32_0 : i32, i32
  }
  func.func @transform_2(%arg0: i32, %arg1: i32) -> (i32, i32) {
    %c0_i32 = arith.constant 0 : i32
    %c0_i32_0 = arith.constant 0 : i32
    %c0_i32_1 = arith.constant 0 : i32
    return %c0_i32, %c0_i32_0 : i32, i32
  }
  func.func @transform_3(%arg0: i32, %arg1: i32) -> (i32, i32) {
    %c0_i32 = arith.constant 0 : i32
    %c0_i32_0 = arith.constant 0 : i32
    %c0_i32_1 = arith.constant 0 : i32
    return %c0_i32, %c0_i32_0 : i32, i32
  }
  func.func @transform_4(%arg0: i32, %arg1: i32) -> (i32, i32) {
    %c0_i32 = arith.constant 0 : i32
    %c0_i32_0 = arith.constant 0 : i32
    %c0_i32_1 = arith.constant 0 : i32
    return %c0_i32, %c0_i32_0 : i32, i32
  }
  func.func @transform_5(%arg0: i32, %arg1: i32) -> (i32, i32) {
    %c0_i32 = arith.constant 0 : i32
    %c0_i32_0 = arith.constant 0 : i32
    %c0_i32_1 = arith.constant 0 : i32
    return %c0_i32, %c0_i32_0 : i32, i32
  }
  func.func @transform_6(%arg0: i32, %arg1: i32) -> (i32, i32) {
    %c0_i32 = arith.constant 0 : i32
    %c0_i32_0 = arith.constant 0 : i32
    %c0_i32_1 = arith.constant 0 : i32
    return %c0_i32, %c0_i32_0 : i32, i32
  }
  func.func @transform_7(%arg0: i32, %arg1: i32) -> (i32, i32) {
    %c0_i32 = arith.constant 0 : i32
    %c0_i32_0 = arith.constant 0 : i32
    %c0_i32_1 = arith.constant 0 : i32
    return %c0_i32, %c0_i32_0 : i32, i32
  }
  func.func @transform_8(%arg0: i32, %arg1: i32) -> (i32, i32) {
    %c0_i32 = arith.constant 0 : i32
    %c0_i32_0 = arith.constant 0 : i32
    return %arg0, %c0_i32 : i32, i32
  }
}

</mosaic_0001>

<llo_original>
// kernel: tpu_custom_call.1
$region0: #{tpu_custom_call.1}
  #allocation0 [shape = 'u32[]', space=smem, size = 0x4, offset = 0x4, fixed_abs, tag = 'smem constant byte address 0x4 - core index']
  #allocation1 [shape = 'u32[144,128]{1,0:T(1,128)}', space=vmem, size = 0x12000, scoped, tag = 'internal scratch']
  #allocation2 [shape = 'f32[8,128]{1,0:T(8,128)}', space=vmem, size = 0x1000, scoped, tag = 'scratch operand']
  #allocation3 [shape = 'f32[8,128]{1,0:T(8,128)}', space=vmem, size = 0x1000, scoped, tag = 'scratch operand']
  #allocation4 [shape = 'f32[8,128]{1,0:T(8,128)}', space=vmem, size = 0x1000, scoped, tag = 'scratch operand']
  #allocation5 [shape = 'f32[8,128]{1,0:T(8,128)}', space=vmem, size = 0x1000, scoped, tag = 'scratch operand']
  #allocation6 [shape = 'f32[1,1]{1,0:T(1,128)S(1)}', space=vmem, size = 0x200, scoped, tag = 'scoped memory for tpu_custom_call.1']
  %s0 = inlined_call_operand.vmem [shape: f32[16,16,8], index: 0, kind: input, shape index: {}]
  %s1 = inlined_call_operand.vmem [shape: bf16[8,512], index: 1, kind: input, shape index: {}]
  %s2 = inlined_call_operand.vmem [shape: bf16[128,512], index: 2, kind: input, shape index: {}]
  %s3 = inlined_call_operand.vmem [shape: f32[1,512], index: 3, kind: input, shape index: {}]
  %s4 = inlined_call_operand.hbm [shape: bf16[256,512], index: 4, kind: input, shape index: {}]
  %s5 = inlined_call_operand.vmem [shape: f32[1,512], index: 5, kind: input, shape index: {}]
  %s6 = inlined_call_operand.vmem [shape: f32[1,128], index: 6, kind: input, shape index: {}]
  %s7 = inlined_call_operand.<no memory space> [shape: f32[1,1], index: 7, kind: input, shape index: {}]
  %s8 = inlined_call_operand.vmem [shape: f32[16,1], index: 8, kind: output, shape index: {}]
  %s9 = sld [smem:[#allocation0]]
  $region115: #{tpu_custom_call.1} parent=0
    _
  %s11 = ssub.s32 1, %s9
  %s12 = scalar_select 0, %s11, %s9
  %v13 = vstv %s7
  %14 = vst [vmem:[#allocation6] sm:$0x1] %v13
  $region1: #{tpu_custom_call.1} parent=0
    #allocation7 [shape = 'u8[65536]{0}', space=vmem, size = 0x10000, scoped, tag = 'input window, operand 0']
    #allocation8 [shape = 'u8[262144]{0}', space=vmem, size = 0x40000, scoped, tag = 'input window, operand 4, single buffered']
    #allocation9 [shape = 's32[2]{0}', space=sflag, size = 0x8, scoped, tag = 'scoped memory for tpu_custom_call.1']
    %15 = vsyncpa [#allocation9], 0
    loop: start=0, step=1, limit=6
    $region2: #{tpu_custom_call.1} parent=1 // loop_pre_header
      _
    $region3: #{tpu_custom_call.1} parent=1 // loop_header
      %s17 = sphi 0, %s21
      %p18 = scmp.ge.s32.totalorder %s17, 6
      %s24 = sphi 0, %s36
      %s25 = sphi 0, %s32
      %s26 = sphi 0, %s24
      %s27 = sphi 0, %s25
      %s28 = sphi 0, %s26
      %s29 = sphi 0, %s27
      %s41 = sphi 0, %s43
      %s44 = sphi 0, %s41
      %s45 = sphi 0, %s44
      %s61 = sphi 0, %s45
      %s65 = sphi 0, %s65
      %s67 = sphi 0, %s65
      %s68 = sphi 0, %s67
      %s82 = sphi 0, %s68
      %s86 = sphi 0, %s86
      %s88 = sphi 0, %s86
      %s89 = sphi 0, %s88
      %s103 = sphi 0, %s89
      %s107 = sphi 0, %s107
      %s109 = sphi 0, %s107
      %s110 = sphi 0, %s109
      %s124 = sphi 0, %s110
      %s128 = sphi 0, %s128
      %s130 = sphi 0, %s128
      %s131 = sphi 0, %s130
      %s145 = sphi 0, %s131
      %s149 = sphi 0, %s149
      %s151 = sphi 0, %s149
      %s152 = sphi 0, %s151
      %s166 = sphi 0, %s152
      %s170 = sphi 0, %s170
      %s172 = sphi 0, %s170
      %s173 = sphi 0, %s172
      %s187 = sphi 0, %s173
      %s191 = sphi 0, %s191
      %s193 = sphi 0, %s191
      %s194 = sphi 0, %s193
      %s208 = sphi 0, %s194
      %s214 = sphi 0, %s216
      %s217 = sphi 0, %s214
      %s218 = sphi 0, %s217
      %s234 = sphi 0, %s218
    $region4: #{tpu_custom_call.1} parent=1 // loop_header_branch
      %20 = sbr.rel (%p18) target = $region8
    $region5: #{tpu_custom_call.1} parent=1 // loop_body
      %s22 = ssub.s32 %s17, 1
      %s23 = ssub.s32 %s17, 2
      %s30 = sadd.s32 1, %s25
      %p31 = scmp.ge.s32.totalorder %s30, 2
      %s32 = scalar_select %p31, 0, %s30
      %s33 = sadd.s32 1, %s24
      %s34 = scalar_select %p31, %s33, %s24
      %p35 = scmp.ge.s32.totalorder %s34, 2
      %s36 = scalar_select %p35, 0, %s34
      %s37 = ssub.s32 %s24, %s36
      %s38 = ssub.s32 %s25, %s32
      %s39 = sor.u32 %s37, %s38
      %p40 = scmp.eq.s32.totalorder %s39, 0
      %s42 = sadd.s32 %s41, 1
      %s43 = scalar_select %p40, %s41, %s42
      %p46 = pneg %p40
      %p47 = scmp.eq.s32.totalorder %s17, 3
      %p48 = por %p46, %p47
      %p49 = scmp.ne.s32.totalorder %s41, %s44
      %p50 = scmp.eq.s32.totalorder %s17, 0
      %p51 = por %p49, %p50
      %p52 = scmp.ne.s32.totalorder %s41, %s44
      %p53 = scmp.eq.s32.totalorder %s22, 3
      %p54 = por %p52, %p53
      %p55 = scmp.ne.s32.totalorder %s44, %s45
      %p56 = scmp.eq.s32.totalorder %s22, 0
      %p57 = por %p55, %p56
      %p58 = scmp.ne.s32.totalorder %s44, %s45
      %p59 = scmp.eq.s32.totalorder %s23, 3
      %p60 = por %p58, %p59
      %p62 = scmp.ne.s32.totalorder %s45, %s61
      %p63 = scmp.eq.s32.totalorder %s23, 0
      %p64 = por %p62, %p63
      %s66 = sadd.s32 %s65, 1
      %p69 = scmp.eq.s32.totalorder %s17, 3
      %p70 = scmp.ne.s32.totalorder %s65, %s67
      %p71 = scmp.eq.s32.totalorder %s17, 0
      %p72 = por %p70, %p71
      %p73 = scmp.ne.s32.totalorder %s65, %s67
      %p74 = scmp.eq.s32.totalorder %s22, 3
      %p75 = por %p73, %p74
      %p76 = scmp.ne.s32.totalorder %s67, %s68
      %p77 = scmp.eq.s32.totalorder %s22, 0
      %p78 = por %p76, %p77
      %p79 = scmp.ne.s32.totalorder %s67, %s68
      %p80 = scmp.eq.s32.totalorder %s23, 3
      %p81 = por %p79, %p80
      %p83 = scmp.ne.s32.totalorder %s68, %s82
      %p84 = scmp.eq.s32.totalorder %s23, 0
      %p85 = por %p83, %p84
      %s87 = sadd.s32 %s86, 1
      %p90 = scmp.eq.s32.totalorder %s17, 3
      %p91 = scmp.ne.s32.totalorder %s86, %s88
      %p92 = scmp.eq.s32.totalorder %s17, 0
      %p93 = por %p91, %p92
      %p94 = scmp.ne.s32.totalorder %s86, %s88
      %p95 = scmp.eq.s32.totalorder %s22, 3
      %p96 = por %p94, %p95
      %p97 = scmp.ne.s32.totalorder %s88, %s89
      %p98 = scmp.eq.s32.totalorder %s22, 0
      %p99 = por %p97, %p98
      %p100 = scmp.ne.s32.totalorder %s88, %s89
      %p101 = scmp.eq.s32.totalorder %s23, 3
      %p102 = por %p100, %p101
      %p104 = scmp.ne.s32.totalorder %s89, %s103
      %p105 = scmp.eq.s32.totalorder %s23, 0
      %p106 = por %p104, %p105
      %s108 = sadd.s32 %s107, 1
      %p111 = scmp.eq.s32.totalorder %s17, 3
      %p112 = scmp.ne.s32.totalorder %s107, %s109
      %p113 = scmp.eq.s32.totalorder %s17, 0
      %p114 = por %p112, %p113
      %p115 = scmp.ne.s32.totalorder %s107, %s109
      %p116 = scmp.eq.s32.totalorder %s22, 3
      %p117 = por %p115, %p116
      %p118 = scmp.ne.s32.totalorder %s109, %s110
      %p119 = scmp.eq.s32.totalorder %s22, 0
      %p120 = por %p118, %p119
      %p121 = scmp.ne.s32.totalorder %s109, %s110
      %p122 = scmp.eq.s32.totalorder %s23, 3
      %p123 = por %p121, %p122
      %p125 = scmp.ne.s32.totalorder %s110, %s124
      %p126 = scmp.eq.s32.totalorder %s23, 0
      %p127 = por %p125, %p126
      %s129 = sadd.s32 %s128, 1
      %p132 = scmp.eq.s32.totalorder %s17, 3
      %p133 = scmp.ne.s32.totalorder %s128, %s130
      %p134 = scmp.eq.s32.totalorder %s17, 0
      %p135 = por %p133, %p134
      %p136 = scmp.ne.s32.totalorder %s128, %s130
      %p137 = scmp.eq.s32.totalorder %s22, 3
      %p138 = por %p136, %p137
      %p139 = scmp.ne.s32.totalorder %s130, %s131
      %p140 = scmp.eq.s32.totalorder %s22, 0
      %p141 = por %p139, %p140
      %p142 = scmp.ne.s32.totalorder %s130, %s131
      %p143 = scmp.eq.s32.totalorder %s23, 3
      %p144 = por %p142, %p143
      %p146 = scmp.ne.s32.totalorder %s131, %s145
      %p147 = scmp.eq.s32.totalorder %s23, 0
      %p148 = por %p146, %p147
      %s150 = sadd.s32 %s149, 1
      %p153 = scmp.eq.s32.totalorder %s17, 3
      %p154 = scmp.ne.s32.totalorder %s149, %s151
      %p155 = scmp.eq.s32.totalorder %s17, 0
      %p156 = por %p154, %p155
      %p157 = scmp.ne.s32.totalorder %s149, %s151
      %p158 = scmp.eq.s32.totalorder %s22, 3
      %p159 = por %p157, %p158
      %p160 = scmp.ne.s32.totalorder %s151, %s152
      %p161 = scmp.eq.s32.totalorder %s22, 0
      %p162 = por %p160, %p161
      %p163 = scmp.ne.s32.totalorder %s151, %s152
      %p164 = scmp.eq.s32.totalorder %s23, 3
      %p165 = por %p163, %p164
      %p167 = scmp.ne.s32.totalorder %s152, %s166
      %p168 = scmp.eq.s32.totalorder %s23, 0
      %p169 = por %p167, %p168
      %s171 = sadd.s32 %s170, 1
      %p174 = scmp.eq.s32.totalorder %s17, 3
      %p175 = scmp.ne.s32.totalorder %s170, %s172
      %p176 = scmp.eq.s32.totalorder %s17, 0
      %p177 = por %p175, %p176
      %p178 = scmp.ne.s32.totalorder %s170, %s172
      %p179 = scmp.eq.s32.totalorder %s22, 3
      %p180 = por %p178, %p179
      %p181 = scmp.ne.s32.totalorder %s172, %s173
      %p182 = scmp.eq.s32.totalorder %s22, 0
      %p183 = por %p181, %p182
      %p184 = scmp.ne.s32.totalorder %s172, %s173
      %p185 = scmp.eq.s32.totalorder %s23, 3
      %p186 = por %p184, %p185
      %p188 = scmp.ne.s32.totalorder %s173, %s187
      %p189 = scmp.eq.s32.totalorder %s23, 0
      %p190 = por %p188, %p189
      %s192 = sadd.s32 %s191, 1
      %p195 = scmp.eq.s32.totalorder %s17, 3
      %p196 = scmp.ne.s32.totalorder %s191, %s193
      %p197 = scmp.eq.s32.totalorder %s17, 0
      %p198 = por %p196, %p197
      %p199 = scmp.ne.s32.totalorder %s191, %s193
      %p200 = scmp.eq.s32.totalorder %s22, 3
      %p201 = por %p199, %p200
      %p202 = scmp.ne.s32.totalorder %s193, %s194
      %p203 = scmp.eq.s32.totalorder %s22, 0
      %p204 = por %p202, %p203
      %p205 = scmp.ne.s32.totalorder %s193, %s194
      %p206 = scmp.eq.s32.totalorder %s23, 3
      %p207 = por %p205, %p206
      %p209 = scmp.ne.s32.totalorder %s194, %s208
      %p210 = scmp.eq.s32.totalorder %s23, 0
      %p211 = por %p209, %p210
      %s212 = ssub.s32 %s24, %s36
      %p213 = scmp.eq.s32.totalorder %s212, 0
      %s215 = sadd.s32 %s214, 1
      %s216 = scalar_select %p213, %s214, %s215
      %p219 = pneg %p213
      %p220 = scmp.eq.s32.totalorder %s17, 3
      %p221 = por %p219, %p220
      %p222 = scmp.ne.s32.totalorder %s214, %s217
      %p223 = scmp.eq.s32.totalorder %s17, 0
      %p224 = por %p222, %p223
      %p225 = scmp.ne.s32.totalorder %s214, %s217
      %p226 = scmp.eq.s32.totalorder %s22, 3
      %p227 = por %p225, %p226
      %p228 = scmp.ne.s32.totalorder %s217, %s218
      %p229 = scmp.eq.s32.totalorder %s22, 0
      %p230 = por %p228, %p229
      %p231 = scmp.ne.s32.totalorder %s217, %s218
      %p232 = scmp.eq.s32.totalorder %s23, 3
      %p233 = por %p231, %p232
      %p235 = scmp.ne.s32.totalorder %s218, %s234
      %p236 = scmp.eq.s32.totalorder %s23, 0
      %p237 = por %p235, %p236
      %p238 = scmp.le.s32.totalorder 1, %s17
      %p239 = scmp.lt.s32.totalorder %s17, 5
      %p240 = pnand %p238, %p239
      %p241 = pneg %p240
      // Predicated region
      $region9: #{tpu_custom_call.1} parent=5 // pred_check
        _
      $region10: #{tpu_custom_call.1} parent=5 // pred_check_branch
        %243 = sbr.rel (%p240) target = $region12
      $region11: #{tpu_custom_call.1} parent=5 // pred_region
        %s244 = ssub.s32 %s17, 1
        // Predicated region
        $region13: #{tpu_custom_call.1} parent=11 // pred_check
          %p245 = pneg %p78
        $region14: #{tpu_custom_call.1} parent=11 // pred_check_branch
          %247 = sbr.rel (%p245) target = $region16
        $region15: #{tpu_custom_call.1} parent=11 // pred_region
          _
        $region16: #{tpu_custom_call.1} parent=11 // pred_fallthru
          _
        // Predicated region
        $region17: #{tpu_custom_call.1} parent=11 // pred_check
          %p248 = pneg %p99
        $region18: #{tpu_custom_call.1} parent=11 // pred_check_branch
          %250 = sbr.rel (%p248) target = $region20
        $region19: #{tpu_custom_call.1} parent=11 // pred_region
          _
        $region20: #{tpu_custom_call.1} parent=11 // pred_fallthru
          _
        // Predicated region
        $region21: #{tpu_custom_call.1} parent=11 // pred_check
          %p251 = pneg %p120
        $region22: #{tpu_custom_call.1} parent=11 // pred_check_branch
          %253 = sbr.rel (%p251) target = $region24
        $region23: #{tpu_custom_call.1} parent=11 // pred_region
          _
        $region24: #{tpu_custom_call.1} parent=11 // pred_fallthru
          _
        // Predicated region
        $region25: #{tpu_custom_call.1} parent=11 // pred_check
          %p254 = pneg %p141
        $region26: #{tpu_custom_call.1} parent=11 // pred_check_branch
          %256 = sbr.rel (%p254) target = $region28
        $region27: #{tpu_custom_call.1} parent=11 // pred_region
          %s258 = ssub.s32 8192, 8192
          %259 = vsyncadd [#allocation9], %s258
          %s260 = sshll.u32 [#allocation8], 4
          %s261 = int_to_ptr.vmem [resolvable:$true] %s260
          %266 = dma.hbm_to_vmem [thread:$0]  %s4, 8192, %s261, [#allocation9], 256, 256, 16
        $region28: #{tpu_custom_call.1} parent=11 // pred_fallthru
          _
        // Predicated region
        $region29: #{tpu_custom_call.1} parent=11 // pred_check
          %p267 = pneg %p162
        $region30: #{tpu_custom_call.1} parent=11 // pred_check_branch
          %269 = sbr.rel (%p267) target = $region32
        $region31: #{tpu_custom_call.1} parent=11 // pred_region
          _
        $region32: #{tpu_custom_call.1} parent=11 // pred_fallthru
          _
        // Predicated region
        $region33: #{tpu_custom_call.1} parent=11 // pred_check
          %p270 = pneg %p183
        $region34: #{tpu_custom_call.1} parent=11 // pred_check_branch
          %272 = sbr.rel (%p270) target = $region36
        $region35: #{tpu_custom_call.1} parent=11 // pred_region
          _
        $region36: #{tpu_custom_call.1} parent=11 // pred_fallthru
          _
        // Predicated region
        $region37: #{tpu_custom_call.1} parent=11 // pred_check
          %p273 = pneg %p204
        $region38: #{tpu_custom_call.1} parent=11 // pred_check_branch
          %275 = sbr.rel (%p273) target = $region40
        $region39: #{tpu_custom_call.1} parent=11 // pred_region
          _
        $region40: #{tpu_custom_call.1} parent=11 // pred_fallthru
          _
      $region12: #{tpu_custom_call.1} parent=5 // pred_fallthru
        _
      %p276 = scmp.lt.s32.totalorder %s17, 4
      // Predicated region
      $region41: #{tpu_custom_call.1} parent=5 // pred_check
        %p277 = pneg %p276
      $region42: #{tpu_custom_call.1} parent=5 // pred_check_branch
        %279 = sbr.rel (%p277) target = $region44
      $region43: #{tpu_custom_call.1} parent=5 // pred_region
        // Predicated region
        $region45: #{tpu_custom_call.1} parent=43 // pred_check
          %p280 = pneg %p51
        $region46: #{tpu_custom_call.1} parent=43 // pred_check_branch
          %282 = sbr.rel (%p280) target = $region48
        $region47: #{tpu_custom_call.1} parent=43 // pred_region
          %s283 = sand.u32 %s41, 1
          %s284 = sand.u32 %s41, 1
          %s285 = smul.addr %s284, 64
          %s286 = scalar_lea.vmem [#allocation7], %s285
          %s287 = smul.u32 8, %s24
          %s288 = smul.addr %s287, 2
          %s289 = sadd.s32 %s25, %s288
          %s290 = smul.addr %s289, 8
          %s291 = scalar_lea.vmem %s0, %s290
          // Predicated region
          $region49: #{tpu_custom_call.1} parent=47 // pred_check
            _
          $region50: #{tpu_custom_call.1} parent=47 // pred_check_branch
            %293 = sbr.rel (0) target = $region52
          $region51: #{tpu_custom_call.1} parent=47 // pred_region
            // Predicated region
            $region53: #{tpu_custom_call.1} parent=51 // pred_check
              _
            $region54: #{tpu_custom_call.1} parent=51 // pred_check_branch
              %295 = sbr.rel (0) target = $region56
            $region55: #{tpu_custom_call.1} parent=51 // pred_region
              // Predicated region
              $region68: #{tpu_custom_call.1} parent=55 // pred_check
                _
              $region69: #{tpu_custom_call.1} parent=55 // pred_check_branch
                %324 = sbr.rel (0) target = $region71
              $region70: #{tpu_custom_call.1} parent=55 // pred_region
                loop: start=0, step=1, limit=1
                $region72: #{tpu_custom_call.1} parent=70 // loop_pre_header
                  _
                $region73: #{tpu_custom_call.1} parent=70 // loop_header
                  %s326 = sphi 0, %s330
                  %p327 = scmp.ge.s32.totalorder %s326, 1
                  %s331 = sphi %s291, %s291
                  %s332 = sphi %s286, %s286
                $region74: #{tpu_custom_call.1} parent=70 // loop_header_branch
                  %329 = sbr.rel (%p327) target = $region78
                $region75: #{tpu_custom_call.1} parent=70 // loop_body
                  %v333 = vld [vmem:[%s331] sm:$0xff]
                  %334 = vst [vmem:[%s332] sm:$0xff] %v333
                  %v335 = vld [vmem:[%s331 + $0x10] sm:$0xff]
                  %336 = vst [vmem:[%s332 + $0x8] sm:$0xff] %v335
                  %v337 = vld [vmem:[%s331 + $0x20] sm:$0xff]
                  %338 = vst [vmem:[%s332 + $0x10] sm:$0xff] %v337
                  %v339 = vld [vmem:[%s331 + $0x30] sm:$0xff]
                  %340 = vst [vmem:[%s332 + $0x18] sm:$0xff] %v339
                  %v341 = vld [vmem:[%s331 + $0x40] sm:$0xff]
                  %342 = vst [vmem:[%s332 + $0x20] sm:$0xff] %v341
                  %v343 = vld [vmem:[%s331 + $0x50] sm:$0xff]
                  %344 = vst [vmem:[%s332 + $0x28] sm:$0xff] %v343
                  %v345 = vld [vmem:[%s331 + $0x60] sm:$0xff]
                  %346 = vst [vmem:[%s332 + $0x30] sm:$0xff] %v345
                  %v347 = vld [vmem:[%s331 + $0x70] sm:$0xff]
                  %348 = vst [vmem:[%s332 + $0x38] sm:$0xff] %v347
                $region76: #{tpu_custom_call.1} parent=70 // loop_footer
                  %s330 = sadd.s32 1, %s326
                $region77: #{tpu_custom_call.1} parent=70 // loop_footer_branch
                  %325 = sbr.rel target = $region73
                $region78: #{tpu_custom_call.1} parent=70 // loop_exit
                  _
              $region71: #{tpu_custom_call.1} parent=55 // pred_fallthru
                _
              // Predicated region
              $region79: #{tpu_custom_call.1} parent=55 // pred_check
                _
              $region80: #{tpu_custom_call.1} parent=55 // pred_check_branch
                %350 = sbr.rel target = $region82
              $region81: #{tpu_custom_call.1} parent=55 // pred_region
                _
              $region82: #{tpu_custom_call.1} parent=55 // pred_fallthru
                _
            $region56: #{tpu_custom_call.1} parent=51 // pred_fallthru
              _
            // Predicated region
            $region57: #{tpu_custom_call.1} parent=51 // pred_check
              _
            $region58: #{tpu_custom_call.1} parent=51 // pred_check_branch
              %297 = sbr.rel target = $region60
            $region59: #{tpu_custom_call.1} parent=51 // pred_region
              loop: start=0, step=1, limit=1
              $region61: #{tpu_custom_call.1} parent=59 // loop_pre_header
                _
              $region62: #{tpu_custom_call.1} parent=59 // loop_header
                %s300 = sphi 0, %s304
                %p301 = scmp.ge.s32.totalorder %s300, 1
                %s305 = sphi %s291, %s291
                %s306 = sphi %s286, %s286
              $region63: #{tpu_custom_call.1} parent=59 // loop_header_branch
                %303 = sbr.rel (%p301) target = $region67
              $region64: #{tpu_custom_call.1} parent=59 // loop_body
                %v307 = vld [vmem:[%s305] sm:$0xff]
                %308 = vst [vmem:[%s306] sm:$0xff] %v307
                %v309 = vld [vmem:[%s305 + $0x10] sm:$0xff]
                %310 = vst [vmem:[%s306 + $0x8] sm:$0xff] %v309
                %v311 = vld [vmem:[%s305 + $0x20] sm:$0xff]
                %312 = vst [vmem:[%s306 + $0x10] sm:$0xff] %v311
                %v313 = vld [vmem:[%s305 + $0x30] sm:$0xff]
                %314 = vst [vmem:[%s306 + $0x18] sm:$0xff] %v313
                %v315 = vld [vmem:[%s305 + $0x40] sm:$0xff]
                %316 = vst [vmem:[%s306 + $0x20] sm:$0xff] %v315
                %v317 = vld [vmem:[%s305 + $0x50] sm:$0xff]
                %318 = vst [vmem:[%s306 + $0x28] sm:$0xff] %v317
                %v319 = vld [vmem:[%s305 + $0x60] sm:$0xff]
                %320 = vst [vmem:[%s306 + $0x30] sm:$0xff] %v319
                %v321 = vld [vmem:[%s305 + $0x70] sm:$0xff]
                %322 = vst [vmem:[%s306 + $0x38] sm:$0xff] %v321
              $region65: #{tpu_custom_call.1} parent=59 // loop_footer
                %s304 = sadd.s32 1, %s300
              $region66: #{tpu_custom_call.1} parent=59 // loop_footer_branch
                %299 = sbr.rel target = $region62
              $region67: #{tpu_custom_call.1} parent=59 // loop_exit
                _
            $region60: #{tpu_custom_call.1} parent=51 // pred_fallthru
              _
          $region52: #{tpu_custom_call.1} parent=47 // pred_fallthru
            _
          %351 = vnop
        $region48: #{tpu_custom_call.1} parent=43 // pred_fallthru
          _
      $region44: #{tpu_custom_call.1} parent=5 // pred_fallthru
        _
      %p352 = scmp.le.s32.totalorder 1, %s17
      %p353 = scmp.lt.s32.totalorder %s17, 5
      %p354 = pnand %p352, %p353
      %p355 = pneg %p354
      // Predicated region
      $region83: #{tpu_custom_call.1} parent=5 // pred_check
        _
      $region84: #{tpu_custom_call.1} parent=5 // pred_check_branch
        %357 = sbr.rel (%p354) target = $region86
      $region85: #{tpu_custom_call.1} parent=5 // pred_region
        %s358 = ssub.s32 %s17, 1
        %s359 = sand.u32 %s44, 1
        %s360 = sand.u32 %s44, 1
        %s361 = smul.addr %s360, 64
        %s362 = scalar_lea.vmem [#allocation7], %s361
        // Predicated region
        $region87: #{tpu_custom_call.1} parent=85 // pred_check
          %p363 = pneg %p57
        $region88: #{tpu_custom_call.1} parent=85 // pred_check_branch
          %365 = sbr.rel (%p363) target = $region90
        $region89: #{tpu_custom_call.1} parent=85 // pred_region
          _
        $region90: #{tpu_custom_call.1} parent=85 // pred_fallthru
          _
        // Predicated region
        $region91: #{tpu_custom_call.1} parent=85 // pred_check
          %p366 = pneg %p141
        $region92: #{tpu_custom_call.1} parent=85 // pred_check_branch
          %368 = sbr.rel (%p366) target = $region94
        $region93: #{tpu_custom_call.1} parent=85 // pred_region
          %369 = dma.done [#allocation9], 8192
        $region94: #{tpu_custom_call.1} parent=85 // pred_fallthru
          _
        %s370 = sand.u32 %s44, 1
        %s371 = sand.u32 %s44, 1
        %s372 = smul.addr %s371, 64
        %s373 = scalar_lea.vmem [#allocation7], %s372
        %p374 = pneg %p57
        %p375 = pneg %p54
        %p376 = pneg %p78
        %p377 = pneg %p75
        %p378 = pneg %p99
        %p379 = pneg %p96
        %p380 = pneg %p120
        %p381 = pneg %p117
        %p382 = pneg %p141
        %p383 = pneg %p138
        %p384 = pneg %p162
        %p385 = pneg %p159
        %p386 = pneg %p183
        %p387 = pneg %p180
        %p388 = pneg %p204
        %p389 = pneg %p201
        %p390 = pneg %p230
        %p391 = pneg %p227
        %p392 = scmp.lt.s32.totalorder %s26, 1
        %s393 = scalar_select %p392, %s26, 1
        %s394 = smul.addr %s393, 8
        %s395 = scalar_lea.vmem %s8, %s394
        %s396 = smul.u32 8, %s26
        %p397 = scmp.lt.s32.totalorder %s26, 1
        %s398 = scalar_select %p397, %s26, 1
        %s399 = smul.addr %s398, 8
        %s400 = scalar_lea.vmem %s8, %s399
        %p402 = scmp.eq.s32.totalorder %s27, 0
        // Predicated region
        $region95: #{tpu_custom_call.1} parent=85 // pred_check
          %p403 = pneg %p402
        $region96: #{tpu_custom_call.1} parent=85 // pred_check_branch
          %405 = sbr.rel (%p403) target = $region98
        $region97: #{tpu_custom_call.1} parent=85 // pred_region
          %406 = vst [vmem:[#allocation2] sm:$0xff] 0.0
          %407 = vst [vmem:[#allocation3] sm:$0xff] 0.0
          %408 = vst [vmem:[#allocation4] sm:$0xff] 0.0
          %409 = vst [vmem:[#allocation5] sm:$0xff] 0.0
        $region98: #{tpu_custom_call.1} parent=85 // pred_fallthru
          _
        %v410 = vld [vmem:[%s362] sm:$0xff]
        %v411 = vld [vmem:[%s362 + $0x8] sm:$0xff]
        %v412 = vld [vmem:[%s362 + $0x10] sm:$0xff]
        %v413 = vld [vmem:[%s362 + $0x18] sm:$0xff]
        %v414 = vld [vmem:[%s362 + $0x20] sm:$0xff]
        %v415 = vld [vmem:[%s362 + $0x28] sm:$0xff]
        %v416 = vld [vmem:[%s362 + $0x30] sm:$0xff]
        %v417 = vld [vmem:[%s362 + $0x38] sm:$0xff]
        %v418 = vpack.c.bf16 %v411, %v410
        %v419 = vpack.c.bf16 %v413, %v412
        %v420 = vpack.c.bf16 %v415, %v414
        %v421 = vpack.c.bf16 %v417, %v416
        %v422 = vld [vmem:[%s1] sm:$0xff]
        %v423 = vld [vmem:[%s1 + $0x8] sm:$0xff]
        %v424 = vld [vmem:[%s3] sm:$0xf]
        %v426 = vlaneseq
        %v427 = vshrl.u32 %v426, 7
        %v428 = vsub.s32 0, %v427
        %v429 = vrot.slane %v424, %v428
        %v430 = vlaneseq
        %v431 = vshrl.u32 %v430, 7
        %v432 = vsub.s32 1, %v431
        %v433 = vrot.slane %v424, %v432
        %v434 = vlaneseq
        %v435 = vshrl.u32 %v434, 7
        %v436 = vsub.s32 2, %v435
        %v437 = vrot.slane %v424, %v436
        %v438 = vlaneseq
        %v439 = vshrl.u32 %v438, 7
        %v440 = vsub.s32 3, %v439
        %v441 = vrot.slane %v424, %v440
        %v448 = vunpack.c.l.b16 %v422
        %v449 = vunpack.c.h.b16 %v422
        %v450 = vunpack.c.l.b16 %v423
        %v451 = vunpack.c.h.b16 %v423
        %v452 = vpack.c.b16 %v448, %v448
        %v453 = vpack.c.b16 %v449, %v449
        %v454 = vpack.c.b16 %v450, %v450
        %v455 = vpack.c.b16 %v451, %v451
        %vm456 = vcmask 64512
        %v458 = vsel %vm456, %v418, 0
        %v461 = vsel %vm456, %v419, 0
        %v464 = vsel %vm456, %v420, 0
        %v467 = vsel %vm456, %v421, 0
        %vm469 = vcmask 1043456
        %v471 = vsel %vm469, %v452, 0
        %v474 = vsel %vm469, %v453, 0
        %v477 = vsel %vm469, %v454, 0
        %v480 = vsel %vm469, %v455, 0
        %482 = vmatprep.subr.bf16.mxu0 %v474
        %483 = vmatpush1.bf16.msra.mxu0 %v471
        %484 = vmatprep.subr.bf16.mxu0 0
        %485 = vmatpush1.bf16.msra.mxu0 0
        %486 = vmatprep.subr.bf16.mxu0 0
        %487 = vmatpush1.bf16.msra.mxu0 0
        %488 = vmatprep.subr.bf16.mxu0 0
        %489 = vmatpush1.bf16.msra.mxu0 0
        %490 = vmatprep.subr.bf16.mxu0 0
        %491 = vmatpush1.bf16.msra.mxu0 0
        %492 = vmatprep.subr.bf16.mxu0 0
        %493 = vmatpush1.bf16.msra.mxu0 0
        %494 = vmatprep.subr.bf16.mxu0 0
        %495 = vmatpush1.bf16.msra.mxu0 0
        %496 = vmatprep.subr.bf16.mxu0 0
        %497 = vmatpush1.bf16.msra.mxu0 0
        %498 = vmatprep.subr.bf16.mxu0 0
        %499 = vmatpush1.bf16.msra.mxu0 0
        %500 = vmatprep.subr.bf16.mxu0 0
        %501 = vmatpush1.bf16.msra.mxu0 0
        %502 = vmatprep.subr.bf16.mxu0 0
        %503 = vmatpush1.bf16.msra.mxu0 0
        %504 = vmatprep.subr.bf16.mxu0 0
        %505 = vmatpush1.bf16.msra.mxu0 0
        %506 = vmatprep.subr.bf16.mxu0 0
        %507 = vmatpush1.bf16.msra.mxu0 0
        %508 = vmatprep.subr.bf16.mxu0 0
        %509 = vmatpush1.bf16.msra.mxu0 0
        %510 = vmatprep.subr.bf16.mxu0 0
        %511 = vmatpush1.bf16.msra.mxu0 0
        %512 = vmatprep.subr.bf16.mxu0 0
        %513 = vmatpush1.bf16.msra.mxu0 0
        %514 = vmatprep.mubr.bf16.mxu0 0
        %515 = vmatmul.mubr.bf16.gmra.mrb[0].mxu0 %v458
        %v516 = vpop.f32.mrb[0].mxu0
        %v517 = vadd.f32 %v429, %v516
        %v518 = vpop.f32.mrb[0].mxu0
        %v519 = vadd.f32 %v433, %v518
        %v520 = vpop.f32.mrb[0].mxu0
        %v521 = vadd.f32 %v429, %v520
        %v522 = vpop.f32.mrb[0].mxu0
        %v523 = vadd.f32 %v433, %v522
        %524 = vmatprep.mubr.bf16.mxu0 0
        %525 = vmatmul.mubr.bf16.gmra.mrb[0].mxu0 %v461
        %v526 = vpop.f32.mrb[0].mxu0
        %v527 = vadd.f32 %v429, %v526
        %v528 = vpop.f32.mrb[0].mxu0
        %v529 = vadd.f32 %v433, %v528
        %v530 = vpop.f32.mrb[0].mxu0
        %v531 = vadd.f32 %v429, %v530
        %v532 = vpop.f32.mrb[0].mxu0
        %v533 = vadd.f32 %v433, %v532
        %534 = vmatprep.mubr.bf16.mxu0 0
        %535 = vmatmul.mubr.bf16.gmra.mrb[0].mxu0 %v464
        %v536 = vpop.f32.mrb[0].mxu0
        %v537 = vadd.f32 %v429, %v536
        %v538 = vpop.f32.mrb[0].mxu0
        %v539 = vadd.f32 %v433, %v538
        %v540 = vpop.f32.mrb[0].mxu0
        %v541 = vadd.f32 %v429, %v540
        %v542 = vpop.f32.mrb[0].mxu0
        %v543 = vadd.f32 %v433, %v542
        %544 = vmatprep.mubr.bf16.mxu0 0
        %545 = vmatmul.mubr.bf16.gmra.mrb[0].mxu0 %v467
        %v546 = vpop.f32.mrb[0].mxu0
        %v547 = vadd.f32 %v429, %v546
        %v548 = vpop.f32.mrb[0].mxu0
        %v549 = vadd.f32 %v433, %v548
        %v550 = vpop.f32.mrb[0].mxu0
        %v551 = vadd.f32 %v429, %v550
        %v552 = vpop.f32.mrb[0].mxu0
        %v553 = vadd.f32 %v433, %v552
        %554 = vdwg.mxu0
        %555 = vmatprep.subr.bf16.mxu0 %v480
        %556 = vmatpush1.bf16.msra.mxu0 %v477
        %557 = vmatprep.subr.bf16.mxu0 0
        %558 = vmatpush1.bf16.msra.mxu0 0
        %559 = vmatprep.subr.bf16.mxu0 0
        %560 = vmatpush1.bf16.msra.mxu0 0
        %561 = vmatprep.subr.bf16.mxu0 0
        %562 = vmatpush1.bf16.msra.mxu0 0
        %563 = vmatprep.subr.bf16.mxu0 0
        %564 = vmatpush1.bf16.msra.mxu0 0
        %565 = vmatprep.subr.bf16.mxu0 0
        %566 = vmatpush1.bf16.msra.mxu0 0
        %567 = vmatprep.subr.bf16.mxu0 0
        %568 = vmatpush1.bf16.msra.mxu0 0
        %569 = vmatprep.subr.bf16.mxu0 0
        %570 = vmatpush1.bf16.msra.mxu0 0
        %571 = vmatprep.subr.bf16.mxu0 0
        %572 = vmatpush1.bf16.msra.mxu0 0
        %573 = vmatprep.subr.bf16.mxu0 0
        %574 = vmatpush1.bf16.msra.mxu0 0
        %575 = vmatprep.subr.bf16.mxu0 0
        %576 = vmatpush1.bf16.msra.mxu0 0
        %577 = vmatprep.subr.bf16.mxu0 0
        %578 = vmatpush1.bf16.msra.mxu0 0
        %579 = vmatprep.subr.bf16.mxu0 0
        %580 = vmatpush1.bf16.msra.mxu0 0
        %581 = vmatprep.subr.bf16.mxu0 0
        %582 = vmatpush1.bf16.msra.mxu0 0
        %583 = vmatprep.subr.bf16.mxu0 0
        %584 = vmatpush1.bf16.msra.mxu0 0
        %585 = vmatprep.subr.bf16.mxu0 0
        %586 = vmatpush1.bf16.msra.mxu0 0
        %587 = vmatprep.mubr.bf16.mxu0 0
        %588 = vmatmul.mubr.bf16.gmra.mrb[0].mxu0 %v458
        %v589 = vpop.f32.mrb[0].mxu0
        %v590 = vadd.f32 %v437, %v589
        %v591 = vpop.f32.mrb[0].mxu0
        %v592 = vadd.f32 %v441, %v591
        %v593 = vpop.f32.mrb[0].mxu0
        %v594 = vadd.f32 %v437, %v593
        %v595 = vpop.f32.mrb[0].mxu0
        %v596 = vadd.f32 %v441, %v595
        %597 = vmatprep.mubr.bf16.mxu0 0
        %598 = vmatmul.mubr.bf16.gmra.mrb[0].mxu0 %v461
        %v599 = vpop.f32.mrb[0].mxu0
        %v600 = vadd.f32 %v437, %v599
        %v601 = vpop.f32.mrb[0].mxu0
        %v602 = vadd.f32 %v441, %v601
        %v603 = vpop.f32.mrb[0].mxu0
        %v604 = vadd.f32 %v437, %v603
        %v605 = vpop.f32.mrb[0].mxu0
        %v606 = vadd.f32 %v441, %v605
        %607 = vmatprep.mubr.bf16.mxu0 0
        %608 = vmatmul.mubr.bf16.gmra.mrb[0].mxu0 %v464
        %v609 = vpop.f32.mrb[0].mxu0
        %v610 = vadd.f32 %v437, %v609
        %v611 = vpop.f32.mrb[0].mxu0
        %v612 = vadd.f32 %v441, %v611
        %v613 = vpop.f32.mrb[0].mxu0
        %v614 = vadd.f32 %v437, %v613
        %v615 = vpop.f32.mrb[0].mxu0
        %v616 = vadd.f32 %v441, %v615
        %617 = vmatprep.mubr.bf16.mxu0 0
        %618 = vmatmul.mubr.bf16.gmra.mrb[0].mxu0 %v467
        %v619 = vpop.f32.mrb[0].mxu0
        %v620 = vadd.f32 %v437, %v619
        %v621 = vpop.f32.mrb[0].mxu0
        %v622 = vadd.f32 %v441, %v621
        %v623 = vpop.f32.mrb[0].mxu0
        %v624 = vadd.f32 %v437, %v623
        %v625 = vpop.f32.mrb[0].mxu0
        %v626 = vadd.f32 %v441, %v625
        %627 = vdwg.mxu0
        %v628 = vld [vmem:[%s2] sm:$0xff]
        %v629 = vld [vmem:[%s2 + $0x8] sm:$0xff]
        %v630 = vld [vmem:[%s2 + $0x10] sm:$0xff]
        %v631 = vld [vmem:[%s2 + $0x18] sm:$0xff]
        %v632 = vld [vmem:[%s2 + $0x20] sm:$0xff]
        %v633 = vld [vmem:[%s2 + $0x28] sm:$0xff]
        %v634 = vld [vmem:[%s2 + $0x30] sm:$0xff]
        %v635 = vld [vmem:[%s2 + $0x38] sm:$0xff]
        %v636 = vld [vmem:[%s2 + $0x40] sm:$0xff]
        %v637 = vld [vmem:[%s2 + $0x48] sm:$0xff]
        %v638 = vld [vmem:[%s2 + $0x50] sm:$0xff]
        %v639 = vld [vmem:[%s2 + $0x58] sm:$0xff]
        %v640 = vld [vmem:[%s2 + $0x60] sm:$0xff]
        %v641 = vld [vmem:[%s2 + $0x68] sm:$0xff]
        %v642 = vld [vmem:[%s2 + $0x70] sm:$0xff]
        %v643 = vld [vmem:[%s2 + $0x78] sm:$0xff]
        %v644 = vld [vmem:[%s2 + $0x80] sm:$0xff]
        %v645 = vld [vmem:[%s2 + $0x88] sm:$0xff]
        %v646 = vld [vmem:[%s2 + $0x90] sm:$0xff]
        %v647 = vld [vmem:[%s2 + $0x98] sm:$0xff]
        %v648 = vld [vmem:[%s2 + $0xa0] sm:$0xff]
        %v649 = vld [vmem:[%s2 + $0xa8] sm:$0xff]
        %v650 = vld [vmem:[%s2 + $0xb0] sm:$0xff]
        %v651 = vld [vmem:[%s2 + $0xb8] sm:$0xff]
        %v652 = vld [vmem:[%s2 + $0xc0] sm:$0xff]
        %v653 = vld [vmem:[%s2 + $0xc8] sm:$0xff]
        %v654 = vld [vmem:[%s2 + $0xd0] sm:$0xff]
        %v655 = vld [vmem:[%s2 + $0xd8] sm:$0xff]
        %v656 = vld [vmem:[%s2 + $0xe0] sm:$0xff]
        %v657 = vld [vmem:[%s2 + $0xe8] sm:$0xff]
        %v658 = vld [vmem:[%s2 + $0xf0] sm:$0xff]
        %v659 = vld [vmem:[%s2 + $0xf8] sm:$0xff]
        %v660 = vld [vmem:[#allocation8] sm:$0xff]
        %v661 = vld [vmem:[#allocation8 + $0x8] sm:$0xff]
        %v662 = vld [vmem:[#allocation8 + $0x10] sm:$0xff]
        %v663 = vld [vmem:[#allocation8 + $0x18] sm:$0xff]
        %v664 = vld [vmem:[#allocation8 + $0x20] sm:$0xff]
        %v665 = vld [vmem:[#allocation8 + $0x28] sm:$0xff]
        %v666 = vld [vmem:[#allocation8 + $0x30] sm:$0xff]
        %v667 = vld [vmem:[#allocation8 + $0x38] sm:$0xff]
        %v668 = vld [vmem:[#allocation8 + $0x40] sm:$0xff]
        %v669 = vld [vmem:[#allocation8 + $0x48] sm:$0xff]
        %v670 = vld [vmem:[#allocation8 + $0x50] sm:$0xff]
        %v671 = vld [vmem:[#allocation8 + $0x58] sm:$0xff]
        %v672 = vld [vmem:[#allocation8 + $0x60] sm:$0xff]
        %v673 = vld [vmem:[#allocation8 + $0x68] sm:$0xff]
        %v674 = vld [vmem:[#allocation8 + $0x70] sm:$0xff]
        %v675 = vld [vmem:[#allocation8 + $0x78] sm:$0xff]
        %v676 = vld [vmem:[#allocation8 + $0x80] sm:$0xff]
        %v677 = vld [vmem:[#allocation8 + $0x88] sm:$0xff]
        %v678 = vld [vmem:[#allocation8 + $0x90] sm:$0xff]
        %v679 = vld [vmem:[#allocation8 + $0x98] sm:$0xff]
        %v680 = vld [vmem:[#allocation8 + $0xa0] sm:$0xff]
        %v681 = vld [vmem:[#allocation8 + $0xa8] sm:$0xff]
        %v682 = vld [vmem:[#allocation8 + $0xb0] sm:$0xff]
        %v683 = vld [vmem:[#allocation8 + $0xb8] sm:$0xff]
        %v684 = vld [vmem:[#allocation8 + $0xc0] sm:$0xff]
        %v685 = vld [vmem:[#allocation8 + $0xc8] sm:$0xff]
        %v686 = vld [vmem:[#allocation8 + $0xd0] sm:$0xff]
        %v687 = vld [vmem:[#allocation8 + $0xd8] sm:$0xff]
        %v688 = vld [vmem:[#allocation8 + $0xe0] sm:$0xff]
        %v689 = vld [vmem:[#allocation8 + $0xe8] sm:$0xff]
        %v690 = vld [vmem:[#allocation8 + $0xf0] sm:$0xff]
        %v691 = vld [vmem:[#allocation8 + $0xf8] sm:$0xff]
        %v692 = vld [vmem:[#allocation8 + $0x100] sm:$0xff]
        %v693 = vld [vmem:[#allocation8 + $0x108] sm:$0xff]
        %v694 = vld [vmem:[#allocation8 + $0x110] sm:$0xff]
        %v695 = vld [vmem:[#allocation8 + $0x118] sm:$0xff]
        %v696 = vld [vmem:[#allocation8 + $0x120] sm:$0xff]
        %v697 = vld [vmem:[#allocation8 + $0x128] sm:$0xff]
        %v698 = vld [vmem:[#allocation8 + $0x130] sm:$0xff]
        %v699 = vld [vmem:[#allocation8 + $0x138] sm:$0xff]
        %v700 = vld [vmem:[#allocation8 + $0x140] sm:$0xff]
        %v701 = vld [vmem:[#allocation8 + $0x148] sm:$0xff]
        %v702 = vld [vmem:[#allocation8 + $0x150] sm:$0xff]
        %v703 = vld [vmem:[#allocation8 + $0x158] sm:$0xff]
        %v704 = vld [vmem:[#allocation8 + $0x160] sm:$0xff]
        %v705 = vld [vmem:[#allocation8 + $0x168] sm:$0xff]
        %v706 = vld [vmem:[#allocation8 + $0x170] sm:$0xff]
        %v707 = vld [vmem:[#allocation8 + $0x178] sm:$0xff]
        %v708 = vld [vmem:[#allocation8 + $0x180] sm:$0xff]
        %v709 = vld [vmem:[#allocation8 + $0x188] sm:$0xff]
        %v710 = vld [vmem:[#allocation8 + $0x190] sm:$0xff]
        %v711 = vld [vmem:[#allocation8 + $0x198] sm:$0xff]
        %v712 = vld [vmem:[#allocation8 + $0x1a0] sm:$0xff]
        %v713 = vld [vmem:[#allocation8 + $0x1a8] sm:$0xff]
        %v714 = vld [vmem:[#allocation8 + $0x1b0] sm:$0xff]
        %v715 = vld [vmem:[#allocation8 + $0x1b8] sm:$0xff]
        %v716 = vld [vmem:[#allocation8 + $0x1c0] sm:$0xff]
        %v717 = vld [vmem:[#allocation8 + $0x1c8] sm:$0xff]
        %v718 = vld [vmem:[#allocation8 + $0x1d0] sm:$0xff]
        %v719 = vld [vmem:[#allocation8 + $0x1d8] sm:$0xff]
        %v720 = vld [vmem:[#allocation8 + $0x1e0] sm:$0xff]
        %v721 = vld [vmem:[#allocation8 + $0x1e8] sm:$0xff]
        %v722 = vld [vmem:[#allocation8 + $0x1f0] sm:$0xff]
        %v723 = vld [vmem:[#allocation8 + $0x1f8] sm:$0xff]
        %v724 = vld [vmem:[%s5] sm:$0xf]
        %v726 = vlaneseq
        %v727 = vshrl.u32 %v726, 7
        %v728 = vsub.s32 0, %v727
        %v729 = vrot.slane %v724, %v728
        %v730 = vlaneseq
        %v731 = vshrl.u32 %v730, 7
        %v732 = vsub.s32 1, %v731
        %v733 = vrot.slane %v724, %v732
        %v734 = vlaneseq
        %v735 = vshrl.u32 %v734, 7
        %v736 = vsub.s32 2, %v735
        %v737 = vrot.slane %v724, %v736
        %v738 = vlaneseq
        %v739 = vshrl.u32 %v738, 7
        %v740 = vsub.s32 3, %v739
        %v741 = vrot.slane %v724, %v740
        %v746 = vld [vmem:[#allocation2] sm:$0xff]
        %v747 = vld [vmem:[#allocation3] sm:$0xff]
        %v748 = vld [vmem:[#allocation4] sm:$0xff]
        %v749 = vld [vmem:[#allocation5] sm:$0xff]
        %v750 = vpack.c.bf16 %v746, %v746
        %v783 = vunpack.c.l.b16 %v628
        %v784 = vunpack.c.h.b16 %v628
        %v785 = vunpack.c.l.b16 %v629
        %v786 = vunpack.c.h.b16 %v629
        %v787 = vunpack.c.l.b16 %v630
        %v788 = vunpack.c.h.b16 %v630
        %v789 = vunpack.c.l.b16 %v631
        %v790 = vunpack.c.h.b16 %v631
        %v791 = vunpack.c.l.b16 %v632
        %v792 = vunpack.c.h.b16 %v632
        %v793 = vunpack.c.l.b16 %v633
        %v794 = vunpack.c.h.b16 %v633
        %v795 = vunpack.c.l.b16 %v634
        %v796 = vunpack.c.h.b16 %v634
        %v797 = vunpack.c.l.b16 %v635
        %v798 = vunpack.c.h.b16 %v635
        %v799 = vunpack.c.l.b16 %v636
        %v800 = vunpack.c.h.b16 %v636
        %v801 = vunpack.c.l.b16 %v637
        %v802 = vunpack.c.h.b16 %v637
        %v803 = vunpack.c.l.b16 %v638
        %v804 = vunpack.c.h.b16 %v638
        %v805 = vunpack.c.l.b16 %v639
        %v806 = vunpack.c.h.b16 %v639
        %v807 = vunpack.c.l.b16 %v640
        %v808 = vunpack.c.h.b16 %v640
        %v809 = vunpack.c.l.b16 %v641
        %v810 = vunpack.c.h.b16 %v641
        %v811 = vunpack.c.l.b16 %v642
        %v812 = vunpack.c.h.b16 %v642
        %v813 = vunpack.c.l.b16 %v643
        %v814 = vunpack.c.h.b16 %v643
        %v815 = vunpack.c.l.b16 %v644
        %v816 = vunpack.c.h.b16 %v644
        %v817 = vunpack.c.l.b16 %v645
        %v818 = vunpack.c.h.b16 %v645
        %v819 = vunpack.c.l.b16 %v646
        %v820 = vunpack.c.h.b16 %v646
        %v821 = vunpack.c.l.b16 %v647
        %v822 = vunpack.c.h.b16 %v647
        %v823 = vunpack.c.l.b16 %v648
        %v824 = vunpack.c.h.b16 %v648
        %v825 = vunpack.c.l.b16 %v649
        %v826 = vunpack.c.h.b16 %v649
        %v827 = vunpack.c.l.b16 %v650
        %v828 = vunpack.c.h.b16 %v650
        %v829 = vunpack.c.l.b16 %v651
        %v830 = vunpack.c.h.b16 %v651
        %v831 = vunpack.c.l.b16 %v652
        %v832 = vunpack.c.h.b16 %v652
        %v833 = vunpack.c.l.b16 %v653
        %v834 = vunpack.c.h.b16 %v653
        %v835 = vunpack.c.l.b16 %v654
        %v836 = vunpack.c.h.b16 %v654
        %v837 = vunpack.c.l.b16 %v655
        %v838 = vunpack.c.h.b16 %v655
        %v839 = vunpack.c.l.b16 %v656
        %v840 = vunpack.c.h.b16 %v656
        %v841 = vunpack.c.l.b16 %v657
        %v842 = vunpack.c.h.b16 %v657
        %v843 = vunpack.c.l.b16 %v658
        %v844 = vunpack.c.h.b16 %v658
        %v845 = vunpack.c.l.b16 %v659
        %v846 = vunpack.c.h.b16 %v659
        %v847 = vpack.c.b16 %v787, %v783
        %v848 = vpack.c.b16 %v788, %v784
        %v849 = vpack.c.b16 %v789, %v785
        %v850 = vpack.c.b16 %v790, %v786
        %v851 = vpack.c.b16 %v795, %v791
        %v852 = vpack.c.b16 %v796, %v792
        %v853 = vpack.c.b16 %v797, %v793
        %v854 = vpack.c.b16 %v798, %v794
        %v855 = vpack.c.b16 %v803, %v799
        %v856 = vpack.c.b16 %v804, %v800
        %v857 = vpack.c.b16 %v805, %v801
        %v858 = vpack.c.b16 %v806, %v802
        %v859 = vpack.c.b16 %v811, %v807
        %v860 = vpack.c.b16 %v812, %v808
        %v861 = vpack.c.b16 %v813, %v809
        %v862 = vpack.c.b16 %v814, %v810
        %v863 = vpack.c.b16 %v819, %v815
        %v864 = vpack.c.b16 %v820, %v816
        %v865 = vpack.c.b16 %v821, %v817
        %v866 = vpack.c.b16 %v822, %v818
        %v867 = vpack.c.b16 %v827, %v823
        %v868 = vpack.c.b16 %v828, %v824
        %v869 = vpack.c.b16 %v829, %v825
        %v870 = vpack.c.b16 %v830, %v826
        %v871 = vpack.c.b16 %v835, %v831
        %v872 = vpack.c.b16 %v836, %v832
        %v873 = vpack.c.b16 %v837, %v833
        %v874 = vpack.c.b16 %v838, %v834
        %v875 = vpack.c.b16 %v843, %v839
        %v876 = vpack.c.b16 %v844, %v840
        %v877 = vpack.c.b16 %v845, %v841
        %v878 = vpack.c.b16 %v846, %v842
        %911 = vmatprep.subr.bf16.mxu0 %v848
        %912 = vmatpush1.bf16.msra.mxu0 %v847
        %913 = vmatprep.subr.bf16.mxu0 %v852
        %914 = vmatpush1.bf16.msra.mxu0 %v851
        %915 = vmatprep.subr.bf16.mxu0 %v856
        %916 = vmatpush1.bf16.msra.mxu0 %v855
        %917 = vmatprep.subr.bf16.mxu0 %v860
        %918 = vmatpush1.bf16.msra.mxu0 %v859
        %919 = vmatprep.subr.bf16.mxu0 %v864
        %920 = vmatpush1.bf16.msra.mxu0 %v863
        %921 = vmatprep.subr.bf16.mxu0 %v868
        %922 = vmatpush1.bf16.msra.mxu0 %v867
        %923 = vmatprep.subr.bf16.mxu0 %v872
        %924 = vmatpush1.bf16.msra.mxu0 %v871
        %925 = vmatprep.subr.bf16.mxu0 %v876
        %926 = vmatpush1.bf16.msra.mxu0 %v875
        %927 = vmatprep.subr.bf16.mxu0 0
        %928 = vmatpush1.bf16.msra.mxu0 0
        %929 = vmatprep.subr.bf16.mxu0 0
        %930 = vmatpush1.bf16.msra.mxu0 0
        %931 = vmatprep.subr.bf16.mxu0 0
        %932 = vmatpush1.bf16.msra.mxu0 0
        %933 = vmatprep.subr.bf16.mxu0 0
        %934 = vmatpush1.bf16.msra.mxu0 0
        %935 = vmatprep.subr.bf16.mxu0 0
        %936 = vmatpush1.bf16.msra.mxu0 0
        %937 = vmatprep.subr.bf16.mxu0 0
        %938 = vmatpush1.bf16.msra.mxu0 0
        %939 = vmatprep.subr.bf16.mxu0 0
        %940 = vmatpush1.bf16.msra.mxu0 0
        %941 = vmatprep.subr.bf16.mxu0 0
        %942 = vmatpush1.bf16.msra.mxu0 0
        %943 = vmatprep.mubr.bf16.mxu0 0
        %944 = vmatmul.mubr.bf16.gmra.mrb[0].mxu0 %v750
        %v945 = vpop.f32.mrb[0].mxu0
        %v946 = vadd.f32 0.0, %v945
        %v947 = vpop.f32.mrb[0].mxu0
        %v948 = vadd.f32 0.0, %v947
        %v949 = vpop.f32.mrb[0].mxu0
        %v950 = vpop.f32.mrb[0].mxu0
        %951 = vdwg.mxu0
        %952 = vmatprep.subr.bf16.mxu0 %v850
        %953 = vmatpush1.bf16.msra.mxu0 %v849
        %954 = vmatprep.subr.bf16.mxu0 %v854
        %955 = vmatpush1.bf16.msra.mxu0 %v853
        %956 = vmatprep.subr.bf16.mxu0 %v858
        %957 = vmatpush1.bf16.msra.mxu0 %v857
        %958 = vmatprep.subr.bf16.mxu0 %v862
        %959 = vmatpush1.bf16.msra.mxu0 %v861
        %960 = vmatprep.subr.bf16.mxu0 %v866
        %961 = vmatpush1.bf16.msra.mxu0 %v865
        %962 = vmatprep.subr.bf16.mxu0 %v870
        %963 = vmatpush1.bf16.msra.mxu0 %v869
        %964 = vmatprep.subr.bf16.mxu0 %v874
        %965 = vmatpush1.bf16.msra.mxu0 %v873
        %966 = vmatprep.subr.bf16.mxu0 %v878
        %967 = vmatpush1.bf16.msra.mxu0 %v877
        %968 = vmatprep.subr.bf16.mxu0 0
        %969 = vmatpush1.bf16.msra.mxu0 0
        %970 = vmatprep.subr.bf16.mxu0 0
        %971 = vmatpush1.bf16.msra.mxu0 0
        %972 = vmatprep.subr.bf16.mxu0 0
        %973 = vmatpush1.bf16.msra.mxu0 0
        %974 = vmatprep.subr.bf16.mxu0 0
        %975 = vmatpush1.bf16.msra.mxu0 0
        %976 = vmatprep.subr.bf16.mxu0 0
        %977 = vmatpush1.bf16.msra.mxu0 0
        %978 = vmatprep.subr.bf16.mxu0 0
        %979 = vmatpush1.bf16.msra.mxu0 0
        %980 = vmatprep.subr.bf16.mxu0 0
        %981 = vmatpush1.bf16.msra.mxu0 0
        %982 = vmatprep.subr.bf16.mxu0 0
        %983 = vmatpush1.bf16.msra.mxu0 0
        %984 = vmatprep.mubr.bf16.mxu0 0
        %985 = vmatmul.mubr.bf16.gmra.mrb[0].mxu0 %v750
        %v986 = vpop.f32.mrb[0].mxu0
        %v987 = vadd.f32 0.0, %v986
        %v988 = vpop.f32.mrb[0].mxu0
        %v989 = vadd.f32 0.0, %v988
        %v990 = vpop.f32.mrb[0].mxu0
        %v991 = vpop.f32.mrb[0].mxu0
        %992 = vdwg.mxu0
        %v997 = vrot.slane %v946, 1
        %v998 = vrot.slane %v948, 1
        %v999 = vrot.slane %v987, 1
        %v1000 = vrot.slane %v989, 1
        %v1001 = vrot.slane %v946, 2
        %v1002 = vrot.slane %v948, 2
        %v1003 = vrot.slane %v987, 2
        %v1004 = vrot.slane %v989, 2
        %v1005 = vrot.slane %v946, 3
        %v1006 = vrot.slane %v948, 3
        %v1007 = vrot.slane %v987, 3
        %v1008 = vrot.slane %v989, 3
        %v1009 = vrot.slane %v946, 4
        %v1010 = vrot.slane %v948, 4
        %v1011 = vrot.slane %v987, 4
        %v1012 = vrot.slane %v989, 4
        %v1013 = vrot.slane %v946, 5
        %v1014 = vrot.slane %v948, 5
        %v1015 = vrot.slane %v987, 5
        %v1016 = vrot.slane %v989, 5
        %v1017 = vrot.slane %v946, 6
        %v1018 = vrot.slane %v948, 6
        %v1019 = vrot.slane %v987, 6
        %v1020 = vrot.slane %v989, 6
        %v1021 = vrot.slane %v946, 7
        %v1022 = vrot.slane %v948, 7
        %v1023 = vrot.slane %v987, 7
        %v1024 = vrot.slane %v989, 7
        %v1057 = vadd.f32 %v517, %v946
        %v1058 = vadd.f32 %v519, %v948
        %v1059 = vadd.f32 %v590, %v987
        %v1060 = vadd.f32 %v592, %v989
        %v1061 = vadd.f32 %v521, %v997
        %v1062 = vadd.f32 %v523, %v998
        %v1063 = vadd.f32 %v594, %v999
        %v1064 = vadd.f32 %v596, %v1000
        %v1065 = vadd.f32 %v527, %v1001
        %v1066 = vadd.f32 %v529, %v1002
        %v1067 = vadd.f32 %v600, %v1003
        %v1068 = vadd.f32 %v602, %v1004
        %v1069 = vadd.f32 %v531, %v1005
        %v1070 = vadd.f32 %v533, %v1006
        %v1071 = vadd.f32 %v604, %v1007
        %v1072 = vadd.f32 %v606, %v1008
        %v1073 = vadd.f32 %v537, %v1009
        %v1074 = vadd.f32 %v539, %v1010
        %v1075 = vadd.f32 %v610, %v1011
        %v1076 = vadd.f32 %v612, %v1012
        %v1077 = vadd.f32 %v541, %v1013
        %v1078 = vadd.f32 %v543, %v1014
        %v1079 = vadd.f32 %v614, %v1015
        %v1080 = vadd.f32 %v616, %v1016
        %v1081 = vadd.f32 %v547, %v1017
        %v1082 = vadd.f32 %v549, %v1018
        %v1083 = vadd.f32 %v620, %v1019
        %v1084 = vadd.f32 %v622, %v1020
        %v1085 = vadd.f32 %v551, %v1021
        %v1086 = vadd.f32 %v553, %v1022
        %v1087 = vadd.f32 %v624, %v1023
        %v1088 = vadd.f32 %v626, %v1024
        %v1089 = vxor.u32 %v1057, 2147483648
        %v1090 = vxor.u32 %v1061, 2147483648
        %v1091 = vxor.u32 %v1065, 2147483648
        %v1092 = vxor.u32 %v1069, 2147483648
        %v1093 = vxor.u32 %v1073, 2147483648
        %v1094 = vxor.u32 %v1077, 2147483648
        %v1095 = vxor.u32 %v1081, 2147483648
        %v1096 = vxor.u32 %v1085, 2147483648
        %v1097 = vmul.f32 %v1089, 1.442695
        %v1098 = vpow.pop %v1097
        %v1099 = vmul.f32 %v1090, 1.442695
        %v1100 = vpow.pop %v1099
        %v1101 = vmul.f32 %v1091, 1.442695
        %v1102 = vpow.pop %v1101
        %v1103 = vmul.f32 %v1092, 1.442695
        %v1104 = vpow.pop %v1103
        %v1105 = vmul.f32 %v1093, 1.442695
        %v1106 = vpow.pop %v1105
        %v1107 = vmul.f32 %v1094, 1.442695
        %v1108 = vpow.pop %v1107
        %v1109 = vmul.f32 %v1095, 1.442695
        %v1110 = vpow.pop %v1109
        %v1111 = vmul.f32 %v1096, 1.442695
        %v1112 = vpow.pop %v1111
        %v1113 = vadd.f32 %v1098, 1.0
        %v1114 = vadd.f32 %v1100, 1.0
        %v1115 = vadd.f32 %v1102, 1.0
        %v1116 = vadd.f32 %v1104, 1.0
        %v1117 = vadd.f32 %v1106, 1.0
        %v1118 = vadd.f32 %v1108, 1.0
        %v1119 = vadd.f32 %v1110, 1.0
        %v1120 = vadd.f32 %v1112, 1.0
        %v1121 = vrcp.pop %v1113
        %v1122 = vmul.f32 1.0, %v1121
        %v1123 = vrcp.pop %v1114
        %v1124 = vmul.f32 1.0, %v1123
        %v1125 = vrcp.pop %v1115
        %v1126 = vmul.f32 1.0, %v1125
        %v1127 = vrcp.pop %v1116
        %v1128 = vmul.f32 1.0, %v1127
        %v1129 = vrcp.pop %v1117
        %v1130 = vmul.f32 1.0, %v1129
        %v1131 = vrcp.pop %v1118
        %v1132 = vmul.f32 1.0, %v1131
        %v1133 = vrcp.pop %v1119
        %v1134 = vmul.f32 1.0, %v1133
        %v1135 = vrcp.pop %v1120
        %v1136 = vmul.f32 1.0, %v1135
        %v1137 = vxor.u32 %v1058, 2147483648
        %v1138 = vxor.u32 %v1062, 2147483648
        %v1139 = vxor.u32 %v1066, 2147483648
        %v1140 = vxor.u32 %v1070, 2147483648
        %v1141 = vxor.u32 %v1074, 2147483648
        %v1142 = vxor.u32 %v1078, 2147483648
        %v1143 = vxor.u32 %v1082, 2147483648
        %v1144 = vxor.u32 %v1086, 2147483648
        %v1145 = vmul.f32 %v1137, 1.442695
        %v1146 = vpow.pop %v1145
        %v1147 = vmul.f32 %v1138, 1.442695
        %v1148 = vpow.pop %v1147
        %v1149 = vmul.f32 %v1139, 1.442695
        %v1150 = vpow.pop %v1149
        %v1151 = vmul.f32 %v1140, 1.442695
        %v1152 = vpow.pop %v1151
        %v1153 = vmul.f32 %v1141, 1.442695
        %v1154 = vpow.pop %v1153
        %v1155 = vmul.f32 %v1142, 1.442695
        %v1156 = vpow.pop %v1155
        %v1157 = vmul.f32 %v1143, 1.442695
        %v1158 = vpow.pop %v1157
        %v1159 = vmul.f32 %v1144, 1.442695
        %v1160 = vpow.pop %v1159
        %v1161 = vadd.f32 %v1146, 1.0
        %v1162 = vadd.f32 %v1148, 1.0
        %v1163 = vadd.f32 %v1150, 1.0
        %v1164 = vadd.f32 %v1152, 1.0
        %v1165 = vadd.f32 %v1154, 1.0
        %v1166 = vadd.f32 %v1156, 1.0
        %v1167 = vadd.f32 %v1158, 1.0
        %v1168 = vadd.f32 %v1160, 1.0
        %v1169 = vrcp.pop %v1161
        %v1170 = vmul.f32 1.0, %v1169
        %v1171 = vrcp.pop %v1162
        %v1172 = vmul.f32 1.0, %v1171
        %v1173 = vrcp.pop %v1163
        %v1174 = vmul.f32 1.0, %v1173
        %v1175 = vrcp.pop %v1164
        %v1176 = vmul.f32 1.0, %v1175
        %v1177 = vrcp.pop %v1165
        %v1178 = vmul.f32 1.0, %v1177
        %v1179 = vrcp.pop %v1166
        %v1180 = vmul.f32 1.0, %v1179
        %v1181 = vrcp.pop %v1167
        %v1182 = vmul.f32 1.0, %v1181
        %v1183 = vrcp.pop %v1168
        %v1184 = vmul.f32 1.0, %v1183
        %v1185 = vtanh.pop %v1059
        %v1186 = vtanh.pop %v1063
        %v1187 = vtanh.pop %v1067
        %v1188 = vtanh.pop %v1071
        %v1189 = vtanh.pop %v1075
        %v1190 = vtanh.pop %v1079
        %v1191 = vtanh.pop %v1083
        %v1192 = vtanh.pop %v1087
        %v1193 = vxor.u32 %v1060, 2147483648
        %v1194 = vxor.u32 %v1064, 2147483648
        %v1195 = vxor.u32 %v1068, 2147483648
        %v1196 = vxor.u32 %v1072, 2147483648
        %v1197 = vxor.u32 %v1076, 2147483648
        %v1198 = vxor.u32 %v1080, 2147483648
        %v1199 = vxor.u32 %v1084, 2147483648
        %v1200 = vxor.u32 %v1088, 2147483648
        %v1201 = vmul.f32 %v1193, 1.442695
        %v1202 = vpow.pop %v1201
        %v1203 = vmul.f32 %v1194, 1.442695
        %v1204 = vpow.pop %v1203
        %v1205 = vmul.f32 %v1195, 1.442695
        %v1206 = vpow.pop %v1205
        %v1207 = vmul.f32 %v1196, 1.442695
        %v1208 = vpow.pop %v1207
        %v1209 = vmul.f32 %v1197, 1.442695
        %v1210 = vpow.pop %v1209
        %v1211 = vmul.f32 %v1198, 1.442695
        %v1212 = vpow.pop %v1211
        %v1213 = vmul.f32 %v1199, 1.442695
        %v1214 = vpow.pop %v1213
        %v1215 = vmul.f32 %v1200, 1.442695
        %v1216 = vpow.pop %v1215
        %v1217 = vadd.f32 %v1202, 1.0
        %v1218 = vadd.f32 %v1204, 1.0
        %v1219 = vadd.f32 %v1206, 1.0
        %v1220 = vadd.f32 %v1208, 1.0
        %v1221 = vadd.f32 %v1210, 1.0
        %v1222 = vadd.f32 %v1212, 1.0
        %v1223 = vadd.f32 %v1214, 1.0
        %v1224 = vadd.f32 %v1216, 1.0
        %v1225 = vrcp.pop %v1217
        %v1226 = vmul.f32 1.0, %v1225
        %v1227 = vrcp.pop %v1218
        %v1228 = vmul.f32 1.0, %v1227
        %v1229 = vrcp.pop %v1219
        %v1230 = vmul.f32 1.0, %v1229
        %v1231 = vrcp.pop %v1220
        %v1232 = vmul.f32 1.0, %v1231
        %v1233 = vrcp.pop %v1221
        %v1234 = vmul.f32 1.0, %v1233
        %v1235 = vrcp.pop %v1222
        %v1236 = vmul.f32 1.0, %v1235
        %v1237 = vrcp.pop %v1223
        %v1238 = vmul.f32 1.0, %v1237
        %v1239 = vrcp.pop %v1224
        %v1240 = vmul.f32 1.0, %v1239
        %v1242 = vrot.slane %v747, 1
        %v1243 = vrot.slane %v747, 2
        %v1244 = vrot.slane %v747, 3
        %v1245 = vrot.slane %v747, 4
        %v1246 = vrot.slane %v747, 5
        %v1247 = vrot.slane %v747, 6
        %v1248 = vrot.slane %v747, 7
        %v1257 = vmul.f32 %v1170, %v747
        %v1258 = vmul.f32 %v1172, %v1242
        %v1259 = vmul.f32 %v1174, %v1243
        %v1260 = vmul.f32 %v1176, %v1244
        %v1261 = vmul.f32 %v1178, %v1245
        %v1262 = vmul.f32 %v1180, %v1246
        %v1263 = vmul.f32 %v1182, %v1247
        %v1264 = vmul.f32 %v1184, %v1248
        %v1265 = vmul.f32 %v1122, %v1185
        %v1266 = vmul.f32 %v1124, %v1186
        %v1267 = vmul.f32 %v1126, %v1187
        %v1268 = vmul.f32 %v1128, %v1188
        %v1269 = vmul.f32 %v1130, %v1189
        %v1270 = vmul.f32 %v1132, %v1190
        %v1271 = vmul.f32 %v1134, %v1191
        %v1272 = vmul.f32 %v1136, %v1192
        %v1273 = vadd.f32 %v1257, %v1265
        %v1274 = vadd.f32 %v1258, %v1266
        %v1275 = vadd.f32 %v1259, %v1267
        %v1276 = vadd.f32 %v1260, %v1268
        %v1277 = vadd.f32 %v1261, %v1269
        %v1278 = vadd.f32 %v1262, %v1270
        %v1279 = vadd.f32 %v1263, %v1271
        %v1280 = vadd.f32 %v1264, %v1272
        %v1281 = vtanh.pop %v1273
        %v1282 = vtanh.pop %v1274
        %v1283 = vtanh.pop %v1275
        %v1284 = vtanh.pop %v1276
        %v1285 = vtanh.pop %v1277
        %v1286 = vtanh.pop %v1278
        %v1287 = vtanh.pop %v1279
        %v1288 = vtanh.pop %v1280
        %v1289 = vmul.f32 %v1226, %v1281
        %v1290 = vmul.f32 %v1228, %v1282
        %v1291 = vmul.f32 %v1230, %v1283
        %v1292 = vmul.f32 %v1232, %v1284
        %v1293 = vmul.f32 %v1234, %v1285
        %v1294 = vmul.f32 %v1236, %v1286
        %v1295 = vmul.f32 %v1238, %v1287
        %v1296 = vmul.f32 %v1240, %v1288
        %v1305 = vrot.slane %v1290, 7
        %vm1306 = vcmask 1041409
        %v1307 = vsel %vm1306, %v1305, %v1289
        %v1308 = vrot.slane %v1291, 6
        %vm1309 = vcmask 1042434
        %v1310 = vsel %vm1309, %v1308, %v1307
        %v1311 = vrot.slane %v1292, 5
        %vm1312 = vcmask 1043459
        %v1313 = vsel %vm1312, %v1311, %v1310
        %v1314 = vrot.slane %v1293, 4
        %vm1315 = vcmask 1044484
        %v1316 = vsel %vm1315, %v1314, %v1313
        %v1317 = vrot.slane %v1294, 3
        %vm1318 = vcmask 1045509
        %v1319 = vsel %vm1318, %v1317, %v1316
        %v1320 = vrot.slane %v1295, 2
        %vm1321 = vcmask 1046534
        %v1322 = vsel %vm1321, %v1320, %v1319
        %v1323 = vrot.slane %v1296, 1
        %vm1324 = vcmask 1047559
        %v1325 = vsel %vm1324, %v1323, %v1322
        %v1327 = vpack.c.bf16 %v1325, %v1325
        %v1328 = vpack.c.bf16 %v748, %v748
        %v1393 = vunpack.c.l.b16 %v660
        %v1394 = vunpack.c.h.b16 %v660
        %v1395 = vunpack.c.l.b16 %v661
        %v1396 = vunpack.c.h.b16 %v661
        %v1397 = vunpack.c.l.b16 %v662
        %v1398 = vunpack.c.h.b16 %v662
        %v1399 = vunpack.c.l.b16 %v663
        %v1400 = vunpack.c.h.b16 %v663
        %v1401 = vunpack.c.l.b16 %v664
        %v1402 = vunpack.c.h.b16 %v664
        %v1403 = vunpack.c.l.b16 %v665
        %v1404 = vunpack.c.h.b16 %v665
        %v1405 = vunpack.c.l.b16 %v666
        %v1406 = vunpack.c.h.b16 %v666
        %v1407 = vunpack.c.l.b16 %v667
        %v1408 = vunpack.c.h.b16 %v667
        %v1409 = vunpack.c.l.b16 %v668
        %v1410 = vunpack.c.h.b16 %v668
        %v1411 = vunpack.c.l.b16 %v669
        %v1412 = vunpack.c.h.b16 %v669
        %v1413 = vunpack.c.l.b16 %v670
        %v1414 = vunpack.c.h.b16 %v670
        %v1415 = vunpack.c.l.b16 %v671
        %v1416 = vunpack.c.h.b16 %v671
        %v1417 = vunpack.c.l.b16 %v672
        %v1418 = vunpack.c.h.b16 %v672
        %v1419 = vunpack.c.l.b16 %v673
        %v1420 = vunpack.c.h.b16 %v673
        %v1421 = vunpack.c.l.b16 %v674
        %v1422 = vunpack.c.h.b16 %v674
        %v1423 = vunpack.c.l.b16 %v675
        %v1424 = vunpack.c.h.b16 %v675
        %v1425 = vunpack.c.l.b16 %v676
        %v1426 = vunpack.c.h.b16 %v676
        %v1427 = vunpack.c.l.b16 %v677
        %v1428 = vunpack.c.h.b16 %v677
        %v1429 = vunpack.c.l.b16 %v678
        %v1430 = vunpack.c.h.b16 %v678
        %v1431 = vunpack.c.l.b16 %v679
        %v1432 = vunpack.c.h.b16 %v679
        %v1433 = vunpack.c.l.b16 %v680
        %v1434 = vunpack.c.h.b16 %v680
        %v1435 = vunpack.c.l.b16 %v681
        %v1436 = vunpack.c.h.b16 %v681
        %v1437 = vunpack.c.l.b16 %v682
        %v1438 = vunpack.c.h.b16 %v682
        %v1439 = vunpack.c.l.b16 %v683
        %v1440 = vunpack.c.h.b16 %v683
        %v1441 = vunpack.c.l.b16 %v684
        %v1442 = vunpack.c.h.b16 %v684
        %v1443 = vunpack.c.l.b16 %v685
        %v1444 = vunpack.c.h.b16 %v685
        %v1445 = vunpack.c.l.b16 %v686
        %v1446 = vunpack.c.h.b16 %v686
        %v1447 = vunpack.c.l.b16 %v687
        %v1448 = vunpack.c.h.b16 %v687
        %v1449 = vunpack.c.l.b16 %v688
        %v1450 = vunpack.c.h.b16 %v688
        %v1451 = vunpack.c.l.b16 %v689
        %v1452 = vunpack.c.h.b16 %v689
        %v1453 = vunpack.c.l.b16 %v690
        %v1454 = vunpack.c.h.b16 %v690
        %v1455 = vunpack.c.l.b16 %v691
        %v1456 = vunpack.c.h.b16 %v691
        %v1457 = vunpack.c.l.b16 %v692
        %v1458 = vunpack.c.h.b16 %v692
        %v1459 = vunpack.c.l.b16 %v693
        %v1460 = vunpack.c.h.b16 %v693
        %v1461 = vunpack.c.l.b16 %v694
        %v1462 = vunpack.c.h.b16 %v694
        %v1463 = vunpack.c.l.b16 %v695
        %v1464 = vunpack.c.h.b16 %v695
        %v1465 = vunpack.c.l.b16 %v696
        %v1466 = vunpack.c.h.b16 %v696
        %v1467 = vunpack.c.l.b16 %v697
        %v1468 = vunpack.c.h.b16 %v697
        %v1469 = vunpack.c.l.b16 %v698
        %v1470 = vunpack.c.h.b16 %v698
        %v1471 = vunpack.c.l.b16 %v699
        %v1472 = vunpack.c.h.b16 %v699
        %v1473 = vunpack.c.l.b16 %v700
        %v1474 = vunpack.c.h.b16 %v700
        %v1475 = vunpack.c.l.b16 %v701
        %v1476 = vunpack.c.h.b16 %v701
        %v1477 = vunpack.c.l.b16 %v702
        %v1478 = vunpack.c.h.b16 %v702
        %v1479 = vunpack.c.l.b16 %v703
        %v1480 = vunpack.c.h.b16 %v703
        %v1481 = vunpack.c.l.b16 %v704
        %v1482 = vunpack.c.h.b16 %v704
        %v1483 = vunpack.c.l.b16 %v705
        %v1484 = vunpack.c.h.b16 %v705
        %v1485 = vunpack.c.l.b16 %v706
        %v1486 = vunpack.c.h.b16 %v706
        %v1487 = vunpack.c.l.b16 %v707
        %v1488 = vunpack.c.h.b16 %v707
        %v1489 = vunpack.c.l.b16 %v708
        %v1490 = vunpack.c.h.b16 %v708
        %v1491 = vunpack.c.l.b16 %v709
        %v1492 = vunpack.c.h.b16 %v709
        %v1493 = vunpack.c.l.b16 %v710
        %v1494 = vunpack.c.h.b16 %v710
        %v1495 = vunpack.c.l.b16 %v711
        %v1496 = vunpack.c.h.b16 %v711
        %v1497 = vunpack.c.l.b16 %v712
        %v1498 = vunpack.c.h.b16 %v712
        %v1499 = vunpack.c.l.b16 %v713
        %v1500 = vunpack.c.h.b16 %v713
        %v1501 = vunpack.c.l.b16 %v714
        %v1502 = vunpack.c.h.b16 %v714
        %v1503 = vunpack.c.l.b16 %v715
        %v1504 = vunpack.c.h.b16 %v715
        %v1505 = vunpack.c.l.b16 %v716
        %v1506 = vunpack.c.h.b16 %v716
        %v1507 = vunpack.c.l.b16 %v717
        %v1508 = vunpack.c.h.b16 %v717
        %v1509 = vunpack.c.l.b16 %v718
        %v1510 = vunpack.c.h.b16 %v718
        %v1511 = vunpack.c.l.b16 %v719
        %v1512 = vunpack.c.h.b16 %v719
        %v1513 = vunpack.c.l.b16 %v720
        %v1514 = vunpack.c.h.b16 %v720
        %v1515 = vunpack.c.l.b16 %v721
        %v1516 = vunpack.c.h.b16 %v721
        %v1517 = vunpack.c.l.b16 %v722
        %v1518 = vunpack.c.h.b16 %v722
        %v1519 = vunpack.c.l.b16 %v723
        %v1520 = vunpack.c.h.b16 %v723
        %v1521 = vpack.c.b16 %v1397, %v1393
        %v1522 = vpack.c.b16 %v1398, %v1394
        %v1523 = vpack.c.b16 %v1399, %v1395
        %v1524 = vpack.c.b16 %v1400, %v1396
        %v1525 = vpack.c.b16 %v1405, %v1401
        %v1526 = vpack.c.b16 %v1406, %v1402
        %v1527 = vpack.c.b16 %v1407, %v1403
        %v1528 = vpack.c.b16 %v1408, %v1404
        %v1529 = vpack.c.b16 %v1413, %v1409
        %v1530 = vpack.c.b16 %v1414, %v1410
        %v1531 = vpack.c.b16 %v1415, %v1411
        %v1532 = vpack.c.b16 %v1416, %v1412
        %v1533 = vpack.c.b16 %v1421, %v1417
        %v1534 = vpack.c.b16 %v1422, %v1418
        %v1535 = vpack.c.b16 %v1423, %v1419
        %v1536 = vpack.c.b16 %v1424, %v1420
        %v1537 = vpack.c.b16 %v1429, %v1425
        %v1538 = vpack.c.b16 %v1430, %v1426
        %v1539 = vpack.c.b16 %v1431, %v1427
        %v1540 = vpack.c.b16 %v1432, %v1428
        %v1541 = vpack.c.b16 %v1437, %v1433
        %v1542 = vpack.c.b16 %v1438, %v1434
        %v1543 = vpack.c.b16 %v1439, %v1435
        %v1544 = vpack.c.b16 %v1440, %v1436
        %v1545 = vpack.c.b16 %v1445, %v1441
        %v1546 = vpack.c.b16 %v1446, %v1442
        %v1547 = vpack.c.b16 %v1447, %v1443
        %v1548 = vpack.c.b16 %v1448, %v1444
        %v1549 = vpack.c.b16 %v1453, %v1449
        %v1550 = vpack.c.b16 %v1454, %v1450
        %v1551 = vpack.c.b16 %v1455, %v1451
        %v1552 = vpack.c.b16 %v1456, %v1452
        %v1553 = vpack.c.b16 %v1461, %v1457
        %v1554 = vpack.c.b16 %v1462, %v1458
        %v1555 = vpack.c.b16 %v1463, %v1459
        %v1556 = vpack.c.b16 %v1464, %v1460
        %v1557 = vpack.c.b16 %v1469, %v1465
        %v1558 = vpack.c.b16 %v1470, %v1466
        %v1559 = vpack.c.b16 %v1471, %v1467
        %v1560 = vpack.c.b16 %v1472, %v1468
        %v1561 = vpack.c.b16 %v1477, %v1473
        %v1562 = vpack.c.b16 %v1478, %v1474
        %v1563 = vpack.c.b16 %v1479, %v1475
        %v1564 = vpack.c.b16 %v1480, %v1476
        %v1565 = vpack.c.b16 %v1485, %v1481
        %v1566 = vpack.c.b16 %v1486, %v1482
        %v1567 = vpack.c.b16 %v1487, %v1483
        %v1568 = vpack.c.b16 %v1488, %v1484
        %v1569 = vpack.c.b16 %v1493, %v1489
        %v1570 = vpack.c.b16 %v1494, %v1490
        %v1571 = vpack.c.b16 %v1495, %v1491
        %v1572 = vpack.c.b16 %v1496, %v1492
        %v1573 = vpack.c.b16 %v1501, %v1497
        %v1574 = vpack.c.b16 %v1502, %v1498
        %v1575 = vpack.c.b16 %v1503, %v1499
        %v1576 = vpack.c.b16 %v1504, %v1500
        %v1577 = vpack.c.b16 %v1509, %v1505
        %v1578 = vpack.c.b16 %v1510, %v1506
        %v1579 = vpack.c.b16 %v1511, %v1507
        %v1580 = vpack.c.b16 %v1512, %v1508
        %v1581 = vpack.c.b16 %v1517, %v1513
        %v1582 = vpack.c.b16 %v1518, %v1514
        %v1583 = vpack.c.b16 %v1519, %v1515
        %v1584 = vpack.c.b16 %v1520, %v1516
        %1649 = vmatprep.subr.bf16.mxu0 %v1522
        %1650 = vmatpush1.bf16.msra.mxu0 %v1521
        %1651 = vmatprep.subr.bf16.mxu0 %v1526
        %1652 = vmatpush1.bf16.msra.mxu0 %v1525
        %1653 = vmatprep.subr.bf16.mxu0 %v1530
        %1654 = vmatpush1.bf16.msra.mxu0 %v1529
        %1655 = vmatprep.subr.bf16.mxu0 %v1534
        %1656 = vmatpush1.bf16.msra.mxu0 %v1533
        %1657 = vmatprep.subr.bf16.mxu0 %v1538
        %1658 = vmatpush1.bf16.msra.mxu0 %v1537
        %1659 = vmatprep.subr.bf16.mxu0 %v1542
        %1660 = vmatpush1.bf16.msra.mxu0 %v1541
        %1661 = vmatprep.subr.bf16.mxu0 %v1546
        %1662 = vmatpush1.bf16.msra.mxu0 %v1545
        %1663 = vmatprep.subr.bf16.mxu0 %v1550
        %1664 = vmatpush1.bf16.msra.mxu0 %v1549
        %1665 = vmatprep.subr.bf16.mxu0 %v1554
        %1666 = vmatpush1.bf16.msra.mxu0 %v1553
        %1667 = vmatprep.subr.bf16.mxu0 %v1558
        %1668 = vmatpush1.bf16.msra.mxu0 %v1557
        %1669 = vmatprep.subr.bf16.mxu0 %v1562
        %1670 = vmatpush1.bf16.msra.mxu0 %v1561
        %1671 = vmatprep.subr.bf16.mxu0 %v1566
        %1672 = vmatpush1.bf16.msra.mxu0 %v1565
        %1673 = vmatprep.subr.bf16.mxu0 %v1570
        %1674 = vmatpush1.bf16.msra.mxu0 %v1569
        %1675 = vmatprep.subr.bf16.mxu0 %v1574
        %1676 = vmatpush1.bf16.msra.mxu0 %v1573
        %1677 = vmatprep.subr.bf16.mxu0 %v1578
        %1678 = vmatpush1.bf16.msra.mxu0 %v1577
        %1679 = vmatprep.subr.bf16.mxu0 %v1582
        %1680 = vmatpush1.bf16.msra.mxu0 %v1581
        %1681 = vmatprep.mubr.bf16.mxu0 %v1328
        %1682 = vmatmul.mubr.bf16.gmra.mrb[0].mxu0 %v1327
        %v1683 = vpop.f32.mrb[0].mxu0
        %v1684 = vadd.f32 %v729, %v1683
        %v1685 = vpop.f32.mrb[0].mxu0
        %v1686 = vadd.f32 %v733, %v1685
        %v1687 = vpop.f32.mrb[0].mxu0
        %v1688 = vpop.f32.mrb[0].mxu0
        %1689 = vdwg.mxu0
        %1690 = vmatprep.subr.bf16.mxu0 %v1524
        %1691 = vmatpush1.bf16.msra.mxu0 %v1523
        %1692 = vmatprep.subr.bf16.mxu0 %v1528
        %1693 = vmatpush1.bf16.msra.mxu0 %v1527
        %1694 = vmatprep.subr.bf16.mxu0 %v1532
        %1695 = vmatpush1.bf16.msra.mxu0 %v1531
        %1696 = vmatprep.subr.bf16.mxu0 %v1536
        %1697 = vmatpush1.bf16.msra.mxu0 %v1535
        %1698 = vmatprep.subr.bf16.mxu0 %v1540
        %1699 = vmatpush1.bf16.msra.mxu0 %v1539
        %1700 = vmatprep.subr.bf16.mxu0 %v1544
        %1701 = vmatpush1.bf16.msra.mxu0 %v1543
        %1702 = vmatprep.subr.bf16.mxu0 %v1548
        %1703 = vmatpush1.bf16.msra.mxu0 %v1547
        %1704 = vmatprep.subr.bf16.mxu0 %v1552
        %1705 = vmatpush1.bf16.msra.mxu0 %v1551
        %1706 = vmatprep.subr.bf16.mxu0 %v1556
        %1707 = vmatpush1.bf16.msra.mxu0 %v1555
        %1708 = vmatprep.subr.bf16.mxu0 %v1560
        %1709 = vmatpush1.bf16.msra.mxu0 %v1559
        %1710 = vmatprep.subr.bf16.mxu0 %v1564
        %1711 = vmatpush1.bf16.msra.mxu0 %v1563
        %1712 = vmatprep.subr.bf16.mxu0 %v1568
        %1713 = vmatpush1.bf16.msra.mxu0 %v1567
        %1714 = vmatprep.subr.bf16.mxu0 %v1572
        %1715 = vmatpush1.bf16.msra.mxu0 %v1571
        %1716 = vmatprep.subr.bf16.mxu0 %v1576
        %1717 = vmatpush1.bf16.msra.mxu0 %v1575
        %1718 = vmatprep.subr.bf16.mxu0 %v1580
        %1719 = vmatpush1.bf16.msra.mxu0 %v1579
        %1720 = vmatprep.subr.bf16.mxu0 %v1584
        %1721 = vmatpush1.bf16.msra.mxu0 %v1583
        %1722 = vmatprep.mubr.bf16.mxu0 %v1328
        %1723 = vmatmul.mubr.bf16.gmra.mrb[0].mxu0 %v1327
        %v1724 = vpop.f32.mrb[0].mxu0
        %v1725 = vadd.f32 %v737, %v1724
        %v1726 = vpop.f32.mrb[0].mxu0
        %v1727 = vadd.f32 %v741, %v1726
        %v1728 = vpop.f32.mrb[0].mxu0
        %v1729 = vpop.f32.mrb[0].mxu0
        %1730 = vdwg.mxu0
        %v1731 = vxor.u32 %v1684, 2147483648
        %v1732 = vmul.f32 %v1731, 1.442695
        %v1733 = vpow.pop %v1732
        %v1734 = vadd.f32 %v1733, 1.0
        %v1735 = vrcp.pop %v1734
        %v1736 = vmul.f32 1.0, %v1735
        %v1737 = vxor.u32 %v1686, 2147483648
        %v1738 = vmul.f32 %v1737, 1.442695
        %v1739 = vpow.pop %v1738
        %v1740 = vadd.f32 %v1739, 1.0
        %v1741 = vrcp.pop %v1740
        %v1742 = vmul.f32 1.0, %v1741
        %v1743 = vtanh.pop %v1725
        %v1744 = vxor.u32 %v1727, 2147483648
        %v1745 = vmul.f32 %v1744, 1.442695
        %v1746 = vpow.pop %v1745
        %v1747 = vadd.f32 %v1746, 1.0
        %v1748 = vrcp.pop %v1747
        %v1749 = vmul.f32 1.0, %v1748
        %v1750 = vmul.f32 %v1742, %v749
        %v1751 = vmul.f32 %v1736, %v1743
        %v1752 = vadd.f32 %v1750, %v1751
        %v1753 = vtanh.pop %v1752
        %v1754 = vmul.f32 %v1749, %v1753
        %v1755 = vpack.c.bf16 %v1289, %v1289
        %v1756 = vpack.c.bf16 %v1290, %v1290
        %v1757 = vpack.c.bf16 %v1291, %v1291
        %v1758 = vpack.c.bf16 %v1292, %v1292
        %v1759 = vpack.c.bf16 %v1293, %v1293
        %v1760 = vpack.c.bf16 %v1294, %v1294
        %v1761 = vpack.c.bf16 %v1295, %v1295
        %v1762 = vpack.c.bf16 %v1296, %v1296
        %v1771 = vunpack.c.l.b16 %v1755
        %v1772 = vunpack.c.l.b16 %v1756
        %v1773 = vunpack.c.l.b16 %v1757
        %v1774 = vunpack.c.l.b16 %v1758
        %v1775 = vunpack.c.l.b16 %v1759
        %v1776 = vunpack.c.l.b16 %v1760
        %v1777 = vunpack.c.l.b16 %v1761
        %v1778 = vunpack.c.l.b16 %v1762
        %v1779 = vrot.slane %v1772, 7
        %v1780 = vsel %vm1306, %v1779, %v1771
        %v1781 = vrot.slane %v1773, 6
        %v1782 = vsel %vm1309, %v1781, %v1780
        %v1783 = vrot.slane %v1774, 5
        %v1784 = vsel %vm1312, %v1783, %v1782
        %v1785 = vrot.slane %v1775, 4
        %v1786 = vsel %vm1315, %v1785, %v1784
        %v1787 = vrot.slane %v1776, 3
        %v1788 = vsel %vm1318, %v1787, %v1786
        %v1789 = vrot.slane %v1777, 2
        %v1790 = vsel %vm1321, %v1789, %v1788
        %v1791 = vrot.slane %v1778, 1
        %v1792 = vsel %vm1324, %v1791, %v1790
        %v1793 = vpack.c.b16 %v1792, %v1792
        %1795 = vmatprep.subr.bf16.mxu0 %v848
        %1796 = vmatpush1.bf16.msra.mxu0 %v847
        %1797 = vmatprep.subr.bf16.mxu0 %v852
        %1798 = vmatpush1.bf16.msra.mxu0 %v851
        %1799 = vmatprep.subr.bf16.mxu0 %v856
        %1800 = vmatpush1.bf16.msra.mxu0 %v855
        %1801 = vmatprep.subr.bf16.mxu0 %v860
        %1802 = vmatpush1.bf16.msra.mxu0 %v859
        %1803 = vmatprep.subr.bf16.mxu0 %v864
        %1804 = vmatpush1.bf16.msra.mxu0 %v863
        %1805 = vmatprep.subr.bf16.mxu0 %v868
        %1806 = vmatpush1.bf16.msra.mxu0 %v867
        %1807 = vmatprep.subr.bf16.mxu0 %v872
        %1808 = vmatpush1.bf16.msra.mxu0 %v871
        %1809 = vmatprep.subr.bf16.mxu0 %v876
        %1810 = vmatpush1.bf16.msra.mxu0 %v875
        %1811 = vmatprep.subr.bf16.mxu0 0
        %1812 = vmatpush1.bf16.msra.mxu0 0
        %1813 = vmatprep.subr.bf16.mxu0 0
        %1814 = vmatpush1.bf16.msra.mxu0 0
        %1815 = vmatprep.subr.bf16.mxu0 0
        %1816 = vmatpush1.bf16.msra.mxu0 0
        %1817 = vmatprep.subr.bf16.mxu0 0
        %1818 = vmatpush1.bf16.msra.mxu0 0
        %1819 = vmatprep.subr.bf16.mxu0 0
        %1820 = vmatpush1.bf16.msra.mxu0 0
        %1821 = vmatprep.subr.bf16.mxu0 0
        %1822 = vmatpush1.bf16.msra.mxu0 0
        %1823 = vmatprep.subr.bf16.mxu0 0
        %1824 = vmatpush1.bf16.msra.mxu0 0
        %1825 = vmatprep.subr.bf16.mxu0 0
        %1826 = vmatpush1.bf16.msra.mxu0 0
        %1827 = vmatprep.mubr.bf16.mxu0 0
        %1828 = vmatmul.mubr.bf16.gmra.mrb[0].mxu0 %v1793
        %v1829 = vpop.f32.mrb[0].mxu0
        %v1830 = vadd.f32 0.0, %v1829
        %v1831 = vpop.f32.mrb[0].mxu0
        %v1832 = vadd.f32 0.0, %v1831
        %v1833 = vpop.f32.mrb[0].mxu0
        %v1834 = vpop.f32.mrb[0].mxu0
        %1835 = vdwg.mxu0
        %1836 = vmatprep.subr.bf16.mxu0 %v850
        %1837 = vmatpush1.bf16.msra.mxu0 %v849
        %1838 = vmatprep.subr.bf16.mxu0 %v854
        %1839 = vmatpush1.bf16.msra.mxu0 %v853
        %1840 = vmatprep.subr.bf16.mxu0 %v858
        %1841 = vmatpush1.bf16.msra.mxu0 %v857
        %1842 = vmatprep.subr.bf16.mxu0 %v862
        %1843 = vmatpush1.bf16.msra.mxu0 %v861
        %1844 = vmatprep.subr.bf16.mxu0 %v866
        %1845 = vmatpush1.bf16.msra.mxu0 %v865
        %1846 = vmatprep.subr.bf16.mxu0 %v870
        %1847 = vmatpush1.bf16.msra.mxu0 %v869
        %1848 = vmatprep.subr.bf16.mxu0 %v874
        %1849 = vmatpush1.bf16.msra.mxu0 %v873
        %1850 = vmatprep.subr.bf16.mxu0 %v878
        %1851 = vmatpush1.bf16.msra.mxu0 %v877
        %1852 = vmatprep.subr.bf16.mxu0 0
        %1853 = vmatpush1.bf16.msra.mxu0 0
        %1854 = vmatprep.subr.bf16.mxu0 0
        %1855 = vmatpush1.bf16.msra.mxu0 0
        %1856 = vmatprep.subr.bf16.mxu0 0
        %1857 = vmatpush1.bf16.msra.mxu0 0
        %1858 = vmatprep.subr.bf16.mxu0 0
        %1859 = vmatpush1.bf16.msra.mxu0 0
        %1860 = vmatprep.subr.bf16.mxu0 0
        %1861 = vmatpush1.bf16.msra.mxu0 0
        %1862 = vmatprep.subr.bf16.mxu0 0
        %1863 = vmatpush1.bf16.msra.mxu0 0
        %1864 = vmatprep.subr.bf16.mxu0 0
        %1865 = vmatpush1.bf16.msra.mxu0 0
        %1866 = vmatprep.subr.bf16.mxu0 0
        %1867 = vmatpush1.bf16.msra.mxu0 0
        %1868 = vmatprep.mubr.bf16.mxu0 0
        %1869 = vmatmul.mubr.bf16.gmra.mrb[0].mxu0 %v1793
        %v1870 = vpop.f32.mrb[0].mxu0
        %v1871 = vadd.f32 0.0, %v1870
        %v1872 = vpop.f32.mrb[0].mxu0
        %v1873 = vadd.f32 0.0, %v1872
        %v1874 = vpop.f32.mrb[0].mxu0
        %v1875 = vpop.f32.mrb[0].mxu0
        %1876 = vdwg.mxu0
        %v1881 = vrot.slane %v1830, 7
        %v1882 = vrot.slane %v1832, 7
        %v1883 = vrot.slane %v1871, 7
        %v1884 = vrot.slane %v1873, 7
        %v1885 = vrot.slane %v1830, 1
        %v1886 = vrot.slane %v1832, 1
        %v1887 = vrot.slane %v1871, 1
        %v1888 = vrot.slane %v1873, 1
        %v1889 = vrot.slane %v1830, 2
        %v1890 = vrot.slane %v1832, 2
        %v1891 = vrot.slane %v1871, 2
        %v1892 = vrot.slane %v1873, 2
        %v1893 = vrot.slane %v1830, 3
        %v1894 = vrot.slane %v1832, 3
        %v1895 = vrot.slane %v1871, 3
        %v1896 = vrot.slane %v1873, 3
        %v1897 = vrot.slane %v1830, 4
        %v1898 = vrot.slane %v1832, 4
        %v1899 = vrot.slane %v1871, 4
        %v1900 = vrot.slane %v1873, 4
        %v1901 = vrot.slane %v1830, 5
        %v1902 = vrot.slane %v1832, 5
        %v1903 = vrot.slane %v1871, 5
        %v1904 = vrot.slane %v1873, 5
        %v1905 = vrot.slane %v1830, 6
        %v1906 = vrot.slane %v1832, 6
        %v1907 = vrot.slane %v1871, 6
        %v1908 = vrot.slane %v1873, 6
        %v1941 = vadd.f32 %v517, %v1881
        %v1942 = vadd.f32 %v519, %v1882
        %v1943 = vadd.f32 %v590, %v1883
        %v1944 = vadd.f32 %v592, %v1884
        %v1945 = vadd.f32 %v521, %v1830
        %v1946 = vadd.f32 %v523, %v1832
        %v1947 = vadd.f32 %v594, %v1871
        %v1948 = vadd.f32 %v596, %v1873
        %v1949 = vadd.f32 %v527, %v1885
        %v1950 = vadd.f32 %v529, %v1886
        %v1951 = vadd.f32 %v600, %v1887
        %v1952 = vadd.f32 %v602, %v1888
        %v1953 = vadd.f32 %v531, %v1889
        %v1954 = vadd.f32 %v533, %v1890
        %v1955 = vadd.f32 %v604, %v1891
        %v1956 = vadd.f32 %v606, %v1892
        %v1957 = vadd.f32 %v537, %v1893
        %v1958 = vadd.f32 %v539, %v1894
        %v1959 = vadd.f32 %v610, %v1895
        %v1960 = vadd.f32 %v612, %v1896
        %v1961 = vadd.f32 %v541, %v1897
        %v1962 = vadd.f32 %v543, %v1898
        %v1963 = vadd.f32 %v614, %v1899
        %v1964 = vadd.f32 %v616, %v1900
        %v1965 = vadd.f32 %v547, %v1901
        %v1966 = vadd.f32 %v549, %v1902
        %v1967 = vadd.f32 %v620, %v1903
        %v1968 = vadd.f32 %v622, %v1904
        %v1969 = vadd.f32 %v551, %v1905
        %v1970 = vadd.f32 %v553, %v1906
        %v1971 = vadd.f32 %v624, %v1907
        %v1972 = vadd.f32 %v626, %v1908
        %v1973 = vxor.u32 %v1941, 2147483648
        %v1974 = vxor.u32 %v1945, 2147483648
        %v1975 = vxor.u32 %v1949, 2147483648
        %v1976 = vxor.u32 %v1953, 2147483648
        %v1977 = vxor.u32 %v1957, 2147483648
        %v1978 = vxor.u32 %v1961, 2147483648
        %v1979 = vxor.u32 %v1965, 2147483648
        %v1980 = vxor.u32 %v1969, 2147483648
        %v1981 = vmul.f32 %v1973, 1.442695
        %v1982 = vpow.pop %v1981
        %v1983 = vmul.f32 %v1974, 1.442695
        %v1984 = vpow.pop %v1983
        %v1985 = vmul.f32 %v1975, 1.442695
        %v1986 = vpow.pop %v1985
        %v1987 = vmul.f32 %v1976, 1.442695
        %v1988 = vpow.pop %v1987
        %v1989 = vmul.f32 %v1977, 1.442695
        %v1990 = vpow.pop %v1989
        %v1991 = vmul.f32 %v1978, 1.442695
        %v1992 = vpow.pop %v1991
        %v1993 = vmul.f32 %v1979, 1.442695
        %v1994 = vpow.pop %v1993
        %v1995 = vmul.f32 %v1980, 1.442695
        %v1996 = vpow.pop %v1995
        %v1997 = vadd.f32 %v1982, 1.0
        %v1998 = vadd.f32 %v1984, 1.0
        %v1999 = vadd.f32 %v1986, 1.0
        %v2000 = vadd.f32 %v1988, 1.0
        %v2001 = vadd.f32 %v1990, 1.0
        %v2002 = vadd.f32 %v1992, 1.0
        %v2003 = vadd.f32 %v1994, 1.0
        %v2004 = vadd.f32 %v1996, 1.0
        %v2005 = vrcp.pop %v1997
        %v2006 = vmul.f32 1.0, %v2005
        %v2007 = vrcp.pop %v1998
        %v2008 = vmul.f32 1.0, %v2007
        %v2009 = vrcp.pop %v1999
        %v2010 = vmul.f32 1.0, %v2009
        %v2011 = vrcp.pop %v2000
        %v2012 = vmul.f32 1.0, %v2011
        %v2013 = vrcp.pop %v2001
        %v2014 = vmul.f32 1.0, %v2013
        %v2015 = vrcp.pop %v2002
        %v2016 = vmul.f32 1.0, %v2015
        %v2017 = vrcp.pop %v2003
        %v2018 = vmul.f32 1.0, %v2017
        %v2019 = vrcp.pop %v2004
        %v2020 = vmul.f32 1.0, %v2019
        %v2021 = vxor.u32 %v1942, 2147483648
        %v2022 = vxor.u32 %v1946, 2147483648
        %v2023 = vxor.u32 %v1950, 2147483648
        %v2024 = vxor.u32 %v1954, 2147483648
        %v2025 = vxor.u32 %v1958, 2147483648
        %v2026 = vxor.u32 %v1962, 2147483648
        %v2027 = vxor.u32 %v1966, 2147483648
        %v2028 = vxor.u32 %v1970, 2147483648
        %v2029 = vmul.f32 %v2021, 1.442695
        %v2030 = vpow.pop %v2029
        %v2031 = vmul.f32 %v2022, 1.442695
        %v2032 = vpow.pop %v2031
        %v2033 = vmul.f32 %v2023, 1.442695
        %v2034 = vpow.pop %v2033
        %v2035 = vmul.f32 %v2024, 1.442695
        %v2036 = vpow.pop %v2035
        %v2037 = vmul.f32 %v2025, 1.442695
        %v2038 = vpow.pop %v2037
        %v2039 = vmul.f32 %v2026, 1.442695
        %v2040 = vpow.pop %v2039
        %v2041 = vmul.f32 %v2027, 1.442695
        %v2042 = vpow.pop %v2041
        %v2043 = vmul.f32 %v2028, 1.442695
        %v2044 = vpow.pop %v2043
        %v2045 = vadd.f32 %v2030, 1.0
        %v2046 = vadd.f32 %v2032, 1.0
        %v2047 = vadd.f32 %v2034, 1.0
        %v2048 = vadd.f32 %v2036, 1.0
        %v2049 = vadd.f32 %v2038, 1.0
        %v2050 = vadd.f32 %v2040, 1.0
        %v2051 = vadd.f32 %v2042, 1.0
        %v2052 = vadd.f32 %v2044, 1.0
        %v2053 = vrcp.pop %v2045
        %v2054 = vmul.f32 1.0, %v2053
        %v2055 = vrcp.pop %v2046
        %v2056 = vmul.f32 1.0, %v2055
        %v2057 = vrcp.pop %v2047
        %v2058 = vmul.f32 1.0, %v2057
        %v2059 = vrcp.pop %v2048
        %v2060 = vmul.f32 1.0, %v2059
        %v2061 = vrcp.pop %v2049
        %v2062 = vmul.f32 1.0, %v2061
        %v2063 = vrcp.pop %v2050
        %v2064 = vmul.f32 1.0, %v2063
        %v2065 = vrcp.pop %v2051
        %v2066 = vmul.f32 1.0, %v2065
        %v2067 = vrcp.pop %v2052
        %v2068 = vmul.f32 1.0, %v2067
        %v2069 = vtanh.pop %v1943
        %v2070 = vtanh.pop %v1947
        %v2071 = vtanh.pop %v1951
        %v2072 = vtanh.pop %v1955
        %v2073 = vtanh.pop %v1959
        %v2074 = vtanh.pop %v1963
        %v2075 = vtanh.pop %v1967
        %v2076 = vtanh.pop %v1971
        %v2077 = vxor.u32 %v1944, 2147483648
        %v2078 = vxor.u32 %v1948, 2147483648
        %v2079 = vxor.u32 %v1952, 2147483648
        %v2080 = vxor.u32 %v1956, 2147483648
        %v2081 = vxor.u32 %v1960, 2147483648
        %v2082 = vxor.u32 %v1964, 2147483648
        %v2083 = vxor.u32 %v1968, 2147483648
        %v2084 = vxor.u32 %v1972, 2147483648
        %v2085 = vmul.f32 %v2077, 1.442695
        %v2086 = vpow.pop %v2085
        %v2087 = vmul.f32 %v2078, 1.442695
        %v2088 = vpow.pop %v2087
        %v2089 = vmul.f32 %v2079, 1.442695
        %v2090 = vpow.pop %v2089
        %v2091 = vmul.f32 %v2080, 1.442695
        %v2092 = vpow.pop %v2091
        %v2093 = vmul.f32 %v2081, 1.442695
        %v2094 = vpow.pop %v2093
        %v2095 = vmul.f32 %v2082, 1.442695
        %v2096 = vpow.pop %v2095
        %v2097 = vmul.f32 %v2083, 1.442695
        %v2098 = vpow.pop %v2097
        %v2099 = vmul.f32 %v2084, 1.442695
        %v2100 = vpow.pop %v2099
        %v2101 = vadd.f32 %v2086, 1.0
        %v2102 = vadd.f32 %v2088, 1.0
        %v2103 = vadd.f32 %v2090, 1.0
        %v2104 = vadd.f32 %v2092, 1.0
        %v2105 = vadd.f32 %v2094, 1.0
        %v2106 = vadd.f32 %v2096, 1.0
        %v2107 = vadd.f32 %v2098, 1.0
        %v2108 = vadd.f32 %v2100, 1.0
        %v2109 = vrcp.pop %v2101
        %v2110 = vmul.f32 1.0, %v2109
        %v2111 = vrcp.pop %v2102
        %v2112 = vmul.f32 1.0, %v2111
        %v2113 = vrcp.pop %v2103
        %v2114 = vmul.f32 1.0, %v2113
        %v2115 = vrcp.pop %v2104
        %v2116 = vmul.f32 1.0, %v2115
        %v2117 = vrcp.pop %v2105
        %v2118 = vmul.f32 1.0, %v2117
        %v2119 = vrcp.pop %v2106
        %v2120 = vmul.f32 1.0, %v2119
        %v2121 = vrcp.pop %v2107
        %v2122 = vmul.f32 1.0, %v2121
        %v2123 = vrcp.pop %v2108
        %v2124 = vmul.f32 1.0, %v2123
        %v2133 = vrot.slane %v1273, 7
        %v2134 = vrot.slane %v1274, 7
        %v2135 = vrot.slane %v1275, 7
        %v2136 = vrot.slane %v1276, 7
        %v2137 = vrot.slane %v1277, 7
        %v2138 = vrot.slane %v1278, 7
        %v2139 = vrot.slane %v1279, 7
        %v2140 = vrot.slane %v1280, 7
        %v2149 = vmul.f32 %v2054, %v2133
        %v2150 = vmul.f32 %v2056, %v2134
        %v2151 = vmul.f32 %v2058, %v2135
        %v2152 = vmul.f32 %v2060, %v2136
        %v2153 = vmul.f32 %v2062, %v2137
        %v2154 = vmul.f32 %v2064, %v2138
        %v2155 = vmul.f32 %v2066, %v2139
        %v2156 = vmul.f32 %v2068, %v2140
        %v2157 = vmul.f32 %v2006, %v2069
        %v2158 = vmul.f32 %v2008, %v2070
        %v2159 = vmul.f32 %v2010, %v2071
        %v2160 = vmul.f32 %v2012, %v2072
        %v2161 = vmul.f32 %v2014, %v2073
        %v2162 = vmul.f32 %v2016, %v2074
        %v2163 = vmul.f32 %v2018, %v2075
        %v2164 = vmul.f32 %v2020, %v2076
        %v2165 = vadd.f32 %v2149, %v2157
        %v2166 = vadd.f32 %v2150, %v2158
        %v2167 = vadd.f32 %v2151, %v2159
        %v2168 = vadd.f32 %v2152, %v2160
        %v2169 = vadd.f32 %v2153, %v2161
        %v2170 = vadd.f32 %v2154, %v2162
        %v2171 = vadd.f32 %v2155, %v2163
        %v2172 = vadd.f32 %v2156, %v2164
        %v2173 = vtanh.pop %v2165
        %v2174 = vtanh.pop %v2166
        %v2175 = vtanh.pop %v2167
        %v2176 = vtanh.pop %v2168
        %v2177 = vtanh.pop %v2169
        %v2178 = vtanh.pop %v2170
        %v2179 = vtanh.pop %v2171
        %v2180 = vtanh.pop %v2172
        %v2181 = vmul.f32 %v2110, %v2173
        %v2182 = vmul.f32 %v2112, %v2174
        %v2183 = vmul.f32 %v2114, %v2175
        %v2184 = vmul.f32 %v2116, %v2176
        %v2185 = vmul.f32 %v2118, %v2177
        %v2186 = vmul.f32 %v2120, %v2178
        %v2187 = vmul.f32 %v2122, %v2179
        %v2188 = vmul.f32 %v2124, %v2180
        %v2197 = vrot.slane %v2182, 7
        %v2198 = vsel %vm1309, %v2197, %v2181
        %v2199 = vrot.slane %v2183, 6
        %v2200 = vsel %vm1312, %v2199, %v2198
        %v2201 = vrot.slane %v2184, 5
        %v2202 = vsel %vm1315, %v2201, %v2200
        %v2203 = vrot.slane %v2185, 4
        %v2204 = vsel %vm1318, %v2203, %v2202
        %v2205 = vrot.slane %v2186, 3
        %v2206 = vsel %vm1321, %v2205, %v2204
        %v2207 = vrot.slane %v2187, 2
        %v2208 = vsel %vm1324, %v2207, %v2206
        %v2209 = vrot.slane %v2188, 1
        %v2213 = vrot.slane %v1754, 7
        %v2215 = vpack.c.bf16 %v2209, %v2208
        %v2216 = vpack.c.bf16 %v2213, %v2213
        %v2218 = vshrl.u32 %v2215, 16
        %v2220 = vshll.u32 %v2215, 16
        %v2222 = vrot.slane %v2220, 1
        %v2223 = vor.u32 %v2218, %v2222
        %v2225 = vshrl.u32 %v2216, 16
        %v2227 = vshll.u32 %v2216, 16
        %v2229 = vrot.slane %v2227, 1
        %v2230 = vor.u32 %v2225, %v2229
        %2233 = vmatprep.subr.bf16.mxu0 %v1522
        %2234 = vmatpush1.bf16.msra.mxu0 %v1521
        %2235 = vmatprep.subr.bf16.mxu0 %v1526
        %2236 = vmatpush1.bf16.msra.mxu0 %v1525
        %2237 = vmatprep.subr.bf16.mxu0 %v1530
        %2238 = vmatpush1.bf16.msra.mxu0 %v1529
        %2239 = vmatprep.subr.bf16.mxu0 %v1534
        %2240 = vmatpush1.bf16.msra.mxu0 %v1533
        %2241 = vmatprep.subr.bf16.mxu0 %v1538
        %2242 = vmatpush1.bf16.msra.mxu0 %v1537
        %2243 = vmatprep.subr.bf16.mxu0 %v1542
        %2244 = vmatpush1.bf16.msra.mxu0 %v1541
        %2245 = vmatprep.subr.bf16.mxu0 %v1546
        %2246 = vmatpush1.bf16.msra.mxu0 %v1545
        %2247 = vmatprep.subr.bf16.mxu0 %v1550
        %2248 = vmatpush1.bf16.msra.mxu0 %v1549
        %2249 = vmatprep.subr.bf16.mxu0 %v1554
        %2250 = vmatpush1.bf16.msra.mxu0 %v1553
        %2251 = vmatprep.subr.bf16.mxu0 %v1558
        %2252 = vmatpush1.bf16.msra.mxu0 %v1557
        %2253 = vmatprep.subr.bf16.mxu0 %v1562
        %2254 = vmatpush1.bf16.msra.mxu0 %v1561
        %2255 = vmatprep.subr.bf16.mxu0 %v1566
        %2256 = vmatpush1.bf16.msra.mxu0 %v1565
        %2257 = vmatprep.subr.bf16.mxu0 %v1570
        %2258 = vmatpush1.bf16.msra.mxu0 %v1569
        %2259 = vmatprep.subr.bf16.mxu0 %v1574
        %2260 = vmatpush1.bf16.msra.mxu0 %v1573
        %2261 = vmatprep.subr.bf16.mxu0 %v1578
        %2262 = vmatpush1.bf16.msra.mxu0 %v1577
        %2263 = vmatprep.subr.bf16.mxu0 %v1582
        %2264 = vmatpush1.bf16.msra.mxu0 %v1581
        %2265 = vmatprep.mubr.bf16.mxu0 %v2230
        %2266 = vmatmul.mubr.bf16.gmra.mrb[0].mxu0 %v2223
        %v2267 = vpop.f32.mrb[0].mxu0
        %v2268 = vadd.f32 %v729, %v2267
        %v2269 = vpop.f32.mrb[0].mxu0
        %v2270 = vadd.f32 %v733, %v2269
        %v2271 = vpop.f32.mrb[0].mxu0
        %v2272 = vpop.f32.mrb[0].mxu0
        %2273 = vdwg.mxu0
        %2274 = vmatprep.subr.bf16.mxu0 %v1524
        %2275 = vmatpush1.bf16.msra.mxu0 %v1523
        %2276 = vmatprep.subr.bf16.mxu0 %v1528
        %2277 = vmatpush1.bf16.msra.mxu0 %v1527
        %2278 = vmatprep.subr.bf16.mxu0 %v1532
        %2279 = vmatpush1.bf16.msra.mxu0 %v1531
        %2280 = vmatprep.subr.bf16.mxu0 %v1536
        %2281 = vmatpush1.bf16.msra.mxu0 %v1535
        %2282 = vmatprep.subr.bf16.mxu0 %v1540
        %2283 = vmatpush1.bf16.msra.mxu0 %v1539
        %2284 = vmatprep.subr.bf16.mxu0 %v1544
        %2285 = vmatpush1.bf16.msra.mxu0 %v1543
        %2286 = vmatprep.subr.bf16.mxu0 %v1548
        %2287 = vmatpush1.bf16.msra.mxu0 %v1547
        %2288 = vmatprep.subr.bf16.mxu0 %v1552
        %2289 = vmatpush1.bf16.msra.mxu0 %v1551
        %2290 = vmatprep.subr.bf16.mxu0 %v1556
        %2291 = vmatpush1.bf16.msra.mxu0 %v1555
        %2292 = vmatprep.subr.bf16.mxu0 %v1560
        %2293 = vmatpush1.bf16.msra.mxu0 %v1559
        %2294 = vmatprep.subr.bf16.mxu0 %v1564
        %2295 = vmatpush1.bf16.msra.mxu0 %v1563
        %2296 = vmatprep.subr.bf16.mxu0 %v1568
        %2297 = vmatpush1.bf16.msra.mxu0 %v1567
        %2298 = vmatprep.subr.bf16.mxu0 %v1572
        %2299 = vmatpush1.bf16.msra.mxu0 %v1571
        %2300 = vmatprep.subr.bf16.mxu0 %v1576
        %2301 = vmatpush1.bf16.msra.mxu0 %v1575
        %2302 = vmatprep.subr.bf16.mxu0 %v1580
        %2303 = vmatpush1.bf16.msra.mxu0 %v1579
        %2304 = vmatprep.subr.bf16.mxu0 %v1584
        %2305 = vmatpush1.bf16.msra.mxu0 %v1583
        %2306 = vmatprep.mubr.bf16.mxu0 %v2230
        %2307 = vmatmul.mubr.bf16.gmra.mrb[0].mxu0 %v2223
        %v2308 = vpop.f32.mrb[0].mxu0
        %v2309 = vadd.f32 %v737, %v2308
        %v2310 = vpop.f32.mrb[0].mxu0
        %v2311 = vadd.f32 %v741, %v2310
        %v2312 = vpop.f32.mrb[0].mxu0
        %v2313 = vpop.f32.mrb[0].mxu0
        %2314 = vdwg.mxu0
        %v2315 = vxor.u32 %v2268, 2147483648
        %v2316 = vmul.f32 %v2315, 1.442695
        %v2317 = vpow.pop %v2316
        %v2318 = vadd.f32 %v2317, 1.0
        %v2319 = vrcp.pop %v2318
        %v2320 = vmul.f32 1.0, %v2319
        %v2321 = vxor.u32 %v2270, 2147483648
        %v2322 = vmul.f32 %v2321, 1.442695
        %v2323 = vpow.pop %v2322
        %v2324 = vadd.f32 %v2323, 1.0
        %v2325 = vrcp.pop %v2324
        %v2326 = vmul.f32 1.0, %v2325
        %v2327 = vtanh.pop %v2309
        %v2328 = vxor.u32 %v2311, 2147483648
        %v2329 = vmul.f32 %v2328, 1.442695
        %v2330 = vpow.pop %v2329
        %v2331 = vadd.f32 %v2330, 1.0
        %v2332 = vrcp.pop %v2331
        %v2333 = vmul.f32 1.0, %v2332
        %v2334 = vmul.f32 %v2326, %v1752
        %v2335 = vmul.f32 %v2320, %v2327
        %v2336 = vadd.f32 %v2334, %v2335
        %v2337 = vtanh.pop %v2336
        %v2338 = vmul.f32 %v2333, %v2337
        %v2339 = vpack.c.bf16 %v2181, %v2181
        %v2340 = vpack.c.bf16 %v2182, %v2182
        %v2341 = vpack.c.bf16 %v2183, %v2183
        %v2342 = vpack.c.bf16 %v2184, %v2184
        %v2343 = vpack.c.bf16 %v2185, %v2185
        %v2344 = vpack.c.bf16 %v2186, %v2186
        %v2345 = vpack.c.bf16 %v2187, %v2187
        %v2346 = vpack.c.bf16 %v2188, %v2188
        %v2355 = vunpack.c.l.b16 %v2339
        %v2356 = vunpack.c.l.b16 %v2340
        %v2357 = vunpack.c.l.b16 %v2341
        %v2358 = vunpack.c.l.b16 %v2342
        %v2359 = vunpack.c.l.b16 %v2343
        %v2360 = vunpack.c.l.b16 %v2344
        %v2361 = vunpack.c.l.b16 %v2345
        %v2362 = vunpack.c.l.b16 %v2346
        %v2363 = vrot.slane %v2355, 1
        %v2364 = vsel %vm1306, %v2356, %v2363
        %v2365 = vrot.slane %v2357, 7
        %v2366 = vsel %vm1309, %v2365, %v2364
        %v2367 = vrot.slane %v2358, 6
        %v2368 = vsel %vm1312, %v2367, %v2366
        %v2369 = vrot.slane %v2359, 5
        %v2370 = vsel %vm1315, %v2369, %v2368
        %v2371 = vrot.slane %v2360, 4
        %v2372 = vsel %vm1318, %v2371, %v2370
        %v2373 = vrot.slane %v2361, 3
        %v2374 = vsel %vm1321, %v2373, %v2372
        %v2375 = vrot.slane %v2362, 2
        %v2376 = vsel %vm1324, %v2375, %v2374
        %v2377 = vpack.c.b16 %v2376, %v2376
        %2379 = vmatprep.subr.bf16.mxu0 %v848
        %2380 = vmatpush1.bf16.msra.mxu0 %v847
        %2381 = vmatprep.subr.bf16.mxu0 %v852
        %2382 = vmatpush1.bf16.msra.mxu0 %v851
        %2383 = vmatprep.subr.bf16.mxu0 %v856
        %2384 = vmatpush1.bf16.msra.mxu0 %v855
        %2385 = vmatprep.subr.bf16.mxu0 %v860
        %2386 = vmatpush1.bf16.msra.mxu0 %v859
        %2387 = vmatprep.subr.bf16.mxu0 %v864
        %2388 = vmatpush1.bf16.msra.mxu0 %v863
        %2389 = vmatprep.subr.bf16.mxu0 %v868
        %2390 = vmatpush1.bf16.msra.mxu0 %v867
        %2391 = vmatprep.subr.bf16.mxu0 %v872
        %2392 = vmatpush1.bf16.msra.mxu0 %v871
        %2393 = vmatprep.subr.bf16.mxu0 %v876
        %2394 = vmatpush1.bf16.msra.mxu0 %v875
        %2395 = vmatprep.subr.bf16.mxu0 0
        %2396 = vmatpush1.bf16.msra.mxu0 0
        %2397 = vmatprep.subr.bf16.mxu0 0
        %2398 = vmatpush1.bf16.msra.mxu0 0
        %2399 = vmatprep.subr.bf16.mxu0 0
        %2400 = vmatpush1.bf16.msra.mxu0 0
        %2401 = vmatprep.subr.bf16.mxu0 0
        %2402 = vmatpush1.bf16.msra.mxu0 0
        %2403 = vmatprep.subr.bf16.mxu0 0
        %2404 = vmatpush1.bf16.msra.mxu0 0
        %2405 = vmatprep.subr.bf16.mxu0 0
        %2406 = vmatpush1.bf16.msra.mxu0 0
        %2407 = vmatprep.subr.bf16.mxu0 0
        %2408 = vmatpush1.bf16.msra.mxu0 0
        %2409 = vmatprep.subr.bf16.mxu0 0
        %2410 = vmatpush1.bf16.msra.mxu0 0
        %2411 = vmatprep.mubr.bf16.mxu0 0
        %2412 = vmatmul.mubr.bf16.gmra.mrb[0].mxu0 %v2377
        %v2413 = vpop.f32.mrb[0].mxu0
        %v2414 = vadd.f32 0.0, %v2413
        %v2415 = vpop.f32.mrb[0].mxu0
        %v2416 = vadd.f32 0.0, %v2415
        %v2417 = vpop.f32.mrb[0].mxu0
        %v2418 = vpop.f32.mrb[0].mxu0
        %2419 = vdwg.mxu0
        %2420 = vmatprep.subr.bf16.mxu0 %v850
        %2421 = vmatpush1.bf16.msra.mxu0 %v849
        %2422 = vmatprep.subr.bf16.mxu0 %v854
        %2423 = vmatpush1.bf16.msra.mxu0 %v853
        %2424 = vmatprep.subr.bf16.mxu0 %v858
        %2425 = vmatpush1.bf16.msra.mxu0 %v857
        %2426 = vmatprep.subr.bf16.mxu0 %v862
        %2427 = vmatpush1.bf16.msra.mxu0 %v861
        %2428 = vmatprep.subr.bf16.mxu0 %v866
        %2429 = vmatpush1.bf16.msra.mxu0 %v865
        %2430 = vmatprep.subr.bf16.mxu0 %v870
        %2431 = vmatpush1.bf16.msra.mxu0 %v869
        %2432 = vmatprep.subr.bf16.mxu0 %v874
        %2433 = vmatpush1.bf16.msra.mxu0 %v873
        %2434 = vmatprep.subr.bf16.mxu0 %v878
        %2435 = vmatpush1.bf16.msra.mxu0 %v877
        %2436 = vmatprep.subr.bf16.mxu0 0
        %2437 = vmatpush1.bf16.msra.mxu0 0
        %2438 = vmatprep.subr.bf16.mxu0 0
        %2439 = vmatpush1.bf16.msra.mxu0 0
        %2440 = vmatprep.subr.bf16.mxu0 0
        %2441 = vmatpush1.bf16.msra.mxu0 0
        %2442 = vmatprep.subr.bf16.mxu0 0
        %2443 = vmatpush1.bf16.msra.mxu0 0
        %2444 = vmatprep.subr.bf16.mxu0 0
        %2445 = vmatpush1.bf16.msra.mxu0 0
        %2446 = vmatprep.subr.bf16.mxu0 0
        %2447 = vmatpush1.bf16.msra.mxu0 0
        %2448 = vmatprep.subr.bf16.mxu0 0
        %2449 = vmatpush1.bf16.msra.mxu0 0
        %2450 = vmatprep.subr.bf16.mxu0 0
        %2451 = vmatpush1.bf16.msra.mxu0 0
        %2452 = vmatprep.mubr.bf16.mxu0 0
        %2453 = vmatmul.mubr.bf16.gmra.mrb[0].mxu0 %v2377
        %v2454 = vpop.f32.mrb[0].mxu0
        %v2455 = vadd.f32 0.0, %v2454
        %v2456 = vpop.f32.mrb[0].mxu0
        %v2457 = vadd.f32 0.0, %v2456
        %v2458 = vpop.f32.mrb[0].mxu0
        %v2459 = vpop.f32.mrb[0].mxu0
        %2460 = vdwg.mxu0
        %v2465 = vrot.slane %v2414, 6
        %v2466 = vrot.slane %v2416, 6
        %v2467 = vrot.slane %v2455, 6
        %v2468 = vrot.slane %v2457, 6
        %v2469 = vrot.slane %v2414, 7
        %v2470 = vrot.slane %v2416, 7
        %v2471 = vrot.slane %v2455, 7
        %v2472 = vrot.slane %v2457, 7
        %v2473 = vrot.slane %v2414, 1
        %v2474 = vrot.slane %v2416, 1
        %v2475 = vrot.slane %v2455, 1
        %v2476 = vrot.slane %v2457, 1
        %v2477 = vrot.slane %v2414, 2
        %v2478 = vrot.slane %v2416, 2
        %v2479 = vrot.slane %v2455, 2
        %v2480 = vrot.slane %v2457, 2
        %v2481 = vrot.slane %v2414, 3
        %v2482 = vrot.slane %v2416, 3
        %v2483 = vrot.slane %v2455, 3
        %v2484 = vrot.slane %v2457, 3
        %v2485 = vrot.slane %v2414, 4
        %v2486 = vrot.slane %v2416, 4
        %v2487 = vrot.slane %v2455, 4
        %v2488 = vrot.slane %v2457, 4
        %v2489 = vrot.slane %v2414, 5
        %v2490 = vrot.slane %v2416, 5
        %v2491 = vrot.slane %v2455, 5
        %v2492 = vrot.slane %v2457, 5
        %v2525 = vadd.f32 %v517, %v2465
        %v2526 = vadd.f32 %v519, %v2466
        %v2527 = vadd.f32 %v590, %v2467
        %v2528 = vadd.f32 %v592, %v2468
        %v2529 = vadd.f32 %v521, %v2469
        %v2530 = vadd.f32 %v523, %v2470
        %v2531 = vadd.f32 %v594, %v2471
        %v2532 = vadd.f32 %v596, %v2472
        %v2533 = vadd.f32 %v527, %v2414
        %v2534 = vadd.f32 %v529, %v2416
        %v2535 = vadd.f32 %v600, %v2455
        %v2536 = vadd.f32 %v602, %v2457
        %v2537 = vadd.f32 %v531, %v2473
        %v2538 = vadd.f32 %v533, %v2474
        %v2539 = vadd.f32 %v604, %v2475
        %v2540 = vadd.f32 %v606, %v2476
        %v2541 = vadd.f32 %v537, %v2477
        %v2542 = vadd.f32 %v539, %v2478
        %v2543 = vadd.f32 %v610, %v2479
        %v2544 = vadd.f32 %v612, %v2480
        %v2545 = vadd.f32 %v541, %v2481
        %v2546 = vadd.f32 %v543, %v2482
        %v2547 = vadd.f32 %v614, %v2483
        %v2548 = vadd.f32 %v616, %v2484
        %v2549 = vadd.f32 %v547, %v2485
        %v2550 = vadd.f32 %v549, %v2486
        %v2551 = vadd.f32 %v620, %v2487
        %v2552 = vadd.f32 %v622, %v2488
        %v2553 = vadd.f32 %v551, %v2489
        %v2554 = vadd.f32 %v553, %v2490
        %v2555 = vadd.f32 %v624, %v2491
        %v2556 = vadd.f32 %v626, %v2492
        %v2557 = vxor.u32 %v2525, 2147483648
        %v2558 = vxor.u32 %v2529, 2147483648
        %v2559 = vxor.u32 %v2533, 2147483648
        %v2560 = vxor.u32 %v2537, 2147483648
        %v2561 = vxor.u32 %v2541, 2147483648
        %v2562 = vxor.u32 %v2545, 2147483648
        %v2563 = vxor.u32 %v2549, 2147483648
        %v2564 = vxor.u32 %v2553, 2147483648
        %v2565 = vmul.f32 %v2557, 1.442695
        %v2566 = vpow.pop %v2565
        %v2567 = vmul.f32 %v2558, 1.442695
        %v2568 = vpow.pop %v2567
        %v2569 = vmul.f32 %v2559, 1.442695
        %v2570 = vpow.pop %v2569
        %v2571 = vmul.f32 %v2560, 1.442695
        %v2572 = vpow.pop %v2571
        %v2573 = vmul.f32 %v2561, 1.442695
        %v2574 = vpow.pop %v2573
        %v2575 = vmul.f32 %v2562, 1.442695
        %v2576 = vpow.pop %v2575
        %v2577 = vmul.f32 %v2563, 1.442695
        %v2578 = vpow.pop %v2577
        %v2579 = vmul.f32 %v2564, 1.442695
        %v2580 = vpow.pop %v2579
        %v2581 = vadd.f32 %v2566, 1.0
        %v2582 = vadd.f32 %v2568, 1.0
        %v2583 = vadd.f32 %v2570, 1.0
        %v2584 = vadd.f32 %v2572, 1.0
        %v2585 = vadd.f32 %v2574, 1.0
        %v2586 = vadd.f32 %v2576, 1.0
        %v2587 = vadd.f32 %v2578, 1.0
        %v2588 = vadd.f32 %v2580, 1.0
        %v2589 = vrcp.pop %v2581
        %v2590 = vmul.f32 1.0, %v2589
        %v2591 = vrcp.pop %v2582
        %v2592 = vmul.f32 1.0, %v2591
        %v2593 = vrcp.pop %v2583
        %v2594 = vmul.f32 1.0, %v2593
        %v2595 = vrcp.pop %v2584
        %v2596 = vmul.f32 1.0, %v2595
        %v2597 = vrcp.pop %v2585
        %v2598 = vmul.f32 1.0, %v2597
        %v2599 = vrcp.pop %v2586
        %v2600 = vmul.f32 1.0, %v2599
        %v2601 = vrcp.pop %v2587
        %v2602 = vmul.f32 1.0, %v2601
        %v2603 = vrcp.pop %v2588
        %v2604 = vmul.f32 1.0, %v2603
        %v2605 = vxor.u32 %v2526, 2147483648
        %v2606 = vxor.u32 %v2530, 2147483648
        %v2607 = vxor.u32 %v2534, 2147483648
        %v2608 = vxor.u32 %v2538, 2147483648
        %v2609 = vxor.u32 %v2542, 2147483648
        %v2610 = vxor.u32 %v2546, 2147483648
        %v2611 = vxor.u32 %v2550, 2147483648
        %v2612 = vxor.u32 %v2554, 2147483648
        %v2613 = vmul.f32 %v2605, 1.442695
        %v2614 = vpow.pop %v2613
        %v2615 = vmul.f32 %v2606, 1.442695
        %v2616 = vpow.pop %v2615
        %v2617 = vmul.f32 %v2607, 1.442695
        %v2618 = vpow.pop %v2617
        %v2619 = vmul.f32 %v2608, 1.442695
        %v2620 = vpow.pop %v2619
        %v2621 = vmul.f32 %v2609, 1.442695
        %v2622 = vpow.pop %v2621
        %v2623 = vmul.f32 %v2610, 1.442695
        %v2624 = vpow.pop %v2623
        %v2625 = vmul.f32 %v2611, 1.442695
        %v2626 = vpow.pop %v2625
        %v2627 = vmul.f32 %v2612, 1.442695
        %v2628 = vpow.pop %v2627
        %v2629 = vadd.f32 %v2614, 1.0
        %v2630 = vadd.f32 %v2616, 1.0
        %v2631 = vadd.f32 %v2618, 1.0
        %v2632 = vadd.f32 %v2620, 1.0
        %v2633 = vadd.f32 %v2622, 1.0
        %v2634 = vadd.f32 %v2624, 1.0
        %v2635 = vadd.f32 %v2626, 1.0
        %v2636 = vadd.f32 %v2628, 1.0
        %v2637 = vrcp.pop %v2629
        %v2638 = vmul.f32 1.0, %v2637
        %v2639 = vrcp.pop %v2630
        %v2640 = vmul.f32 1.0, %v2639
        %v2641 = vrcp.pop %v2631
        %v2642 = vmul.f32 1.0, %v2641
        %v2643 = vrcp.pop %v2632
        %v2644 = vmul.f32 1.0, %v2643
        %v2645 = vrcp.pop %v2633
        %v2646 = vmul.f32 1.0, %v2645
        %v2647 = vrcp.pop %v2634
        %v2648 = vmul.f32 1.0, %v2647
        %v2649 = vrcp.pop %v2635
        %v2650 = vmul.f32 1.0, %v2649
        %v2651 = vrcp.pop %v2636
        %v2652 = vmul.f32 1.0, %v2651
        %v2653 = vtanh.pop %v2527
        %v2654 = vtanh.pop %v2531
        %v2655 = vtanh.pop %v2535
        %v2656 = vtanh.pop %v2539
        %v2657 = vtanh.pop %v2543
        %v2658 = vtanh.pop %v2547
        %v2659 = vtanh.pop %v2551
        %v2660 = vtanh.pop %v2555
        %v2661 = vxor.u32 %v2528, 2147483648
        %v2662 = vxor.u32 %v2532, 2147483648
        %v2663 = vxor.u32 %v2536, 2147483648
        %v2664 = vxor.u32 %v2540, 2147483648
        %v2665 = vxor.u32 %v2544, 2147483648
        %v2666 = vxor.u32 %v2548, 2147483648
        %v2667 = vxor.u32 %v2552, 2147483648
        %v2668 = vxor.u32 %v2556, 2147483648
        %v2669 = vmul.f32 %v2661, 1.442695
        %v2670 = vpow.pop %v2669
        %v2671 = vmul.f32 %v2662, 1.442695
        %v2672 = vpow.pop %v2671
        %v2673 = vmul.f32 %v2663, 1.442695
        %v2674 = vpow.pop %v2673
        %v2675 = vmul.f32 %v2664, 1.442695
        %v2676 = vpow.pop %v2675
        %v2677 = vmul.f32 %v2665, 1.442695
        %v2678 = vpow.pop %v2677
        %v2679 = vmul.f32 %v2666, 1.442695
        %v2680 = vpow.pop %v2679
        %v2681 = vmul.f32 %v2667, 1.442695
        %v2682 = vpow.pop %v2681
        %v2683 = vmul.f32 %v2668, 1.442695
        %v2684 = vpow.pop %v2683
        %v2685 = vadd.f32 %v2670, 1.0
        %v2686 = vadd.f32 %v2672, 1.0
        %v2687 = vadd.f32 %v2674, 1.0
        %v2688 = vadd.f32 %v2676, 1.0
        %v2689 = vadd.f32 %v2678, 1.0
        %v2690 = vadd.f32 %v2680, 1.0
        %v2691 = vadd.f32 %v2682, 1.0
        %v2692 = vadd.f32 %v2684, 1.0
        %v2693 = vrcp.pop %v2685
        %v2694 = vmul.f32 1.0, %v2693
        %v2695 = vrcp.pop %v2686
        %v2696 = vmul.f32 1.0, %v2695
        %v2697 = vrcp.pop %v2687
        %v2698 = vmul.f32 1.0, %v2697
        %v2699 = vrcp.pop %v2688
        %v2700 = vmul.f32 1.0, %v2699
        %v2701 = vrcp.pop %v2689
        %v2702 = vmul.f32 1.0, %v2701
        %v2703 = vrcp.pop %v2690
        %v2704 = vmul.f32 1.0, %v2703
        %v2705 = vrcp.pop %v2691
        %v2706 = vmul.f32 1.0, %v2705
        %v2707 = vrcp.pop %v2692
        %v2708 = vmul.f32 1.0, %v2707
        %v2717 = vrot.slane %v2165, 7
        %v2718 = vrot.slane %v2166, 7
        %v2719 = vrot.slane %v2167, 7
        %v2720 = vrot.slane %v2168, 7
        %v2721 = vrot.slane %v2169, 7
        %v2722 = vrot.slane %v2170, 7
        %v2723 = vrot.slane %v2171, 7
        %v2724 = vrot.slane %v2172, 7
        %v2733 = vmul.f32 %v2638, %v2717
        %v2734 = vmul.f32 %v2640, %v2718
        %v2735 = vmul.f32 %v2642, %v2719
        %v2736 = vmul.f32 %v2644, %v2720
        %v2737 = vmul.f32 %v2646, %v2721
        %v2738 = vmul.f32 %v2648, %v2722
        %v2739 = vmul.f32 %v2650, %v2723
        %v2740 = vmul.f32 %v2652, %v2724
        %v2741 = vmul.f32 %v2590, %v2653
        %v2742 = vmul.f32 %v2592, %v2654
        %v2743 = vmul.f32 %v2594, %v2655
        %v2744 = vmul.f32 %v2596, %v2656
        %v2745 = vmul.f32 %v2598, %v2657
        %v2746 = vmul.f32 %v2600, %v2658
        %v2747 = vmul.f32 %v2602, %v2659
        %v2748 = vmul.f32 %v2604, %v2660
        %v2749 = vadd.f32 %v2733, %v2741
        %v2750 = vadd.f32 %v2734, %v2742
        %v2751 = vadd.f32 %v2735, %v2743
        %v2752 = vadd.f32 %v2736, %v2744
        %v2753 = vadd.f32 %v2737, %v2745
        %v2754 = vadd.f32 %v2738, %v2746
        %v2755 = vadd.f32 %v2739, %v2747
        %v2756 = vadd.f32 %v2740, %v2748
        %v2757 = vtanh.pop %v2749
        %v2758 = vtanh.pop %v2750
        %v2759 = vtanh.pop %v2751
        %v2760 = vtanh.pop %v2752
        %v2761 = vtanh.pop %v2753
        %v2762 = vtanh.pop %v2754
        %v2763 = vtanh.pop %v2755
        %v2764 = vtanh.pop %v2756
        %v2765 = vmul.f32 %v2694, %v2757
        %v2766 = vmul.f32 %v2696, %v2758
        %v2767 = vmul.f32 %v2698, %v2759
        %v2768 = vmul.f32 %v2700, %v2760
        %v2769 = vmul.f32 %v2702, %v2761
        %v2770 = vmul.f32 %v2704, %v2762
        %v2771 = vmul.f32 %v2706, %v2763
        %v2772 = vmul.f32 %v2708, %v2764
        %v2781 = vrot.slane %v2766, 7
        %v2782 = vsel %vm1312, %v2781, %v2765
        %v2783 = vrot.slane %v2767, 6
        %v2784 = vsel %vm1315, %v2783, %v2782
        %v2785 = vrot.slane %v2768, 5
        %v2786 = vsel %vm1318, %v2785, %v2784
        %v2787 = vrot.slane %v2769, 4
        %v2788 = vsel %vm1321, %v2787, %v2786
        %v2789 = vrot.slane %v2770, 3
        %v2790 = vsel %vm1324, %v2789, %v2788
        %v2791 = vrot.slane %v2771, 2
        %v2792 = vrot.slane %v2772, 1
        %v2793 = vsel %vm1306, %v2792, %v2791
        %v2797 = vrot.slane %v2338, 6
        %v2799 = vpack.c.bf16 %v2793, %v2790
        %v2800 = vpack.c.bf16 %v2797, %v2797
        %v2803 = vrot.slane %v2799, 1
        %v2804 = vrot.slane %v2800, 1
        %2807 = vmatprep.subr.bf16.mxu0 %v1522
        %2808 = vmatpush1.bf16.msra.mxu0 %v1521
        %2809 = vmatprep.subr.bf16.mxu0 %v1526
        %2810 = vmatpush1.bf16.msra.mxu0 %v1525
        %2811 = vmatprep.subr.bf16.mxu0 %v1530
        %2812 = vmatpush1.bf16.msra.mxu0 %v1529
        %2813 = vmatprep.subr.bf16.mxu0 %v1534
        %2814 = vmatpush1.bf16.msra.mxu0 %v1533
        %2815 = vmatprep.subr.bf16.mxu0 %v1538
        %2816 = vmatpush1.bf16.msra.mxu0 %v1537
        %2817 = vmatprep.subr.bf16.mxu0 %v1542
        %2818 = vmatpush1.bf16.msra.mxu0 %v1541
        %2819 = vmatprep.subr.bf16.mxu0 %v1546
        %2820 = vmatpush1.bf16.msra.mxu0 %v1545
        %2821 = vmatprep.subr.bf16.mxu0 %v1550
        %2822 = vmatpush1.bf16.msra.mxu0 %v1549
        %2823 = vmatprep.subr.bf16.mxu0 %v1554
        %2824 = vmatpush1.bf16.msra.mxu0 %v1553
        %2825 = vmatprep.subr.bf16.mxu0 %v1558
        %2826 = vmatpush1.bf16.msra.mxu0 %v1557
        %2827 = vmatprep.subr.bf16.mxu0 %v1562
        %2828 = vmatpush1.bf16.msra.mxu0 %v1561
        %2829 = vmatprep.subr.bf16.mxu0 %v1566
        %2830 = vmatpush1.bf16.msra.mxu0 %v1565
        %2831 = vmatprep.subr.bf16.mxu0 %v1570
        %2832 = vmatpush1.bf16.msra.mxu0 %v1569
        %2833 = vmatprep.subr.bf16.mxu0 %v1574
        %2834 = vmatpush1.bf16.msra.mxu0 %v1573
        %2835 = vmatprep.subr.bf16.mxu0 %v1578
        %2836 = vmatpush1.bf16.msra.mxu0 %v1577
        %2837 = vmatprep.subr.bf16.mxu0 %v1582
        %2838 = vmatpush1.bf16.msra.mxu0 %v1581
        %2839 = vmatprep.mubr.bf16.mxu0 %v2804
        %2840 = vmatmul.mubr.bf16.gmra.mrb[0].mxu0 %v2803
        %v2841 = vpop.f32.mrb[0].mxu0
        %v2842 = vadd.f32 %v729, %v2841
        %v2843 = vpop.f32.mrb[0].mxu0
        %v2844 = vadd.f32 %v733, %v2843
        %v2845 = vpop.f32.mrb[0].mxu0
        %v2846 = vpop.f32.mrb[0].mxu0
        %2847 = vdwg.mxu0
        %2848 = vmatprep.subr.bf16.mxu0 %v1524
        %2849 = vmatpush1.bf16.msra.mxu0 %v1523
        %2850 = vmatprep.subr.bf16.mxu0 %v1528
        %2851 = vmatpush1.bf16.msra.mxu0 %v1527
        %2852 = vmatprep.subr.bf16.mxu0 %v1532
        %2853 = vmatpush1.bf16.msra.mxu0 %v1531
        %2854 = vmatprep.subr.bf16.mxu0 %v1536
        %2855 = vmatpush1.bf16.msra.mxu0 %v1535
        %2856 = vmatprep.subr.bf16.mxu0 %v1540
        %2857 = vmatpush1.bf16.msra.mxu0 %v1539
        %2858 = vmatprep.subr.bf16.mxu0 %v1544
        %2859 = vmatpush1.bf16.msra.mxu0 %v1543
        %2860 = vmatprep.subr.bf16.mxu0 %v1548
        %2861 = vmatpush1.bf16.msra.mxu0 %v1547
        %2862 = vmatprep.subr.bf16.mxu0 %v1552
        %2863 = vmatpush1.bf16.msra.mxu0 %v1551
        %2864 = vmatprep.subr.bf16.mxu0 %v1556
        %2865 = vmatpush1.bf16.msra.mxu0 %v1555
        %2866 = vmatprep.subr.bf16.mxu0 %v1560
        %2867 = vmatpush1.bf16.msra.mxu0 %v1559
        %2868 = vmatprep.subr.bf16.mxu0 %v1564
        %2869 = vmatpush1.bf16.msra.mxu0 %v1563
        %2870 = vmatprep.subr.bf16.mxu0 %v1568
        %2871 = vmatpush1.bf16.msra.mxu0 %v1567
        %2872 = vmatprep.subr.bf16.mxu0 %v1572
        %2873 = vmatpush1.bf16.msra.mxu0 %v1571
        %2874 = vmatprep.subr.bf16.mxu0 %v1576
        %2875 = vmatpush1.bf16.msra.mxu0 %v1575
        %2876 = vmatprep.subr.bf16.mxu0 %v1580
        %2877 = vmatpush1.bf16.msra.mxu0 %v1579
        %2878 = vmatprep.subr.bf16.mxu0 %v1584
        %2879 = vmatpush1.bf16.msra.mxu0 %v1583
        %2880 = vmatprep.mubr.bf16.mxu0 %v2804
        %2881 = vmatmul.mubr.bf16.gmra.mrb[0].mxu0 %v2803
        %v2882 = vpop.f32.mrb[0].mxu0
        %v2883 = vadd.f32 %v737, %v2882
        %v2884 = vpop.f32.mrb[0].mxu0
        %v2885 = vadd.f32 %v741, %v2884
        %v2886 = vpop.f32.mrb[0].mxu0
        %v2887 = vpop.f32.mrb[0].mxu0
        %2888 = vdwg.mxu0
        %v2889 = vxor.u32 %v2842, 2147483648
        %v2890 = vmul.f32 %v2889, 1.442695
        %v2891 = vpow.pop %v2890
        %v2892 = vadd.f32 %v2891, 1.0
        %v2893 = vrcp.pop %v2892
        %v2894 = vmul.f32 1.0, %v2893
        %v2895 = vxor.u32 %v2844, 2147483648
        %v2896 = vmul.f32 %v2895, 1.442695
        %v2897 = vpow.pop %v2896
        %v2898 = vadd.f32 %v2897, 1.0
        %v2899 = vrcp.pop %v2898
        %v2900 = vmul.f32 1.0, %v2899
        %v2901 = vtanh.pop %v2883
        %v2902 = vxor.u32 %v2885, 2147483648
        %v2903 = vmul.f32 %v2902, 1.442695
        %v2904 = vpow.pop %v2903
        %v2905 = vadd.f32 %v2904, 1.0
        %v2906 = vrcp.pop %v2905
        %v2907 = vmul.f32 1.0, %v2906
        %v2908 = vmul.f32 %v2900, %v2336
        %v2909 = vmul.f32 %v2894, %v2901
        %v2910 = vadd.f32 %v2908, %v2909
        %v2911 = vtanh.pop %v2910
        %v2912 = vmul.f32 %v2907, %v2911
        %v2913 = vpack.c.bf16 %v2765, %v2765
        %v2914 = vpack.c.bf16 %v2766, %v2766
        %v2915 = vpack.c.bf16 %v2767, %v2767
        %v2916 = vpack.c.bf16 %v2768, %v2768
        %v2917 = vpack.c.bf16 %v2769, %v2769
        %v2918 = vpack.c.bf16 %v2770, %v2770
        %v2919 = vpack.c.bf16 %v2771, %v2771
        %v2920 = vpack.c.bf16 %v2772, %v2772
        %v2929 = vunpack.c.l.b16 %v2913
        %v2930 = vunpack.c.l.b16 %v2914
        %v2931 = vunpack.c.l.b16 %v2915
        %v2932 = vunpack.c.l.b16 %v2916
        %v2933 = vunpack.c.l.b16 %v2917
        %v2934 = vunpack.c.l.b16 %v2918
        %v2935 = vunpack.c.l.b16 %v2919
        %v2936 = vunpack.c.l.b16 %v2920
        %v2937 = vrot.slane %v2929, 2
        %v2938 = vrot.slane %v2930, 1
        %v2939 = vsel %vm1306, %v2938, %v2937
        %v2940 = vsel %vm1309, %v2931, %v2939
        %v2941 = vrot.slane %v2932, 7
        %v2942 = vsel %vm1312, %v2941, %v2940
        %v2943 = vrot.slane %v2933, 6
        %v2944 = vsel %vm1315, %v2943, %v2942
        %v2945 = vrot.slane %v2934, 5
        %v2946 = vsel %vm1318, %v2945, %v2944
        %v2947 = vrot.slane %v2935, 4
        %v2948 = vsel %vm1321, %v2947, %v2946
        %v2949 = vrot.slane %v2936, 3
        %v2950 = vsel %vm1324, %v2949, %v2948
        %v2951 = vpack.c.b16 %v2950, %v2950
        %2953 = vmatprep.subr.bf16.mxu0 %v848
        %2954 = vmatpush1.bf16.msra.mxu0 %v847
        %2955 = vmatprep.subr.bf16.mxu0 %v852
        %2956 = vmatpush1.bf16.msra.mxu0 %v851
        %2957 = vmatprep.subr.bf16.mxu0 %v856
        %2958 = vmatpush1.bf16.msra.mxu0 %v855
        %2959 = vmatprep.subr.bf16.mxu0 %v860
        %2960 = vmatpush1.bf16.msra.mxu0 %v859
        %2961 = vmatprep.subr.bf16.mxu0 %v864
        %2962 = vmatpush1.bf16.msra.mxu0 %v863
        %2963 = vmatprep.subr.bf16.mxu0 %v868
        %2964 = vmatpush1.bf16.msra.mxu0 %v867
        %2965 = vmatprep.subr.bf16.mxu0 %v872
        %2966 = vmatpush1.bf16.msra.mxu0 %v871
        %2967 = vmatprep.subr.bf16.mxu0 %v876
        %2968 = vmatpush1.bf16.msra.mxu0 %v875
        %2969 = vmatprep.subr.bf16.mxu0 0
        %2970 = vmatpush1.bf16.msra.mxu0 0
        %2971 = vmatprep.subr.bf16.mxu0 0
        %2972 = vmatpush1.bf16.msra.mxu0 0
        %2973 = vmatprep.subr.bf16.mxu0 0
        %2974 = vmatpush1.bf16.msra.mxu0 0
        %2975 = vmatprep.subr.bf16.mxu0 0
        %2976 = vmatpush1.bf16.msra.mxu0 0
        %2977 = vmatprep.subr.bf16.mxu0 0
        %2978 = vmatpush1.bf16.msra.mxu0 0
        %2979 = vmatprep.subr.bf16.mxu0 0
        %2980 = vmatpush1.bf16.msra.mxu0 0
        %2981 = vmatprep.subr.bf16.mxu0 0
        %2982 = vmatpush1.bf16.msra.mxu0 0
        %2983 = vmatprep.subr.bf16.mxu0 0
        %2984 = vmatpush1.bf16.msra.mxu0 0
        %2985 = vmatprep.mubr.bf16.mxu0 0
        %2986 = vmatmul.mubr.bf16.gmra.mrb[0].mxu0 %v2951
        %v2987 = vpop.f32.mrb[0].mxu0
        %v2988 = vadd.f32 0.0, %v2987
        %v2989 = vpop.f32.mrb[0].mxu0
        %v2990 = vadd.f32 0.0, %v2989
        %v2991 = vpop.f32.mrb[0].mxu0
        %v2992 = vpop.f32.mrb[0].mxu0
        %2993 = vdwg.mxu0
        %2994 = vmatprep.subr.bf16.mxu0 %v850
        %2995 = vmatpush1.bf16.msra.mxu0 %v849
        %2996 = vmatprep.subr.bf16.mxu0 %v854
        %2997 = vmatpush1.bf16.msra.mxu0 %v853
        %2998 = vmatprep.subr.bf16.mxu0 %v858
        %2999 = vmatpush1.bf16.msra.mxu0 %v857
        %3000 = vmatprep.subr.bf16.mxu0 %v862
        %3001 = vmatpush1.bf16.msra.mxu0 %v861
        %3002 = vmatprep.subr.bf16.mxu0 %v866
        %3003 = vmatpush1.bf16.msra.mxu0 %v865
        %3004 = vmatprep.subr.bf16.mxu0 %v870
        %3005 = vmatpush1.bf16.msra.mxu0 %v869
        %3006 = vmatprep.subr.bf16.mxu0 %v874
        %3007 = vmatpush1.bf16.msra.mxu0 %v873
        %3008 = vmatprep.subr.bf16.mxu0 %v878
        %3009 = vmatpush1.bf16.msra.mxu0 %v877
        %3010 = vmatprep.subr.bf16.mxu0 0
        %3011 = vmatpush1.bf16.msra.mxu0 0
        %3012 = vmatprep.subr.bf16.mxu0 0
        %3013 = vmatpush1.bf16.msra.mxu0 0
        %3014 = vmatprep.subr.bf16.mxu0 0
        %3015 = vmatpush1.bf16.msra.mxu0 0
        %3016 = vmatprep.subr.bf16.mxu0 0
        %3017 = vmatpush1.bf16.msra.mxu0 0
        %3018 = vmatprep.subr.bf16.mxu0 0
        %3019 = vmatpush1.bf16.msra.mxu0 0
        %3020 = vmatprep.subr.bf16.mxu0 0
        %3021 = vmatpush1.bf16.msra.mxu0 0
        %3022 = vmatprep.subr.bf16.mxu0 0
        %3023 = vmatpush1.bf16.msra.mxu0 0
        %3024 = vmatprep.subr.bf16.mxu0 0
        %3025 = vmatpush1.bf16.msra.mxu0 0
        %3026 = vmatprep.mubr.bf16.mxu0 0
        %3027 = vmatmul.mubr.bf16.gmra.mrb[0].mxu0 %v2951
        %v3028 = vpop.f32.mrb[0].mxu0
        %v3029 = vadd.f32 0.0, %v3028
        %v3030 = vpop.f32.mrb[0].mxu0
        %v3031 = vadd.f32 0.0, %v3030
        %v3032 = vpop.f32.mrb[0].mxu0
        %v3033 = vpop.f32.mrb[0].mxu0
        %3034 = vdwg.mxu0
        %v3039 = vrot.slane %v2988, 5
        %v3040 = vrot.slane %v2990, 5
        %v3041 = vrot.slane %v3029, 5
        %v3042 = vrot.slane %v3031, 5
        %v3043 = vrot.slane %v2988, 6
        %v3044 = vrot.slane %v2990, 6
        %v3045 = vrot.slane %v3029, 6
        %v3046 = vrot.slane %v3031, 6
        %v3047 = vrot.slane %v2988, 7
        %v3048 = vrot.slane %v2990, 7
        %v3049 = vrot.slane %v3029, 7
        %v3050 = vrot.slane %v3031, 7
        %v3051 = vrot.slane %v2988, 1
        %v3052 = vrot.slane %v2990, 1
        %v3053 = vrot.slane %v3029, 1
        %v3054 = vrot.slane %v3031, 1
        %v3055 = vrot.slane %v2988, 2
        %v3056 = vrot.slane %v2990, 2
        %v3057 = vrot.slane %v3029, 2
        %v3058 = vrot.slane %v3031, 2
        %v3059 = vrot.slane %v2988, 3
        %v3060 = vrot.slane %v2990, 3
        %v3061 = vrot.slane %v3029, 3
        %v3062 = vrot.slane %v3031, 3
        %v3063 = vrot.slane %v2988, 4
        %v3064 = vrot.slane %v2990, 4
        %v3065 = vrot.slane %v3029, 4
        %v3066 = vrot.slane %v3031, 4
        %v3099 = vadd.f32 %v517, %v3039
        %v3100 = vadd.f32 %v519, %v3040
        %v3101 = vadd.f32 %v590, %v3041
        %v3102 = vadd.f32 %v592, %v3042
        %v3103 = vadd.f32 %v521, %v3043
        %v3104 = vadd.f32 %v523, %v3044
        %v3105 = vadd.f32 %v594, %v3045
        %v3106 = vadd.f32 %v596, %v3046
        %v3107 = vadd.f32 %v527, %v3047
        %v3108 = vadd.f32 %v529, %v3048
        %v3109 = vadd.f32 %v600, %v3049
        %v3110 = vadd.f32 %v602, %v3050
        %v3111 = vadd.f32 %v531, %v2988
        %v3112 = vadd.f32 %v533, %v2990
        %v3113 = vadd.f32 %v604, %v3029
        %v3114 = vadd.f32 %v606, %v3031
        %v3115 = vadd.f32 %v537, %v3051
        %v3116 = vadd.f32 %v539, %v3052
        %v3117 = vadd.f32 %v610, %v3053
        %v3118 = vadd.f32 %v612, %v3054
        %v3119 = vadd.f32 %v541, %v3055
        %v3120 = vadd.f32 %v543, %v3056
        %v3121 = vadd.f32 %v614, %v3057
        %v3122 = vadd.f32 %v616, %v3058
        %v3123 = vadd.f32 %v547, %v3059
        %v3124 = vadd.f32 %v549, %v3060
        %v3125 = vadd.f32 %v620, %v3061
        %v3126 = vadd.f32 %v622, %v3062
        %v3127 = vadd.f32 %v551, %v3063
        %v3128 = vadd.f32 %v553, %v3064
        %v3129 = vadd.f32 %v624, %v3065
        %v3130 = vadd.f32 %v626, %v3066
        %v3131 = vxor.u32 %v3099, 2147483648
        %v3132 = vxor.u32 %v3103, 2147483648
        %v3133 = vxor.u32 %v3107, 2147483648
        %v3134 = vxor.u32 %v3111, 2147483648
        %v3135 = vxor.u32 %v3115, 2147483648
        %v3136 = vxor.u32 %v3119, 2147483648
        %v3137 = vxor.u32 %v3123, 2147483648
        %v3138 = vxor.u32 %v3127, 2147483648
        %v3139 = vmul.f32 %v3131, 1.442695
        %v3140 = vpow.pop %v3139
        %v3141 = vmul.f32 %v3132, 1.442695
        %v3142 = vpow.pop %v3141
        %v3143 = vmul.f32 %v3133, 1.442695
        %v3144 = vpow.pop %v3143
        %v3145 = vmul.f32 %v3134, 1.442695
        %v3146 = vpow.pop %v3145
        %v3147 = vmul.f32 %v3135, 1.442695
        %v3148 = vpow.pop %v3147
        %v3149 = vmul.f32 %v3136, 1.442695
        %v3150 = vpow.pop %v3149
        %v3151 = vmul.f32 %v3137, 1.442695
        %v3152 = vpow.pop %v3151
        %v3153 = vmul.f32 %v3138, 1.442695
        %v3154 = vpow.pop %v3153
        %v3155 = vadd.f32 %v3140, 1.0
        %v3156 = vadd.f32 %v3142, 1.0
        %v3157 = vadd.f32 %v3144, 1.0
        %v3158 = vadd.f32 %v3146, 1.0
        %v3159 = vadd.f32 %v3148, 1.0
        %v3160 = vadd.f32 %v3150, 1.0
        %v3161 = vadd.f32 %v3152, 1.0
        %v3162 = vadd.f32 %v3154, 1.0
        %v3163 = vrcp.pop %v3155
        %v3164 = vmul.f32 1.0, %v3163
        %v3165 = vrcp.pop %v3156
        %v3166 = vmul.f32 1.0, %v3165
        %v3167 = vrcp.pop %v3157
        %v3168 = vmul.f32 1.0, %v3167
        %v3169 = vrcp.pop %v3158
        %v3170 = vmul.f32 1.0, %v3169
        %v3171 = vrcp.pop %v3159
        %v3172 = vmul.f32 1.0, %v3171
        %v3173 = vrcp.pop %v3160
        %v3174 = vmul.f32 1.0, %v3173
        %v3175 = vrcp.pop %v3161
        %v3176 = vmul.f32 1.0, %v3175
        %v3177 = vrcp.pop %v3162
        %v3178 = vmul.f32 1.0, %v3177
        %v3179 = vxor.u32 %v3100, 2147483648
        %v3180 = vxor.u32 %v3104, 2147483648
        %v3181 = vxor.u32 %v3108, 2147483648
        %v3182 = vxor.u32 %v3112, 2147483648
        %v3183 = vxor.u32 %v3116, 2147483648
        %v3184 = vxor.u32 %v3120, 2147483648
        %v3185 = vxor.u32 %v3124, 2147483648
        %v3186 = vxor.u32 %v3128, 2147483648
        %v3187 = vmul.f32 %v3179, 1.442695
        %v3188 = vpow.pop %v3187
        %v3189 = vmul.f32 %v3180, 1.442695
        %v3190 = vpow.pop %v3189
        %v3191 = vmul.f32 %v3181, 1.442695
        %v3192 = vpow.pop %v3191
        %v3193 = vmul.f32 %v3182, 1.442695
        %v3194 = vpow.pop %v3193
        %v3195 = vmul.f32 %v3183, 1.442695
        %v3196 = vpow.pop %v3195
        %v3197 = vmul.f32 %v3184, 1.442695
        %v3198 = vpow.pop %v3197
        %v3199 = vmul.f32 %v3185, 1.442695
        %v3200 = vpow.pop %v3199
        %v3201 = vmul.f32 %v3186, 1.442695
        %v3202 = vpow.pop %v3201
        %v3203 = vadd.f32 %v3188, 1.0
        %v3204 = vadd.f32 %v3190, 1.0
        %v3205 = vadd.f32 %v3192, 1.0
        %v3206 = vadd.f32 %v3194, 1.0
        %v3207 = vadd.f32 %v3196, 1.0
        %v3208 = vadd.f32 %v3198, 1.0
        %v3209 = vadd.f32 %v3200, 1.0
        %v3210 = vadd.f32 %v3202, 1.0
        %v3211 = vrcp.pop %v3203
        %v3212 = vmul.f32 1.0, %v3211
        %v3213 = vrcp.pop %v3204
        %v3214 = vmul.f32 1.0, %v3213
        %v3215 = vrcp.pop %v3205
        %v3216 = vmul.f32 1.0, %v3215
        %v3217 = vrcp.pop %v3206
        %v3218 = vmul.f32 1.0, %v3217
        %v3219 = vrcp.pop %v3207
        %v3220 = vmul.f32 1.0, %v3219
        %v3221 = vrcp.pop %v3208
        %v3222 = vmul.f32 1.0, %v3221
        %v3223 = vrcp.pop %v3209
        %v3224 = vmul.f32 1.0, %v3223
        %v3225 = vrcp.pop %v3210
        %v3226 = vmul.f32 1.0, %v3225
        %v3227 = vtanh.pop %v3101
        %v3228 = vtanh.pop %v3105
        %v3229 = vtanh.pop %v3109
        %v3230 = vtanh.pop %v3113
        %v3231 = vtanh.pop %v3117
        %v3232 = vtanh.pop %v3121
        %v3233 = vtanh.pop %v3125
        %v3234 = vtanh.pop %v3129
        %v3235 = vxor.u32 %v3102, 2147483648
        %v3236 = vxor.u32 %v3106, 2147483648
        %v3237 = vxor.u32 %v3110, 2147483648
        %v3238 = vxor.u32 %v3114, 2147483648
        %v3239 = vxor.u32 %v3118, 2147483648
        %v3240 = vxor.u32 %v3122, 2147483648
        %v3241 = vxor.u32 %v3126, 2147483648
        %v3242 = vxor.u32 %v3130, 2147483648
        %v3243 = vmul.f32 %v3235, 1.442695
        %v3244 = vpow.pop %v3243
        %v3245 = vmul.f32 %v3236, 1.442695
        %v3246 = vpow.pop %v3245
        %v3247 = vmul.f32 %v3237, 1.442695
        %v3248 = vpow.pop %v3247
        %v3249 = vmul.f32 %v3238, 1.442695
        %v3250 = vpow.pop %v3249
        %v3251 = vmul.f32 %v3239, 1.442695
        %v3252 = vpow.pop %v3251
        %v3253 = vmul.f32 %v3240, 1.442695
        %v3254 = vpow.pop %v3253
        %v3255 = vmul.f32 %v3241, 1.442695
        %v3256 = vpow.pop %v3255
        %v3257 = vmul.f32 %v3242, 1.442695
        %v3258 = vpow.pop %v3257
        %v3259 = vadd.f32 %v3244, 1.0
        %v3260 = vadd.f32 %v3246, 1.0
        %v3261 = vadd.f32 %v3248, 1.0
        %v3262 = vadd.f32 %v3250, 1.0
        %v3263 = vadd.f32 %v3252, 1.0
        %v3264 = vadd.f32 %v3254, 1.0
        %v3265 = vadd.f32 %v3256, 1.0
        %v3266 = vadd.f32 %v3258, 1.0
        %v3267 = vrcp.pop %v3259
        %v3268 = vmul.f32 1.0, %v3267
        %v3269 = vrcp.pop %v3260
        %v3270 = vmul.f32 1.0, %v3269
        %v3271 = vrcp.pop %v3261
        %v3272 = vmul.f32 1.0, %v3271
        %v3273 = vrcp.pop %v3262
        %v3274 = vmul.f32 1.0, %v3273
        %v3275 = vrcp.pop %v3263
        %v3276 = vmul.f32 1.0, %v3275
        %v3277 = vrcp.pop %v3264
        %v3278 = vmul.f32 1.0, %v3277
        %v3279 = vrcp.pop %v3265
        %v3280 = vmul.f32 1.0, %v3279
        %v3281 = vrcp.pop %v3266
        %v3282 = vmul.f32 1.0, %v3281
        %v3291 = vrot.slane %v2749, 7
        %v3292 = vrot.slane %v2750, 7
        %v3293 = vrot.slane %v2751, 7
        %v3294 = vrot.slane %v2752, 7
        %v3295 = vrot.slane %v2753, 7
        %v3296 = vrot.slane %v2754, 7
        %v3297 = vrot.slane %v2755, 7
        %v3298 = vrot.slane %v2756, 7
        %v3307 = vmul.f32 %v3212, %v3291
        %v3308 = vmul.f32 %v3214, %v3292
        %v3309 = vmul.f32 %v3216, %v3293
        %v3310 = vmul.f32 %v3218, %v3294
        %v3311 = vmul.f32 %v3220, %v3295
        %v3312 = vmul.f32 %v3222, %v3296
        %v3313 = vmul.f32 %v3224, %v3297
        %v3314 = vmul.f32 %v3226, %v3298
        %v3315 = vmul.f32 %v3164, %v3227
        %v3316 = vmul.f32 %v3166, %v3228
        %v3317 = vmul.f32 %v3168, %v3229
        %v3318 = vmul.f32 %v3170, %v3230
        %v3319 = vmul.f32 %v3172, %v3231
        %v3320 = vmul.f32 %v3174, %v3232
        %v3321 = vmul.f32 %v3176, %v3233
        %v3322 = vmul.f32 %v3178, %v3234
        %v3323 = vadd.f32 %v3307, %v3315
        %v3324 = vadd.f32 %v3308, %v3316
        %v3325 = vadd.f32 %v3309, %v3317
        %v3326 = vadd.f32 %v3310, %v3318
        %v3327 = vadd.f32 %v3311, %v3319
        %v3328 = vadd.f32 %v3312, %v3320
        %v3329 = vadd.f32 %v3313, %v3321
        %v3330 = vadd.f32 %v3314, %v3322
        %v3331 = vtanh.pop %v3323
        %v3332 = vtanh.pop %v3324
        %v3333 = vtanh.pop %v3325
        %v3334 = vtanh.pop %v3326
        %v3335 = vtanh.pop %v3327
        %v3336 = vtanh.pop %v3328
        %v3337 = vtanh.pop %v3329
        %v3338 = vtanh.pop %v3330
        %v3339 = vmul.f32 %v3268, %v3331
        %v3340 = vmul.f32 %v3270, %v3332
        %v3341 = vmul.f32 %v3272, %v3333
        %v3342 = vmul.f32 %v3274, %v3334
        %v3343 = vmul.f32 %v3276, %v3335
        %v3344 = vmul.f32 %v3278, %v3336
        %v3345 = vmul.f32 %v3280, %v3337
        %v3346 = vmul.f32 %v3282, %v3338
        %v3355 = vrot.slane %v3340, 7
        %v3356 = vsel %vm1315, %v3355, %v3339
        %v3357 = vrot.slane %v3341, 6
        %v3358 = vsel %vm1318, %v3357, %v3356
        %v3359 = vrot.slane %v3342, 5
        %v3360 = vsel %vm1321, %v3359, %v3358
        %v3361 = vrot.slane %v3343, 4
        %v3362 = vsel %vm1324, %v3361, %v3360
        %v3363 = vrot.slane %v3344, 3
        %v3364 = vrot.slane %v3345, 2
        %v3365 = vsel %vm1306, %v3364, %v3363
        %v3366 = vrot.slane %v3346, 1
        %v3367 = vsel %vm1309, %v3366, %v3365
        %v3371 = vrot.slane %v2912, 5
        %v3373 = vpack.c.bf16 %v3367, %v3362
        %v3374 = vpack.c.bf16 %v3371, %v3371
        %v3376 = vshrl.u32 %v3373, 16
        %v3378 = vrot.slane %v3376, 1
        %v3379 = vshll.u32 %v3373, 16
        %v3381 = vrot.slane %v3379, 2
        %v3382 = vor.u32 %v3378, %v3381
        %v3384 = vshrl.u32 %v3374, 16
        %v3386 = vrot.slane %v3384, 1
        %v3387 = vshll.u32 %v3374, 16
        %v3389 = vrot.slane %v3387, 2
        %v3390 = vor.u32 %v3386, %v3389
        %3393 = vmatprep.subr.bf16.mxu0 %v1522
        %3394 = vmatpush1.bf16.msra.mxu0 %v1521
        %3395 = vmatprep.subr.bf16.mxu0 %v1526
        %3396 = vmatpush1.bf16.msra.mxu0 %v1525
        %3397 = vmatprep.subr.bf16.mxu0 %v1530
        %3398 = vmatpush1.bf16.msra.mxu0 %v1529
        %3399 = vmatprep.subr.bf16.mxu0 %v1534
        %3400 = vmatpush1.bf16.msra.mxu0 %v1533
        %3401 = vmatprep.subr.bf16.mxu0 %v1538
        %3402 = vmatpush1.bf16.msra.mxu0 %v1537
        %3403 = vmatprep.subr.bf16.mxu0 %v1542
        %3404 = vmatpush1.bf16.msra.mxu0 %v1541
        %3405 = vmatprep.subr.bf16.mxu0 %v1546
        %3406 = vmatpush1.bf16.msra.mxu0 %v1545
        %3407 = vmatprep.subr.bf16.mxu0 %v1550
        %3408 = vmatpush1.bf16.msra.mxu0 %v1549
        %3409 = vmatprep.subr.bf16.mxu0 %v1554
        %3410 = vmatpush1.bf16.msra.mxu0 %v1553
        %3411 = vmatprep.subr.bf16.mxu0 %v1558
        %3412 = vmatpush1.bf16.msra.mxu0 %v1557
        %3413 = vmatprep.subr.bf16.mxu0 %v1562
        %3414 = vmatpush1.bf16.msra.mxu0 %v1561
        %3415 = vmatprep.subr.bf16.mxu0 %v1566
        %3416 = vmatpush1.bf16.msra.mxu0 %v1565
        %3417 = vmatprep.subr.bf16.mxu0 %v1570
        %3418 = vmatpush1.bf16.msra.mxu0 %v1569
        %3419 = vmatprep.subr.bf16.mxu0 %v1574
        %3420 = vmatpush1.bf16.msra.mxu0 %v1573
        %3421 = vmatprep.subr.bf16.mxu0 %v1578
        %3422 = vmatpush1.bf16.msra.mxu0 %v1577
        %3423 = vmatprep.subr.bf16.mxu0 %v1582
        %3424 = vmatpush1.bf16.msra.mxu0 %v1581
        %3425 = vmatprep.mubr.bf16.mxu0 %v3390
        %3426 = vmatmul.mubr.bf16.gmra.mrb[0].mxu0 %v3382
        %v3427 = vpop.f32.mrb[0].mxu0
        %v3428 = vadd.f32 %v729, %v3427
        %v3429 = vpop.f32.mrb[0].mxu0
        %v3430 = vadd.f32 %v733, %v3429
        %v3431 = vpop.f32.mrb[0].mxu0
        %v3432 = vpop.f32.mrb[0].mxu0
        %3433 = vdwg.mxu0
        %3434 = vmatprep.subr.bf16.mxu0 %v1524
        %3435 = vmatpush1.bf16.msra.mxu0 %v1523
        %3436 = vmatprep.subr.bf16.mxu0 %v1528
        %3437 = vmatpush1.bf16.msra.mxu0 %v1527
        %3438 = vmatprep.subr.bf16.mxu0 %v1532
        %3439 = vmatpush1.bf16.msra.mxu0 %v1531
        %3440 = vmatprep.subr.bf16.mxu0 %v1536
        %3441 = vmatpush1.bf16.msra.mxu0 %v1535
        %3442 = vmatprep.subr.bf16.mxu0 %v1540
        %3443 = vmatpush1.bf16.msra.mxu0 %v1539
        %3444 = vmatprep.subr.bf16.mxu0 %v1544
        %3445 = vmatpush1.bf16.msra.mxu0 %v1543
        %3446 = vmatprep.subr.bf16.mxu0 %v1548
        %3447 = vmatpush1.bf16.msra.mxu0 %v1547
        %3448 = vmatprep.subr.bf16.mxu0 %v1552
        %3449 = vmatpush1.bf16.msra.mxu0 %v1551
        %3450 = vmatprep.subr.bf16.mxu0 %v1556
        %3451 = vmatpush1.bf16.msra.mxu0 %v1555
        %3452 = vmatprep.subr.bf16.mxu0 %v1560
        %3453 = vmatpush1.bf16.msra.mxu0 %v1559
        %3454 = vmatprep.subr.bf16.mxu0 %v1564
        %3455 = vmatpush1.bf16.msra.mxu0 %v1563
        %3456 = vmatprep.subr.bf16.mxu0 %v1568
        %3457 = vmatpush1.bf16.msra.mxu0 %v1567
        %3458 = vmatprep.subr.bf16.mxu0 %v1572
        %3459 = vmatpush1.bf16.msra.mxu0 %v1571
        %3460 = vmatprep.subr.bf16.mxu0 %v1576
        %3461 = vmatpush1.bf16.msra.mxu0 %v1575
        %3462 = vmatprep.subr.bf16.mxu0 %v1580
        %3463 = vmatpush1.bf16.msra.mxu0 %v1579
        %3464 = vmatprep.subr.bf16.mxu0 %v1584
        %3465 = vmatpush1.bf16.msra.mxu0 %v1583
        %3466 = vmatprep.mubr.bf16.mxu0 %v3390
        %3467 = vmatmul.mubr.bf16.gmra.mrb[0].mxu0 %v3382
        %v3468 = vpop.f32.mrb[0].mxu0
        %v3469 = vadd.f32 %v737, %v3468
        %v3470 = vpop.f32.mrb[0].mxu0
        %v3471 = vadd.f32 %v741, %v3470
        %v3472 = vpop.f32.mrb[0].mxu0
        %v3473 = vpop.f32.mrb[0].mxu0
        %3474 = vdwg.mxu0
        %v3475 = vxor.u32 %v3428, 2147483648
        %v3476 = vmul.f32 %v3475, 1.442695
        %v3477 = vpow.pop %v3476
        %v3478 = vadd.f32 %v3477, 1.0
        %v3479 = vrcp.pop %v3478
        %v3480 = vmul.f32 1.0, %v3479
        %v3481 = vxor.u32 %v3430, 2147483648
        %v3482 = vmul.f32 %v3481, 1.442695
        %v3483 = vpow.pop %v3482
        %v3484 = vadd.f32 %v3483, 1.0
        %v3485 = vrcp.pop %v3484
        %v3486 = vmul.f32 1.0, %v3485
        %v3487 = vtanh.pop %v3469
        %v3488 = vxor.u32 %v3471, 2147483648
        %v3489 = vmul.f32 %v3488, 1.442695
        %v3490 = vpow.pop %v3489
        %v3491 = vadd.f32 %v3490, 1.0
        %v3492 = vrcp.pop %v3491
        %v3493 = vmul.f32 1.0, %v3492
        %v3494 = vmul.f32 %v3486, %v2910
        %v3495 = vmul.f32 %v3480, %v3487
        %v3496 = vadd.f32 %v3494, %v3495
        %v3497 = vtanh.pop %v3496
        %v3498 = vmul.f32 %v3493, %v3497
        %v3499 = vpack.c.bf16 %v3339, %v3339
        %v3500 = vpack.c.bf16 %v3340, %v3340
        %v3501 = vpack.c.bf16 %v3341, %v3341
        %v3502 = vpack.c.bf16 %v3342, %v3342
        %v3503 = vpack.c.bf16 %v3343, %v3343
        %v3504 = vpack.c.bf16 %v3344, %v3344
        %v3505 = vpack.c.bf16 %v3345, %v3345
        %v3506 = vpack.c.bf16 %v3346, %v3346
        %v3515 = vunpack.c.l.b16 %v3499
        %v3516 = vunpack.c.l.b16 %v3500
        %v3517 = vunpack.c.l.b16 %v3501
        %v3518 = vunpack.c.l.b16 %v3502
        %v3519 = vunpack.c.l.b16 %v3503
        %v3520 = vunpack.c.l.b16 %v3504
        %v3521 = vunpack.c.l.b16 %v3505
        %v3522 = vunpack.c.l.b16 %v3506
        %v3523 = vrot.slane %v3515, 3
        %v3524 = vrot.slane %v3516, 2
        %v3525 = vsel %vm1306, %v3524, %v3523
        %v3526 = vrot.slane %v3517, 1
        %v3527 = vsel %vm1309, %v3526, %v3525
        %v3528 = vsel %vm1312, %v3518, %v3527
        %v3529 = vrot.slane %v3519, 7
        %v3530 = vsel %vm1315, %v3529, %v3528
        %v3531 = vrot.slane %v3520, 6
        %v3532 = vsel %vm1318, %v3531, %v3530
        %v3533 = vrot.slane %v3521, 5
        %v3534 = vsel %vm1321, %v3533, %v3532
        %v3535 = vrot.slane %v3522, 4
        %v3536 = vsel %vm1324, %v3535, %v3534
        %v3537 = vpack.c.b16 %v3536, %v3536
        %3539 = vmatprep.subr.bf16.mxu0 %v848
        %3540 = vmatpush1.bf16.msra.mxu0 %v847
        %3541 = vmatprep.subr.bf16.mxu0 %v852
        %3542 = vmatpush1.bf16.msra.mxu0 %v851
        %3543 = vmatprep.subr.bf16.mxu0 %v856
        %3544 = vmatpush1.bf16.msra.mxu0 %v855
        %3545 = vmatprep.subr.bf16.mxu0 %v860
        %3546 = vmatpush1.bf16.msra.mxu0 %v859
        %3547 = vmatprep.subr.bf16.mxu0 %v864
        %3548 = vmatpush1.bf16.msra.mxu0 %v863
        %3549 = vmatprep.subr.bf16.mxu0 %v868
        %3550 = vmatpush1.bf16.msra.mxu0 %v867
        %3551 = vmatprep.subr.bf16.mxu0 %v872
        %3552 = vmatpush1.bf16.msra.mxu0 %v871
        %3553 = vmatprep.subr.bf16.mxu0 %v876
        %3554 = vmatpush1.bf16.msra.mxu0 %v875
        %3555 = vmatprep.subr.bf16.mxu0 0
        %3556 = vmatpush1.bf16.msra.mxu0 0
        %3557 = vmatprep.subr.bf16.mxu0 0
        %3558 = vmatpush1.bf16.msra.mxu0 0
        %3559 = vmatprep.subr.bf16.mxu0 0
        %3560 = vmatpush1.bf16.msra.mxu0 0
        %3561 = vmatprep.subr.bf16.mxu0 0
        %3562 = vmatpush1.bf16.msra.mxu0 0
        %3563 = vmatprep.subr.bf16.mxu0 0
        %3564 = vmatpush1.bf16.msra.mxu0 0
        %3565 = vmatprep.subr.bf16.mxu0 0
        %3566 = vmatpush1.bf16.msra.mxu0 0
        %3567 = vmatprep.subr.bf16.mxu0 0
        %3568 = vmatpush1.bf16.msra.mxu0 0
        %3569 = vmatprep.subr.bf16.mxu0 0
        %3570 = vmatpush1.bf16.msra.mxu0 0
        %3571 = vmatprep.mubr.bf16.mxu0 0
        %3572 = vmatmul.mubr.bf16.gmra.mrb[0].mxu0 %v3537
        %v3573 = vpop.f32.mrb[0].mxu0
        %v3574 = vadd.f32 0.0, %v3573
        %v3575 = vpop.f32.mrb[0].mxu0
        %v3576 = vadd.f32 0.0, %v3575
        %v3577 = vpop.f32.mrb[0].mxu0
        %v3578 = vpop.f32.mrb[0].mxu0
        %3579 = vdwg.mxu0
        %3580 = vmatprep.subr.bf16.mxu0 %v850
        %3581 = vmatpush1.bf16.msra.mxu0 %v849
        %3582 = vmatprep.subr.bf16.mxu0 %v854
        %3583 = vmatpush1.bf16.msra.mxu0 %v853
        %3584 = vmatprep.subr.bf16.mxu0 %v858
        %3585 = vmatpush1.bf16.msra.mxu0 %v857
        %3586 = vmatprep.subr.bf16.mxu0 %v862
        %3587 = vmatpush1.bf16.msra.mxu0 %v861
        %3588 = vmatprep.subr.bf16.mxu0 %v866
        %3589 = vmatpush1.bf16.msra.mxu0 %v865
        %3590 = vmatprep.subr.bf16.mxu0 %v870
        %3591 = vmatpush1.bf16.msra.mxu0 %v869
        %3592 = vmatprep.subr.bf16.mxu0 %v874
        %3593 = vmatpush1.bf16.msra.mxu0 %v873
        %3594 = vmatprep.subr.bf16.mxu0 %v878
        %3595 = vmatpush1.bf16.msra.mxu0 %v877
        %3596 = vmatprep.subr.bf16.mxu0 0
        %3597 = vmatpush1.bf16.msra.mxu0 0
        %3598 = vmatprep.subr.bf16.mxu0 0
        %3599 = vmatpush1.bf16.msra.mxu0 0
        %3600 = vmatprep.subr.bf16.mxu0 0
        %3601 = vmatpush1.bf16.msra.mxu0 0
        %3602 = vmatprep.subr.bf16.mxu0 0
        %3603 = vmatpush1.bf16.msra.mxu0 0
        %3604 = vmatprep.subr.bf16.mxu0 0
        %3605 = vmatpush1.bf16.msra.mxu0 0
        %3606 = vmatprep.subr.bf16.mxu0 0
        %3607 = vmatpush1.bf16.msra.mxu0 0
        %3608 = vmatprep.subr.bf16.mxu0 0
        %3609 = vmatpush1.bf16.msra.mxu0 0
        %3610 = vmatprep.subr.bf16.mxu0 0
        %3611 = vmatpush1.bf16.msra.mxu0 0
        %3612 = vmatprep.mubr.bf16.mxu0 0
        %3613 = vmatmul.mubr.bf16.gmra.mrb[0].mxu0 %v3537
        %v3614 = vpop.f32.mrb[0].mxu0
        %v3615 = vadd.f32 0.0, %v3614
        %v3616 = vpop.f32.mrb[0].mxu0
        %v3617 = vadd.f32 0.0, %v3616
        %v3618 = vpop.f32.mrb[0].mxu0
        %v3619 = vpop.f32.mrb[0].mxu0
        %3620 = vdwg.mxu0
        %v3625 = vrot.slane %v3574, 4
        %v3626 = vrot.slane %v3576, 4
        %v3627 = vrot.slane %v3615, 4
        %v3628 = vrot.slane %v3617, 4
        %v3629 = vrot.slane %v3574, 5
        %v3630 = vrot.slane %v3576, 5
        %v3631 = vrot.slane %v3615, 5
        %v3632 = vrot.slane %v3617, 5
        %v3633 = vrot.slane %v3574, 6
        %v3634 = vrot.slane %v3576, 6
        %v3635 = vrot.slane %v3615, 6
        %v3636 = vrot.slane %v3617, 6
        %v3637 = vrot.slane %v3574, 7
        %v3638 = vrot.slane %v3576, 7
        %v3639 = vrot.slane %v3615, 7
        %v3640 = vrot.slane %v3617, 7
        %v3641 = vrot.slane %v3574, 1
        %v3642 = vrot.slane %v3576, 1
        %v3643 = vrot.slane %v3615, 1
        %v3644 = vrot.slane %v3617, 1
        %v3645 = vrot.slane %v3574, 2
        %v3646 = vrot.slane %v3576, 2
        %v3647 = vrot.slane %v3615, 2
        %v3648 = vrot.slane %v3617, 2
        %v3649 = vrot.slane %v3574, 3
        %v3650 = vrot.slane %v3576, 3
        %v3651 = vrot.slane %v3615, 3
        %v3652 = vrot.slane %v3617, 3
        %v3685 = vadd.f32 %v517, %v3625
        %v3686 = vadd.f32 %v519, %v3626
        %v3687 = vadd.f32 %v590, %v3627
        %v3688 = vadd.f32 %v592, %v3628
        %v3689 = vadd.f32 %v521, %v3629
        %v3690 = vadd.f32 %v523, %v3630
        %v3691 = vadd.f32 %v594, %v3631
        %v3692 = vadd.f32 %v596, %v3632
        %v3693 = vadd.f32 %v527, %v3633
        %v3694 = vadd.f32 %v529, %v3634
        %v3695 = vadd.f32 %v600, %v3635
        %v3696 = vadd.f32 %v602, %v3636
        %v3697 = vadd.f32 %v531, %v3637
        %v3698 = vadd.f32 %v533, %v3638
        %v3699 = vadd.f32 %v604, %v3639
        %v3700 = vadd.f32 %v606, %v3640
        %v3701 = vadd.f32 %v537, %v3574
        %v3702 = vadd.f32 %v539, %v3576
        %v3703 = vadd.f32 %v610, %v3615
        %v3704 = vadd.f32 %v612, %v3617
        %v3705 = vadd.f32 %v541, %v3641
        %v3706 = vadd.f32 %v543, %v3642
        %v3707 = vadd.f32 %v614, %v3643
        %v3708 = vadd.f32 %v616, %v3644
        %v3709 = vadd.f32 %v547, %v3645
        %v3710 = vadd.f32 %v549, %v3646
        %v3711 = vadd.f32 %v620, %v3647
        %v3712 = vadd.f32 %v622, %v3648
        %v3713 = vadd.f32 %v551, %v3649
        %v3714 = vadd.f32 %v553, %v3650
        %v3715 = vadd.f32 %v624, %v3651
        %v3716 = vadd.f32 %v626, %v3652
        %v3717 = vxor.u32 %v3685, 2147483648
        %v3718 = vxor.u32 %v3689, 2147483648
        %v3719 = vxor.u32 %v3693, 2147483648
        %v3720 = vxor.u32 %v3697, 2147483648
        %v3721 = vxor.u32 %v3701, 2147483648
        %v3722 = vxor.u32 %v3705, 2147483648
        %v3723 = vxor.u32 %v3709, 2147483648
        %v3724 = vxor.u32 %v3713, 2147483648
        %v3725 = vmul.f32 %v3717, 1.442695
        %v3726 = vpow.pop %v3725
        %v3727 = vmul.f32 %v3718, 1.442695
        %v3728 = vpow.pop %v3727
        %v3729 = vmul.f32 %v3719, 1.442695
        %v3730 = vpow.pop %v3729
        %v3731 = vmul.f32 %v3720, 1.442695
        %v3732 = vpow.pop %v3731
        %v3733 = vmul.f32 %v3721, 1.442695
        %v3734 = vpow.pop %v3733
        %v3735 = vmul.f32 %v3722, 1.442695
        %v3736 = vpow.pop %v3735
        %v3737 = vmul.f32 %v3723, 1.442695
        %v3738 = vpow.pop %v3737
        %v3739 = vmul.f32 %v3724, 1.442695
        %v3740 = vpow.pop %v3739
        %v3741 = vadd.f32 %v3726, 1.0
        %v3742 = vadd.f32 %v3728, 1.0
        %v3743 = vadd.f32 %v3730, 1.0
        %v3744 = vadd.f32 %v3732, 1.0
        %v3745 = vadd.f32 %v3734, 1.0
        %v3746 = vadd.f32 %v3736, 1.0
        %v3747 = vadd.f32 %v3738, 1.0
        %v3748 = vadd.f32 %v3740, 1.0
        %v3749 = vrcp.pop %v3741
        %v3750 = vmul.f32 1.0, %v3749
        %v3751 = vrcp.pop %v3742
        %v3752 = vmul.f32 1.0, %v3751
        %v3753 = vrcp.pop %v3743
        %v3754 = vmul.f32 1.0, %v3753
        %v3755 = vrcp.pop %v3744
        %v3756 = vmul.f32 1.0, %v3755
        %v3757 = vrcp.pop %v3745
        %v3758 = vmul.f32 1.0, %v3757
        %v3759 = vrcp.pop %v3746
        %v3760 = vmul.f32 1.0, %v3759
        %v3761 = vrcp.pop %v3747
        %v3762 = vmul.f32 1.0, %v3761
        %v3763 = vrcp.pop %v3748
        %v3764 = vmul.f32 1.0, %v3763
        %v3765 = vxor.u32 %v3686, 2147483648
        %v3766 = vxor.u32 %v3690, 2147483648
        %v3767 = vxor.u32 %v3694, 2147483648
        %v3768 = vxor.u32 %v3698, 2147483648
        %v3769 = vxor.u32 %v3702, 2147483648
        %v3770 = vxor.u32 %v3706, 2147483648
        %v3771 = vxor.u32 %v3710, 2147483648
        %v3772 = vxor.u32 %v3714, 2147483648
        %v3773 = vmul.f32 %v3765, 1.442695
        %v3774 = vpow.pop %v3773
        %v3775 = vmul.f32 %v3766, 1.442695
        %v3776 = vpow.pop %v3775
        %v3777 = vmul.f32 %v3767, 1.442695
        %v3778 = vpow.pop %v3777
        %v3779 = vmul.f32 %v3768, 1.442695
        %v3780 = vpow.pop %v3779
        %v3781 = vmul.f32 %v3769, 1.442695
        %v3782 = vpow.pop %v3781
        %v3783 = vmul.f32 %v3770, 1.442695
        %v3784 = vpow.pop %v3783
        %v3785 = vmul.f32 %v3771, 1.442695
        %v3786 = vpow.pop %v3785
        %v3787 = vmul.f32 %v3772, 1.442695
        %v3788 = vpow.pop %v3787
        %v3789 = vadd.f32 %v3774, 1.0
        %v3790 = vadd.f32 %v3776, 1.0
        %v3791 = vadd.f32 %v3778, 1.0
        %v3792 = vadd.f32 %v3780, 1.0
        %v3793 = vadd.f32 %v3782, 1.0
        %v3794 = vadd.f32 %v3784, 1.0
        %v3795 = vadd.f32 %v3786, 1.0
        %v3796 = vadd.f32 %v3788, 1.0
        %v3797 = vrcp.pop %v3789
        %v3798 = vmul.f32 1.0, %v3797
        %v3799 = vrcp.pop %v3790
        %v3800 = vmul.f32 1.0, %v3799
        %v3801 = vrcp.pop %v3791
        %v3802 = vmul.f32 1.0, %v3801
        %v3803 = vrcp.pop %v3792
        %v3804 = vmul.f32 1.0, %v3803
        %v3805 = vrcp.pop %v3793
        %v3806 = vmul.f32 1.0, %v3805
        %v3807 = vrcp.pop %v3794
        %v3808 = vmul.f32 1.0, %v3807
        %v3809 = vrcp.pop %v3795
        %v3810 = vmul.f32 1.0, %v3809
        %v3811 = vrcp.pop %v3796
        %v3812 = vmul.f32 1.0, %v3811
        %v3813 = vtanh.pop %v3687
        %v3814 = vtanh.pop %v3691
        %v3815 = vtanh.pop %v3695
        %v3816 = vtanh.pop %v3699
        %v3817 = vtanh.pop %v3703
        %v3818 = vtanh.pop %v3707
        %v3819 = vtanh.pop %v3711
        %v3820 = vtanh.pop %v3715
        %v3821 = vxor.u32 %v3688, 2147483648
        %v3822 = vxor.u32 %v3692, 2147483648
        %v3823 = vxor.u32 %v3696, 2147483648
        %v3824 = vxor.u32 %v3700, 2147483648
        %v3825 = vxor.u32 %v3704, 2147483648
        %v3826 = vxor.u32 %v3708, 2147483648
        %v3827 = vxor.u32 %v3712, 2147483648
        %v3828 = vxor.u32 %v3716, 2147483648
        %v3829 = vmul.f32 %v3821, 1.442695
        %v3830 = vpow.pop %v3829
        %v3831 = vmul.f32 %v3822, 1.442695
        %v3832 = vpow.pop %v3831
        %v3833 = vmul.f32 %v3823, 1.442695
        %v3834 = vpow.pop %v3833
        %v3835 = vmul.f32 %v3824, 1.442695
        %v3836 = vpow.pop %v3835
        %v3837 = vmul.f32 %v3825, 1.442695
        %v3838 = vpow.pop %v3837
        %v3839 = vmul.f32 %v3826, 1.442695
        %v3840 = vpow.pop %v3839
        %v3841 = vmul.f32 %v3827, 1.442695
        %v3842 = vpow.pop %v3841
        %v3843 = vmul.f32 %v3828, 1.442695
        %v3844 = vpow.pop %v3843
        %v3845 = vadd.f32 %v3830, 1.0
        %v3846 = vadd.f32 %v3832, 1.0
        %v3847 = vadd.f32 %v3834, 1.0
        %v3848 = vadd.f32 %v3836, 1.0
        %v3849 = vadd.f32 %v3838, 1.0
        %v3850 = vadd.f32 %v3840, 1.0
        %v3851 = vadd.f32 %v3842, 1.0
        %v3852 = vadd.f32 %v3844, 1.0
        %v3853 = vrcp.pop %v3845
        %v3854 = vmul.f32 1.0, %v3853
        %v3855 = vrcp.pop %v3846
        %v3856 = vmul.f32 1.0, %v3855
        %v3857 = vrcp.pop %v3847
        %v3858 = vmul.f32 1.0, %v3857
        %v3859 = vrcp.pop %v3848
        %v3860 = vmul.f32 1.0, %v3859
        %v3861 = vrcp.pop %v3849
        %v3862 = vmul.f32 1.0, %v3861
        %v3863 = vrcp.pop %v3850
        %v3864 = vmul.f32 1.0, %v3863
        %v3865 = vrcp.pop %v3851
        %v3866 = vmul.f32 1.0, %v3865
        %v3867 = vrcp.pop %v3852
        %v3868 = vmul.f32 1.0, %v3867
        %v3877 = vrot.slane %v3323, 7
        %v3878 = vrot.slane %v3324, 7
        %v3879 = vrot.slane %v3325, 7
        %v3880 = vrot.slane %v3326, 7
        %v3881 = vrot.slane %v3327, 7
        %v3882 = vrot.slane %v3328, 7
        %v3883 = vrot.slane %v3329, 7
        %v3884 = vrot.slane %v3330, 7
        %v3893 = vmul.f32 %v3798, %v3877
        %v3894 = vmul.f32 %v3800, %v3878
        %v3895 = vmul.f32 %v3802, %v3879
        %v3896 = vmul.f32 %v3804, %v3880
        %v3897 = vmul.f32 %v3806, %v3881
        %v3898 = vmul.f32 %v3808, %v3882
        %v3899 = vmul.f32 %v3810, %v3883
        %v3900 = vmul.f32 %v3812, %v3884
        %v3901 = vmul.f32 %v3750, %v3813
        %v3902 = vmul.f32 %v3752, %v3814
        %v3903 = vmul.f32 %v3754, %v3815
        %v3904 = vmul.f32 %v3756, %v3816
        %v3905 = vmul.f32 %v3758, %v3817
        %v3906 = vmul.f32 %v3760, %v3818
        %v3907 = vmul.f32 %v3762, %v3819
        %v3908 = vmul.f32 %v3764, %v3820
        %v3909 = vadd.f32 %v3893, %v3901
        %v3910 = vadd.f32 %v3894, %v3902
        %v3911 = vadd.f32 %v3895, %v3903
        %v3912 = vadd.f32 %v3896, %v3904
        %v3913 = vadd.f32 %v3897, %v3905
        %v3914 = vadd.f32 %v3898, %v3906
        %v3915 = vadd.f32 %v3899, %v3907
        %v3916 = vadd.f32 %v3900, %v3908
        %v3917 = vtanh.pop %v3909
        %v3918 = vtanh.pop %v3910
        %v3919 = vtanh.pop %v3911
        %v3920 = vtanh.pop %v3912
        %v3921 = vtanh.pop %v3913
        %v3922 = vtanh.pop %v3914
        %v3923 = vtanh.pop %v3915
        %v3924 = vtanh.pop %v3916
        %v3925 = vmul.f32 %v3854, %v3917
        %v3926 = vmul.f32 %v3856, %v3918
        %v3927 = vmul.f32 %v3858, %v3919
        %v3928 = vmul.f32 %v3860, %v3920
        %v3929 = vmul.f32 %v3862, %v3921
        %v3930 = vmul.f32 %v3864, %v3922
        %v3931 = vmul.f32 %v3866, %v3923
        %v3932 = vmul.f32 %v3868, %v3924
        %v3941 = vrot.slane %v3926, 7
        %v3942 = vsel %vm1318, %v3941, %v3925
        %v3943 = vrot.slane %v3927, 6
        %v3944 = vsel %vm1321, %v3943, %v3942
        %v3945 = vrot.slane %v3928, 5
        %v3946 = vsel %vm1324, %v3945, %v3944
        %v3947 = vrot.slane %v3929, 4
        %v3948 = vrot.slane %v3930, 3
        %v3949 = vsel %vm1306, %v3948, %v3947
        %v3950 = vrot.slane %v3931, 2
        %v3951 = vsel %vm1309, %v3950, %v3949
        %v3952 = vrot.slane %v3932, 1
        %v3953 = vsel %vm1312, %v3952, %v3951
        %v3957 = vrot.slane %v3498, 4
        %v3959 = vpack.c.bf16 %v3953, %v3946
        %v3960 = vpack.c.bf16 %v3957, %v3957
        %v3963 = vrot.slane %v3959, 2
        %v3964 = vrot.slane %v3960, 2
        %3967 = vmatprep.subr.bf16.mxu0 %v1522
        %3968 = vmatpush1.bf16.msra.mxu0 %v1521
        %3969 = vmatprep.subr.bf16.mxu0 %v1526
        %3970 = vmatpush1.bf16.msra.mxu0 %v1525
        %3971 = vmatprep.subr.bf16.mxu0 %v1530
        %3972 = vmatpush1.bf16.msra.mxu0 %v1529
        %3973 = vmatprep.subr.bf16.mxu0 %v1534
        %3974 = vmatpush1.bf16.msra.mxu0 %v1533
        %3975 = vmatprep.subr.bf16.mxu0 %v1538
        %3976 = vmatpush1.bf16.msra.mxu0 %v1537
        %3977 = vmatprep.subr.bf16.mxu0 %v1542
        %3978 = vmatpush1.bf16.msra.mxu0 %v1541
        %3979 = vmatprep.subr.bf16.mxu0 %v1546
        %3980 = vmatpush1.bf16.msra.mxu0 %v1545
        %3981 = vmatprep.subr.bf16.mxu0 %v1550
        %3982 = vmatpush1.bf16.msra.mxu0 %v1549
        %3983 = vmatprep.subr.bf16.mxu0 %v1554
        %3984 = vmatpush1.bf16.msra.mxu0 %v1553
        %3985 = vmatprep.subr.bf16.mxu0 %v1558
        %3986 = vmatpush1.bf16.msra.mxu0 %v1557
        %3987 = vmatprep.subr.bf16.mxu0 %v1562
        %3988 = vmatpush1.bf16.msra.mxu0 %v1561
        %3989 = vmatprep.subr.bf16.mxu0 %v1566
        %3990 = vmatpush1.bf16.msra.mxu0 %v1565
        %3991 = vmatprep.subr.bf16.mxu0 %v1570
        %3992 = vmatpush1.bf16.msra.mxu0 %v1569
        %3993 = vmatprep.subr.bf16.mxu0 %v1574
        %3994 = vmatpush1.bf16.msra.mxu0 %v1573
        %3995 = vmatprep.subr.bf16.mxu0 %v1578
        %3996 = vmatpush1.bf16.msra.mxu0 %v1577
        %3997 = vmatprep.subr.bf16.mxu0 %v1582
        %3998 = vmatpush1.bf16.msra.mxu0 %v1581
        %3999 = vmatprep.mubr.bf16.mxu0 %v3964
        %4000 = vmatmul.mubr.bf16.gmra.mrb[0].mxu0 %v3963
        %v4001 = vpop.f32.mrb[0].mxu0
        %v4002 = vadd.f32 %v729, %v4001
        %v4003 = vpop.f32.mrb[0].mxu0
        %v4004 = vadd.f32 %v733, %v4003
        %v4005 = vpop.f32.mrb[0].mxu0
        %v4006 = vpop.f32.mrb[0].mxu0
        %4007 = vdwg.mxu0
        %4008 = vmatprep.subr.bf16.mxu0 %v1524
        %4009 = vmatpush1.bf16.msra.mxu0 %v1523
        %4010 = vmatprep.subr.bf16.mxu0 %v1528
        %4011 = vmatpush1.bf16.msra.mxu0 %v1527
        %4012 = vmatprep.subr.bf16.mxu0 %v1532
        %4013 = vmatpush1.bf16.msra.mxu0 %v1531
        %4014 = vmatprep.subr.bf16.mxu0 %v1536
        %4015 = vmatpush1.bf16.msra.mxu0 %v1535
        %4016 = vmatprep.subr.bf16.mxu0 %v1540
        %4017 = vmatpush1.bf16.msra.mxu0 %v1539
        %4018 = vmatprep.subr.bf16.mxu0 %v1544
        %4019 = vmatpush1.bf16.msra.mxu0 %v1543
        %4020 = vmatprep.subr.bf16.mxu0 %v1548
        %4021 = vmatpush1.bf16.msra.mxu0 %v1547
        %4022 = vmatprep.subr.bf16.mxu0 %v1552
        %4023 = vmatpush1.bf16.msra.mxu0 %v1551
        %4024 = vmatprep.subr.bf16.mxu0 %v1556
        %4025 = vmatpush1.bf16.msra.mxu0 %v1555
        %4026 = vmatprep.subr.bf16.mxu0 %v1560
        %4027 = vmatpush1.bf16.msra.mxu0 %v1559
        %4028 = vmatprep.subr.bf16.mxu0 %v1564
        %4029 = vmatpush1.bf16.msra.mxu0 %v1563
        %4030 = vmatprep.subr.bf16.mxu0 %v1568
        %4031 = vmatpush1.bf16.msra.mxu0 %v1567
        %4032 = vmatprep.subr.bf16.mxu0 %v1572
        %4033 = vmatpush1.bf16.msra.mxu0 %v1571
        %4034 = vmatprep.subr.bf16.mxu0 %v1576
        %4035 = vmatpush1.bf16.msra.mxu0 %v1575
        %4036 = vmatprep.subr.bf16.mxu0 %v1580
        %4037 = vmatpush1.bf16.msra.mxu0 %v1579
        %4038 = vmatprep.subr.bf16.mxu0 %v1584
        %4039 = vmatpush1.bf16.msra.mxu0 %v1583
        %4040 = vmatprep.mubr.bf16.mxu0 %v3964
        %4041 = vmatmul.mubr.bf16.gmra.mrb[0].mxu0 %v3963
        %v4042 = vpop.f32.mrb[0].mxu0
        %v4043 = vadd.f32 %v737, %v4042
        %v4044 = vpop.f32.mrb[0].mxu0
        %v4045 = vadd.f32 %v741, %v4044
        %v4046 = vpop.f32.mrb[0].mxu0
        %v4047 = vpop.f32.mrb[0].mxu0
        %4048 = vdwg.mxu0
        %v4049 = vxor.u32 %v4002, 2147483648
        %v4050 = vmul.f32 %v4049, 1.442695
        %v4051 = vpow.pop %v4050
        %v4052 = vadd.f32 %v4051, 1.0
        %v4053 = vrcp.pop %v4052
        %v4054 = vmul.f32 1.0, %v4053
        %v4055 = vxor.u32 %v4004, 2147483648
        %v4056 = vmul.f32 %v4055, 1.442695
        %v4057 = vpow.pop %v4056
        %v4058 = vadd.f32 %v4057, 1.0
        %v4059 = vrcp.pop %v4058
        %v4060 = vmul.f32 1.0, %v4059
        %v4061 = vtanh.pop %v4043
        %v4062 = vxor.u32 %v4045, 2147483648
        %v4063 = vmul.f32 %v4062, 1.442695
        %v4064 = vpow.pop %v4063
        %v4065 = vadd.f32 %v4064, 1.0
        %v4066 = vrcp.pop %v4065
        %v4067 = vmul.f32 1.0, %v4066
        %v4068 = vmul.f32 %v4060, %v3496
        %v4069 = vmul.f32 %v4054, %v4061
        %v4070 = vadd.f32 %v4068, %v4069
        %v4071 = vtanh.pop %v4070
        %v4072 = vmul.f32 %v4067, %v4071
        %v4073 = vpack.c.bf16 %v3925, %v3925
        %v4074 = vpack.c.bf16 %v3926, %v3926
        %v4075 = vpack.c.bf16 %v3927, %v3927
        %v4076 = vpack.c.bf16 %v3928, %v3928
        %v4077 = vpack.c.bf16 %v3929, %v3929
        %v4078 = vpack.c.bf16 %v3930, %v3930
        %v4079 = vpack.c.bf16 %v3931, %v3931
        %v4080 = vpack.c.bf16 %v3932, %v3932
        %v4089 = vunpack.c.l.b16 %v4073
        %v4090 = vunpack.c.l.b16 %v4074
        %v4091 = vunpack.c.l.b16 %v4075
        %v4092 = vunpack.c.l.b16 %v4076
        %v4093 = vunpack.c.l.b16 %v4077
        %v4094 = vunpack.c.l.b16 %v4078
        %v4095 = vunpack.c.l.b16 %v4079
        %v4096 = vunpack.c.l.b16 %v4080
        %v4097 = vrot.slane %v4089, 4
        %v4098 = vrot.slane %v4090, 3
        %v4099 = vsel %vm1306, %v4098, %v4097
        %v4100 = vrot.slane %v4091, 2
        %v4101 = vsel %vm1309, %v4100, %v4099
        %v4102 = vrot.slane %v4092, 1
        %v4103 = vsel %vm1312, %v4102, %v4101
        %v4104 = vsel %vm1315, %v4093, %v4103
        %v4105 = vrot.slane %v4094, 7
        %v4106 = vsel %vm1318, %v4105, %v4104
        %v4107 = vrot.slane %v4095, 6
        %v4108 = vsel %vm1321, %v4107, %v4106
        %v4109 = vrot.slane %v4096, 5
        %v4110 = vsel %vm1324, %v4109, %v4108
        %v4111 = vpack.c.b16 %v4110, %v4110
        %4113 = vmatprep.subr.bf16.mxu0 %v848
        %4114 = vmatpush1.bf16.msra.mxu0 %v847
        %4115 = vmatprep.subr.bf16.mxu0 %v852
        %4116 = vmatpush1.bf16.msra.mxu0 %v851
        %4117 = vmatprep.subr.bf16.mxu0 %v856
        %4118 = vmatpush1.bf16.msra.mxu0 %v855
        %4119 = vmatprep.subr.bf16.mxu0 %v860
        %4120 = vmatpush1.bf16.msra.mxu0 %v859
        %4121 = vmatprep.subr.bf16.mxu0 %v864
        %4122 = vmatpush1.bf16.msra.mxu0 %v863
        %4123 = vmatprep.subr.bf16.mxu0 %v868
        %4124 = vmatpush1.bf16.msra.mxu0 %v867
        %4125 = vmatprep.subr.bf16.mxu0 %v872
        %4126 = vmatpush1.bf16.msra.mxu0 %v871
        %4127 = vmatprep.subr.bf16.mxu0 %v876
        %4128 = vmatpush1.bf16.msra.mxu0 %v875
        %4129 = vmatprep.subr.bf16.mxu0 0
        %4130 = vmatpush1.bf16.msra.mxu0 0
        %4131 = vmatprep.subr.bf16.mxu0 0
        %4132 = vmatpush1.bf16.msra.mxu0 0
        %4133 = vmatprep.subr.bf16.mxu0 0
        %4134 = vmatpush1.bf16.msra.mxu0 0
        %4135 = vmatprep.subr.bf16.mxu0 0
        %4136 = vmatpush1.bf16.msra.mxu0 0
        %4137 = vmatprep.subr.bf16.mxu0 0
        %4138 = vmatpush1.bf16.msra.mxu0 0
        %4139 = vmatprep.subr.bf16.mxu0 0
        %4140 = vmatpush1.bf16.msra.mxu0 0
        %4141 = vmatprep.subr.bf16.mxu0 0
        %4142 = vmatpush1.bf16.msra.mxu0 0
        %4143 = vmatprep.subr.bf16.mxu0 0
        %4144 = vmatpush1.bf16.msra.mxu0 0
        %4145 = vmatprep.mubr.bf16.mxu0 0
        %4146 = vmatmul.mubr.bf16.gmra.mrb[0].mxu0 %v4111
        %v4147 = vpop.f32.mrb[0].mxu0
        %v4148 = vadd.f32 0.0, %v4147
        %v4149 = vpop.f32.mrb[0].mxu0
        %v4150 = vadd.f32 0.0, %v4149
        %v4151 = vpop.f32.mrb[0].mxu0
        %v4152 = vpop.f32.mrb[0].mxu0
        %4153 = vdwg.mxu0
        %4154 = vmatprep.subr.bf16.mxu0 %v850
        %4155 = vmatpush1.bf16.msra.mxu0 %v849
        %4156 = vmatprep.subr.bf16.mxu0 %v854
        %4157 = vmatpush1.bf16.msra.mxu0 %v853
        %4158 = vmatprep.subr.bf16.mxu0 %v858
        %4159 = vmatpush1.bf16.msra.mxu0 %v857
        %4160 = vmatprep.subr.bf16.mxu0 %v862
        %4161 = vmatpush1.bf16.msra.mxu0 %v861
        %4162 = vmatprep.subr.bf16.mxu0 %v866
        %4163 = vmatpush1.bf16.msra.mxu0 %v865
        %4164 = vmatprep.subr.bf16.mxu0 %v870
        %4165 = vmatpush1.bf16.msra.mxu0 %v869
        %4166 = vmatprep.subr.bf16.mxu0 %v874
        %4167 = vmatpush1.bf16.msra.mxu0 %v873
        %4168 = vmatprep.subr.bf16.mxu0 %v878
        %4169 = vmatpush1.bf16.msra.mxu0 %v877
        %4170 = vmatprep.subr.bf16.mxu0 0
        %4171 = vmatpush1.bf16.msra.mxu0 0
        %4172 = vmatprep.subr.bf16.mxu0 0
        %4173 = vmatpush1.bf16.msra.mxu0 0
        %4174 = vmatprep.subr.bf16.mxu0 0
        %4175 = vmatpush1.bf16.msra.mxu0 0
        %4176 = vmatprep.subr.bf16.mxu0 0
        %4177 = vmatpush1.bf16.msra.mxu0 0
        %4178 = vmatprep.subr.bf16.mxu0 0
        %4179 = vmatpush1.bf16.msra.mxu0 0
        %4180 = vmatprep.subr.bf16.mxu0 0
        %4181 = vmatpush1.bf16.msra.mxu0 0
        %4182 = vmatprep.subr.bf16.mxu0 0
        %4183 = vmatpush1.bf16.msra.mxu0 0
        %4184 = vmatprep.subr.bf16.mxu0 0
        %4185 = vmatpush1.bf16.msra.mxu0 0
        %4186 = vmatprep.mubr.bf16.mxu0 0
        %4187 = vmatmul.mubr.bf16.gmra.mrb[0].mxu0 %v4111
        %v4188 = vpop.f32.mrb[0].mxu0
        %v4189 = vadd.f32 0.0, %v4188
        %v4190 = vpop.f32.mrb[0].mxu0
        %v4191 = vadd.f32 0.0, %v4190
        %v4192 = vpop.f32.mrb[0].mxu0
        %v4193 = vpop.f32.mrb[0].mxu0
        %4194 = vdwg.mxu0
        %v4199 = vrot.slane %v4148, 3
        %v4200 = vrot.slane %v4150, 3
        %v4201 = vrot.slane %v4189, 3
        %v4202 = vrot.slane %v4191, 3
        %v4203 = vrot.slane %v4148, 4
        %v4204 = vrot.slane %v4150, 4
        %v4205 = vrot.slane %v4189, 4
        %v4206 = vrot.slane %v4191, 4
        %v4207 = vrot.slane %v4148, 5
        %v4208 = vrot.slane %v4150, 5
        %v4209 = vrot.slane %v4189, 5
        %v4210 = vrot.slane %v4191, 5
        %v4211 = vrot.slane %v4148, 6
        %v4212 = vrot.slane %v4150, 6
        %v4213 = vrot.slane %v4189, 6
        %v4214 = vrot.slane %v4191, 6
        %v4215 = vrot.slane %v4148, 7
        %v4216 = vrot.slane %v4150, 7
        %v4217 = vrot.slane %v4189, 7
        %v4218 = vrot.slane %v4191, 7
        %v4219 = vrot.slane %v4148, 1
        %v4220 = vrot.slane %v4150, 1
        %v4221 = vrot.slane %v4189, 1
        %v4222 = vrot.slane %v4191, 1
        %v4223 = vrot.slane %v4148, 2
        %v4224 = vrot.slane %v4150, 2
        %v4225 = vrot.slane %v4189, 2
        %v4226 = vrot.slane %v4191, 2
        %v4259 = vadd.f32 %v517, %v4199
        %v4260 = vadd.f32 %v519, %v4200
        %v4261 = vadd.f32 %v590, %v4201
        %v4262 = vadd.f32 %v592, %v4202
        %v4263 = vadd.f32 %v521, %v4203
        %v4264 = vadd.f32 %v523, %v4204
        %v4265 = vadd.f32 %v594, %v4205
        %v4266 = vadd.f32 %v596, %v4206
        %v4267 = vadd.f32 %v527, %v4207
        %v4268 = vadd.f32 %v529, %v4208
        %v4269 = vadd.f32 %v600, %v4209
        %v4270 = vadd.f32 %v602, %v4210
        %v4271 = vadd.f32 %v531, %v4211
        %v4272 = vadd.f32 %v533, %v4212
        %v4273 = vadd.f32 %v604, %v4213
        %v4274 = vadd.f32 %v606, %v4214
        %v4275 = vadd.f32 %v537, %v4215
        %v4276 = vadd.f32 %v539, %v4216
        %v4277 = vadd.f32 %v610, %v4217
        %v4278 = vadd.f32 %v612, %v4218
        %v4279 = vadd.f32 %v541, %v4148
        %v4280 = vadd.f32 %v543, %v4150
        %v4281 = vadd.f32 %v614, %v4189
        %v4282 = vadd.f32 %v616, %v4191
        %v4283 = vadd.f32 %v547, %v4219
        %v4284 = vadd.f32 %v549, %v4220
        %v4285 = vadd.f32 %v620, %v4221
        %v4286 = vadd.f32 %v622, %v4222
        %v4287 = vadd.f32 %v551, %v4223
        %v4288 = vadd.f32 %v553, %v4224
        %v4289 = vadd.f32 %v624, %v4225
        %v4290 = vadd.f32 %v626, %v4226
        %v4291 = vxor.u32 %v4259, 2147483648
        %v4292 = vxor.u32 %v4263, 2147483648
        %v4293 = vxor.u32 %v4267, 2147483648
        %v4294 = vxor.u32 %v4271, 2147483648
        %v4295 = vxor.u32 %v4275, 2147483648
        %v4296 = vxor.u32 %v4279, 2147483648
        %v4297 = vxor.u32 %v4283, 2147483648
        %v4298 = vxor.u32 %v4287, 2147483648
        %v4299 = vmul.f32 %v4291, 1.442695
        %v4300 = vpow.pop %v4299
        %v4301 = vmul.f32 %v4292, 1.442695
        %v4302 = vpow.pop %v4301
        %v4303 = vmul.f32 %v4293, 1.442695
        %v4304 = vpow.pop %v4303
        %v4305 = vmul.f32 %v4294, 1.442695
        %v4306 = vpow.pop %v4305
        %v4307 = vmul.f32 %v4295, 1.442695
        %v4308 = vpow.pop %v4307
        %v4309 = vmul.f32 %v4296, 1.442695
        %v4310 = vpow.pop %v4309
        %v4311 = vmul.f32 %v4297, 1.442695
        %v4312 = vpow.pop %v4311
        %v4313 = vmul.f32 %v4298, 1.442695
        %v4314 = vpow.pop %v4313
        %v4315 = vadd.f32 %v4300, 1.0
        %v4316 = vadd.f32 %v4302, 1.0
        %v4317 = vadd.f32 %v4304, 1.0
        %v4318 = vadd.f32 %v4306, 1.0
        %v4319 = vadd.f32 %v4308, 1.0
        %v4320 = vadd.f32 %v4310, 1.0
        %v4321 = vadd.f32 %v4312, 1.0
        %v4322 = vadd.f32 %v4314, 1.0
        %v4323 = vrcp.pop %v4315
        %v4324 = vmul.f32 1.0, %v4323
        %v4325 = vrcp.pop %v4316
        %v4326 = vmul.f32 1.0, %v4325
        %v4327 = vrcp.pop %v4317
        %v4328 = vmul.f32 1.0, %v4327
        %v4329 = vrcp.pop %v4318
        %v4330 = vmul.f32 1.0, %v4329
        %v4331 = vrcp.pop %v4319
        %v4332 = vmul.f32 1.0, %v4331
        %v4333 = vrcp.pop %v4320
        %v4334 = vmul.f32 1.0, %v4333
        %v4335 = vrcp.pop %v4321
        %v4336 = vmul.f32 1.0, %v4335
        %v4337 = vrcp.pop %v4322
        %v4338 = vmul.f32 1.0, %v4337
        %v4339 = vxor.u32 %v4260, 2147483648
        %v4340 = vxor.u32 %v4264, 2147483648
        %v4341 = vxor.u32 %v4268, 2147483648
        %v4342 = vxor.u32 %v4272, 2147483648
        %v4343 = vxor.u32 %v4276, 2147483648
        %v4344 = vxor.u32 %v4280, 2147483648
        %v4345 = vxor.u32 %v4284, 2147483648
        %v4346 = vxor.u32 %v4288, 2147483648
        %v4347 = vmul.f32 %v4339, 1.442695
        %v4348 = vpow.pop %v4347
        %v4349 = vmul.f32 %v4340, 1.442695
        %v4350 = vpow.pop %v4349
        %v4351 = vmul.f32 %v4341, 1.442695
        %v4352 = vpow.pop %v4351
        %v4353 = vmul.f32 %v4342, 1.442695
        %v4354 = vpow.pop %v4353
        %v4355 = vmul.f32 %v4343, 1.442695
        %v4356 = vpow.pop %v4355
        %v4357 = vmul.f32 %v4344, 1.442695
        %v4358 = vpow.pop %v4357
        %v4359 = vmul.f32 %v4345, 1.442695
        %v4360 = vpow.pop %v4359
        %v4361 = vmul.f32 %v4346, 1.442695
        %v4362 = vpow.pop %v4361
        %v4363 = vadd.f32 %v4348, 1.0
        %v4364 = vadd.f32 %v4350, 1.0
        %v4365 = vadd.f32 %v4352, 1.0
        %v4366 = vadd.f32 %v4354, 1.0
        %v4367 = vadd.f32 %v4356, 1.0
        %v4368 = vadd.f32 %v4358, 1.0
        %v4369 = vadd.f32 %v4360, 1.0
        %v4370 = vadd.f32 %v4362, 1.0
        %v4371 = vrcp.pop %v4363
        %v4372 = vmul.f32 1.0, %v4371
        %v4373 = vrcp.pop %v4364
        %v4374 = vmul.f32 1.0, %v4373
        %v4375 = vrcp.pop %v4365
        %v4376 = vmul.f32 1.0, %v4375
        %v4377 = vrcp.pop %v4366
        %v4378 = vmul.f32 1.0, %v4377
        %v4379 = vrcp.pop %v4367
        %v4380 = vmul.f32 1.0, %v4379
        %v4381 = vrcp.pop %v4368
        %v4382 = vmul.f32 1.0, %v4381
        %v4383 = vrcp.pop %v4369
        %v4384 = vmul.f32 1.0, %v4383
        %v4385 = vrcp.pop %v4370
        %v4386 = vmul.f32 1.0, %v4385
        %v4387 = vtanh.pop %v4261
        %v4388 = vtanh.pop %v4265
        %v4389 = vtanh.pop %v4269
        %v4390 = vtanh.pop %v4273
        %v4391 = vtanh.pop %v4277
        %v4392 = vtanh.pop %v4281
        %v4393 = vtanh.pop %v4285
        %v4394 = vtanh.pop %v4289
        %v4395 = vxor.u32 %v4262, 2147483648
        %v4396 = vxor.u32 %v4266, 2147483648
        %v4397 = vxor.u32 %v4270, 2147483648
        %v4398 = vxor.u32 %v4274, 2147483648
        %v4399 = vxor.u32 %v4278, 2147483648
        %v4400 = vxor.u32 %v4282, 2147483648
        %v4401 = vxor.u32 %v4286, 2147483648
        %v4402 = vxor.u32 %v4290, 2147483648
        %v4403 = vmul.f32 %v4395, 1.442695
        %v4404 = vpow.pop %v4403
        %v4405 = vmul.f32 %v4396, 1.442695
        %v4406 = vpow.pop %v4405
        %v4407 = vmul.f32 %v4397, 1.442695
        %v4408 = vpow.pop %v4407
        %v4409 = vmul.f32 %v4398, 1.442695
        %v4410 = vpow.pop %v4409
        %v4411 = vmul.f32 %v4399, 1.442695
        %v4412 = vpow.pop %v4411
        %v4413 = vmul.f32 %v4400, 1.442695
        %v4414 = vpow.pop %v4413
        %v4415 = vmul.f32 %v4401, 1.442695
        %v4416 = vpow.pop %v4415
        %v4417 = vmul.f32 %v4402, 1.442695
        %v4418 = vpow.pop %v4417
        %v4419 = vadd.f32 %v4404, 1.0
        %v4420 = vadd.f32 %v4406, 1.0
        %v4421 = vadd.f32 %v4408, 1.0
        %v4422 = vadd.f32 %v4410, 1.0
        %v4423 = vadd.f32 %v4412, 1.0
        %v4424 = vadd.f32 %v4414, 1.0
        %v4425 = vadd.f32 %v4416, 1.0
        %v4426 = vadd.f32 %v4418, 1.0
        %v4427 = vrcp.pop %v4419
        %v4428 = vmul.f32 1.0, %v4427
        %v4429 = vrcp.pop %v4420
        %v4430 = vmul.f32 1.0, %v4429
        %v4431 = vrcp.pop %v4421
        %v4432 = vmul.f32 1.0, %v4431
        %v4433 = vrcp.pop %v4422
        %v4434 = vmul.f32 1.0, %v4433
        %v4435 = vrcp.pop %v4423
        %v4436 = vmul.f32 1.0, %v4435
        %v4437 = vrcp.pop %v4424
        %v4438 = vmul.f32 1.0, %v4437
        %v4439 = vrcp.pop %v4425
        %v4440 = vmul.f32 1.0, %v4439
        %v4441 = vrcp.pop %v4426
        %v4442 = vmul.f32 1.0, %v4441
        %v4451 = vrot.slane %v3909, 7
        %v4452 = vrot.slane %v3910, 7
        %v4453 = vrot.slane %v3911, 7
        %v4454 = vrot.slane %v3912, 7
        %v4455 = vrot.slane %v3913, 7
        %v4456 = vrot.slane %v3914, 7
        %v4457 = vrot.slane %v3915, 7
        %v4458 = vrot.slane %v3916, 7
        %v4467 = vmul.f32 %v4372, %v4451
        %v4468 = vmul.f32 %v4374, %v4452
        %v4469 = vmul.f32 %v4376, %v4453
        %v4470 = vmul.f32 %v4378, %v4454
        %v4471 = vmul.f32 %v4380, %v4455
        %v4472 = vmul.f32 %v4382, %v4456
        %v4473 = vmul.f32 %v4384, %v4457
        %v4474 = vmul.f32 %v4386, %v4458
        %v4475 = vmul.f32 %v4324, %v4387
        %v4476 = vmul.f32 %v4326, %v4388
        %v4477 = vmul.f32 %v4328, %v4389
        %v4478 = vmul.f32 %v4330, %v4390
        %v4479 = vmul.f32 %v4332, %v4391
        %v4480 = vmul.f32 %v4334, %v4392
        %v4481 = vmul.f32 %v4336, %v4393
        %v4482 = vmul.f32 %v4338, %v4394
        %v4483 = vadd.f32 %v4467, %v4475
        %v4484 = vadd.f32 %v4468, %v4476
        %v4485 = vadd.f32 %v4469, %v4477
        %v4486 = vadd.f32 %v4470, %v4478
        %v4487 = vadd.f32 %v4471, %v4479
        %v4488 = vadd.f32 %v4472, %v4480
        %v4489 = vadd.f32 %v4473, %v4481
        %v4490 = vadd.f32 %v4474, %v4482
        %v4491 = vtanh.pop %v4483
        %v4492 = vtanh.pop %v4484
        %v4493 = vtanh.pop %v4485
        %v4494 = vtanh.pop %v4486
        %v4495 = vtanh.pop %v4487
        %v4496 = vtanh.pop %v4488
        %v4497 = vtanh.pop %v4489
        %v4498 = vtanh.pop %v4490
        %v4499 = vmul.f32 %v4428, %v4491
        %v4500 = vmul.f32 %v4430, %v4492
        %v4501 = vmul.f32 %v4432, %v4493
        %v4502 = vmul.f32 %v4434, %v4494
        %v4503 = vmul.f32 %v4436, %v4495
        %v4504 = vmul.f32 %v4438, %v4496
        %v4505 = vmul.f32 %v4440, %v4497
        %v4506 = vmul.f32 %v4442, %v4498
        %v4515 = vrot.slane %v4500, 7
        %v4516 = vsel %vm1321, %v4515, %v4499
        %v4517 = vrot.slane %v4501, 6
        %v4518 = vsel %vm1324, %v4517, %v4516
        %v4519 = vrot.slane %v4502, 5
        %v4520 = vrot.slane %v4503, 4
        %v4521 = vsel %vm1306, %v4520, %v4519
        %v4522 = vrot.slane %v4504, 3
        %v4523 = vsel %vm1309, %v4522, %v4521
        %v4524 = vrot.slane %v4505, 2
        %v4525 = vsel %vm1312, %v4524, %v4523
        %v4526 = vrot.slane %v4506, 1
        %v4527 = vsel %vm1315, %v4526, %v4525
        %v4531 = vrot.slane %v4072, 3
        %v4533 = vpack.c.bf16 %v4527, %v4518
        %v4534 = vpack.c.bf16 %v4531, %v4531
        %v4536 = vshrl.u32 %v4533, 16
        %v4538 = vrot.slane %v4536, 2
        %v4539 = vshll.u32 %v4533, 16
        %v4541 = vrot.slane %v4539, 3
        %v4542 = vor.u32 %v4538, %v4541
        %v4544 = vshrl.u32 %v4534, 16
        %v4546 = vrot.slane %v4544, 2
        %v4547 = vshll.u32 %v4534, 16
        %v4549 = vrot.slane %v4547, 3
        %v4550 = vor.u32 %v4546, %v4549
        %4553 = vmatprep.subr.bf16.mxu0 %v1522
        %4554 = vmatpush1.bf16.msra.mxu0 %v1521
        %4555 = vmatprep.subr.bf16.mxu0 %v1526
        %4556 = vmatpush1.bf16.msra.mxu0 %v1525
        %4557 = vmatprep.subr.bf16.mxu0 %v1530
        %4558 = vmatpush1.bf16.msra.mxu0 %v1529
        %4559 = vmatprep.subr.bf16.mxu0 %v1534
        %4560 = vmatpush1.bf16.msra.mxu0 %v1533
        %4561 = vmatprep.subr.bf16.mxu0 %v1538
        %4562 = vmatpush1.bf16.msra.mxu0 %v1537
        %4563 = vmatprep.subr.bf16.mxu0 %v1542
        %4564 = vmatpush1.bf16.msra.mxu0 %v1541
        %4565 = vmatprep.subr.bf16.mxu0 %v1546
        %4566 = vmatpush1.bf16.msra.mxu0 %v1545
        %4567 = vmatprep.subr.bf16.mxu0 %v1550
        %4568 = vmatpush1.bf16.msra.mxu0 %v1549
        %4569 = vmatprep.subr.bf16.mxu0 %v1554
        %4570 = vmatpush1.bf16.msra.mxu0 %v1553
        %4571 = vmatprep.subr.bf16.mxu0 %v1558
        %4572 = vmatpush1.bf16.msra.mxu0 %v1557
        %4573 = vmatprep.subr.bf16.mxu0 %v1562
        %4574 = vmatpush1.bf16.msra.mxu0 %v1561
        %4575 = vmatprep.subr.bf16.mxu0 %v1566
        %4576 = vmatpush1.bf16.msra.mxu0 %v1565
        %4577 = vmatprep.subr.bf16.mxu0 %v1570
        %4578 = vmatpush1.bf16.msra.mxu0 %v1569
        %4579 = vmatprep.subr.bf16.mxu0 %v1574
        %4580 = vmatpush1.bf16.msra.mxu0 %v1573
        %4581 = vmatprep.subr.bf16.mxu0 %v1578
        %4582 = vmatpush1.bf16.msra.mxu0 %v1577
        %4583 = vmatprep.subr.bf16.mxu0 %v1582
        %4584 = vmatpush1.bf16.msra.mxu0 %v1581
        %4585 = vmatprep.mubr.bf16.mxu0 %v4550
        %4586 = vmatmul.mubr.bf16.gmra.mrb[0].mxu0 %v4542
        %v4587 = vpop.f32.mrb[0].mxu0
        %v4588 = vadd.f32 %v729, %v4587
        %v4589 = vpop.f32.mrb[0].mxu0
        %v4590 = vadd.f32 %v733, %v4589
        %v4591 = vpop.f32.mrb[0].mxu0
        %v4592 = vpop.f32.mrb[0].mxu0
        %4593 = vdwg.mxu0
        %4594 = vmatprep.subr.bf16.mxu0 %v1524
        %4595 = vmatpush1.bf16.msra.mxu0 %v1523
        %4596 = vmatprep.subr.bf16.mxu0 %v1528
        %4597 = vmatpush1.bf16.msra.mxu0 %v1527
        %4598 = vmatprep.subr.bf16.mxu0 %v1532
        %4599 = vmatpush1.bf16.msra.mxu0 %v1531
        %4600 = vmatprep.subr.bf16.mxu0 %v1536
        %4601 = vmatpush1.bf16.msra.mxu0 %v1535
        %4602 = vmatprep.subr.bf16.mxu0 %v1540
        %4603 = vmatpush1.bf16.msra.mxu0 %v1539
        %4604 = vmatprep.subr.bf16.mxu0 %v1544
        %4605 = vmatpush1.bf16.msra.mxu0 %v1543
        %4606 = vmatprep.subr.bf16.mxu0 %v1548
        %4607 = vmatpush1.bf16.msra.mxu0 %v1547
        %4608 = vmatprep.subr.bf16.mxu0 %v1552
        %4609 = vmatpush1.bf16.msra.mxu0 %v1551
        %4610 = vmatprep.subr.bf16.mxu0 %v1556
        %4611 = vmatpush1.bf16.msra.mxu0 %v1555
        %4612 = vmatprep.subr.bf16.mxu0 %v1560
        %4613 = vmatpush1.bf16.msra.mxu0 %v1559
        %4614 = vmatprep.subr.bf16.mxu0 %v1564
        %4615 = vmatpush1.bf16.msra.mxu0 %v1563
        %4616 = vmatprep.subr.bf16.mxu0 %v1568
        %4617 = vmatpush1.bf16.msra.mxu0 %v1567
        %4618 = vmatprep.subr.bf16.mxu0 %v1572
        %4619 = vmatpush1.bf16.msra.mxu0 %v1571
        %4620 = vmatprep.subr.bf16.mxu0 %v1576
        %4621 = vmatpush1.bf16.msra.mxu0 %v1575
        %4622 = vmatprep.subr.bf16.mxu0 %v1580
        %4623 = vmatpush1.bf16.msra.mxu0 %v1579
        %4624 = vmatprep.subr.bf16.mxu0 %v1584
        %4625 = vmatpush1.bf16.msra.mxu0 %v1583
        %4626 = vmatprep.mubr.bf16.mxu0 %v4550
        %4627 = vmatmul.mubr.bf16.gmra.mrb[0].mxu0 %v4542
        %v4628 = vpop.f32.mrb[0].mxu0
        %v4629 = vadd.f32 %v737, %v4628
        %v4630 = vpop.f32.mrb[0].mxu0
        %v4631 = vadd.f32 %v741, %v4630
        %v4632 = vpop.f32.mrb[0].mxu0
        %v4633 = vpop.f32.mrb[0].mxu0
        %4634 = vdwg.mxu0
        %v4635 = vxor.u32 %v4588, 2147483648
        %v4636 = vmul.f32 %v4635, 1.442695
        %v4637 = vpow.pop %v4636
        %v4638 = vadd.f32 %v4637, 1.0
        %v4639 = vrcp.pop %v4638
        %v4640 = vmul.f32 1.0, %v4639
        %v4641 = vxor.u32 %v4590, 2147483648
        %v4642 = vmul.f32 %v4641, 1.442695
        %v4643 = vpow.pop %v4642
        %v4644 = vadd.f32 %v4643, 1.0
        %v4645 = vrcp.pop %v4644
        %v4646 = vmul.f32 1.0, %v4645
        %v4647 = vtanh.pop %v4629
        %v4648 = vxor.u32 %v4631, 2147483648
        %v4649 = vmul.f32 %v4648, 1.442695
        %v4650 = vpow.pop %v4649
        %v4651 = vadd.f32 %v4650, 1.0
        %v4652 = vrcp.pop %v4651
        %v4653 = vmul.f32 1.0, %v4652
        %v4654 = vmul.f32 %v4646, %v4070
        %v4655 = vmul.f32 %v4640, %v4647
        %v4656 = vadd.f32 %v4654, %v4655
        %v4657 = vtanh.pop %v4656
        %v4658 = vmul.f32 %v4653, %v4657
        %v4659 = vpack.c.bf16 %v4499, %v4499
        %v4660 = vpack.c.bf16 %v4500, %v4500
        %v4661 = vpack.c.bf16 %v4501, %v4501
        %v4662 = vpack.c.bf16 %v4502, %v4502
        %v4663 = vpack.c.bf16 %v4503, %v4503
        %v4664 = vpack.c.bf16 %v4504, %v4504
        %v4665 = vpack.c.bf16 %v4505, %v4505
        %v4666 = vpack.c.bf16 %v4506, %v4506
        %v4675 = vunpack.c.l.b16 %v4659
        %v4676 = vunpack.c.l.b16 %v4660
        %v4677 = vunpack.c.l.b16 %v4661
        %v4678 = vunpack.c.l.b16 %v4662
        %v4679 = vunpack.c.l.b16 %v4663
        %v4680 = vunpack.c.l.b16 %v4664
        %v4681 = vunpack.c.l.b16 %v4665
        %v4682 = vunpack.c.l.b16 %v4666
        %v4683 = vrot.slane %v4675, 5
        %v4684 = vrot.slane %v4676, 4
        %v4685 = vsel %vm1306, %v4684, %v4683
        %v4686 = vrot.slane %v4677, 3
        %v4687 = vsel %vm1309, %v4686, %v4685
        %v4688 = vrot.slane %v4678, 2
        %v4689 = vsel %vm1312, %v4688, %v4687
        %v4690 = vrot.slane %v4679, 1
        %v4691 = vsel %vm1315, %v4690, %v4689
        %v4692 = vsel %vm1318, %v4680, %v4691
        %v4693 = vrot.slane %v4681, 7
        %v4694 = vsel %vm1321, %v4693, %v4692
        %v4695 = vrot.slane %v4682, 6
        %v4696 = vsel %vm1324, %v4695, %v4694
        %v4697 = vpack.c.b16 %v4696, %v4696
        %4699 = vmatprep.subr.bf16.mxu0 %v848
        %4700 = vmatpush1.bf16.msra.mxu0 %v847
        %4701 = vmatprep.subr.bf16.mxu0 %v852
        %4702 = vmatpush1.bf16.msra.mxu0 %v851
        %4703 = vmatprep.subr.bf16.mxu0 %v856
        %4704 = vmatpush1.bf16.msra.mxu0 %v855
        %4705 = vmatprep.subr.bf16.mxu0 %v860
        %4706 = vmatpush1.bf16.msra.mxu0 %v859
        %4707 = vmatprep.subr.bf16.mxu0 %v864
        %4708 = vmatpush1.bf16.msra.mxu0 %v863
        %4709 = vmatprep.subr.bf16.mxu0 %v868
        %4710 = vmatpush1.bf16.msra.mxu0 %v867
        %4711 = vmatprep.subr.bf16.mxu0 %v872
        %4712 = vmatpush1.bf16.msra.mxu0 %v871
        %4713 = vmatprep.subr.bf16.mxu0 %v876
        %4714 = vmatpush1.bf16.msra.mxu0 %v875
        %4715 = vmatprep.subr.bf16.mxu0 0
        %4716 = vmatpush1.bf16.msra.mxu0 0
        %4717 = vmatprep.subr.bf16.mxu0 0
        %4718 = vmatpush1.bf16.msra.mxu0 0
        %4719 = vmatprep.subr.bf16.mxu0 0
        %4720 = vmatpush1.bf16.msra.mxu0 0
        %4721 = vmatprep.subr.bf16.mxu0 0
        %4722 = vmatpush1.bf16.msra.mxu0 0
        %4723 = vmatprep.subr.bf16.mxu0 0
        %4724 = vmatpush1.bf16.msra.mxu0 0
        %4725 = vmatprep.subr.bf16.mxu0 0
        %4726 = vmatpush1.bf16.msra.mxu0 0
        %4727 = vmatprep.subr.bf16.mxu0 0
        %4728 = vmatpush1.bf16.msra.mxu0 0
        %4729 = vmatprep.subr.bf16.mxu0 0
        %4730 = vmatpush1.bf16.msra.mxu0 0
        %4731 = vmatprep.mubr.bf16.mxu0 0
        %4732 = vmatmul.mubr.bf16.gmra.mrb[0].mxu0 %v4697
        %v4733 = vpop.f32.mrb[0].mxu0
        %v4734 = vadd.f32 0.0, %v4733
        %v4735 = vpop.f32.mrb[0].mxu0
        %v4736 = vadd.f32 0.0, %v4735
        %v4737 = vpop.f32.mrb[0].mxu0
        %v4738 = vpop.f32.mrb[0].mxu0
        %4739 = vdwg.mxu0
        %4740 = vmatprep.subr.bf16.mxu0 %v850
        %4741 = vmatpush1.bf16.msra.mxu0 %v849
        %4742 = vmatprep.subr.bf16.mxu0 %v854
        %4743 = vmatpush1.bf16.msra.mxu0 %v853
        %4744 = vmatprep.subr.bf16.mxu0 %v858
        %4745 = vmatpush1.bf16.msra.mxu0 %v857
        %4746 = vmatprep.subr.bf16.mxu0 %v862
        %4747 = vmatpush1.bf16.msra.mxu0 %v861
        %4748 = vmatprep.subr.bf16.mxu0 %v866
        %4749 = vmatpush1.bf16.msra.mxu0 %v865
        %4750 = vmatprep.subr.bf16.mxu0 %v870
        %4751 = vmatpush1.bf16.msra.mxu0 %v869
        %4752 = vmatprep.subr.bf16.mxu0 %v874
        %4753 = vmatpush1.bf16.msra.mxu0 %v873
        %4754 = vmatprep.subr.bf16.mxu0 %v878
        %4755 = vmatpush1.bf16.msra.mxu0 %v877
        %4756 = vmatprep.subr.bf16.mxu0 0
        %4757 = vmatpush1.bf16.msra.mxu0 0
        %4758 = vmatprep.subr.bf16.mxu0 0
        %4759 = vmatpush1.bf16.msra.mxu0 0
        %4760 = vmatprep.subr.bf16.mxu0 0
        %4761 = vmatpush1.bf16.msra.mxu0 0
        %4762 = vmatprep.subr.bf16.mxu0 0
        %4763 = vmatpush1.bf16.msra.mxu0 0
        %4764 = vmatprep.subr.bf16.mxu0 0
        %4765 = vmatpush1.bf16.msra.mxu0 0
        %4766 = vmatprep.subr.bf16.mxu0 0
        %4767 = vmatpush1.bf16.msra.mxu0 0
        %4768 = vmatprep.subr.bf16.mxu0 0
        %4769 = vmatpush1.bf16.msra.mxu0 0
        %4770 = vmatprep.subr.bf16.mxu0 0
        %4771 = vmatpush1.bf16.msra.mxu0 0
        %4772 = vmatprep.mubr.bf16.mxu0 0
        %4773 = vmatmul.mubr.bf16.gmra.mrb[0].mxu0 %v4697
        %v4774 = vpop.f32.mrb[0].mxu0
        %v4775 = vadd.f32 0.0, %v4774
        %v4776 = vpop.f32.mrb[0].mxu0
        %v4777 = vadd.f32 0.0, %v4776
        %v4778 = vpop.f32.mrb[0].mxu0
        %v4779 = vpop.f32.mrb[0].mxu0
        %4780 = vdwg.mxu0
        %v4785 = vrot.slane %v4734, 2
        %v4786 = vrot.slane %v4736, 2
        %v4787 = vrot.slane %v4775, 2
        %v4788 = vrot.slane %v4777, 2
        %v4789 = vrot.slane %v4734, 3
        %v4790 = vrot.slane %v4736, 3
        %v4791 = vrot.slane %v4775, 3
        %v4792 = vrot.slane %v4777, 3
        %v4793 = vrot.slane %v4734, 4
        %v4794 = vrot.slane %v4736, 4
        %v4795 = vrot.slane %v4775, 4
        %v4796 = vrot.slane %v4777, 4
        %v4797 = vrot.slane %v4734, 5
        %v4798 = vrot.slane %v4736, 5
        %v4799 = vrot.slane %v4775, 5
        %v4800 = vrot.slane %v4777, 5
        %v4801 = vrot.slane %v4734, 6
        %v4802 = vrot.slane %v4736, 6
        %v4803 = vrot.slane %v4775, 6
        %v4804 = vrot.slane %v4777, 6
        %v4805 = vrot.slane %v4734, 7
        %v4806 = vrot.slane %v4736, 7
        %v4807 = vrot.slane %v4775, 7
        %v4808 = vrot.slane %v4777, 7
        %v4809 = vrot.slane %v4734, 1
        %v4810 = vrot.slane %v4736, 1
        %v4811 = vrot.slane %v4775, 1
        %v4812 = vrot.slane %v4777, 1
        %v4845 = vadd.f32 %v517, %v4785
        %v4846 = vadd.f32 %v519, %v4786
        %v4847 = vadd.f32 %v590, %v4787
        %v4848 = vadd.f32 %v592, %v4788
        %v4849 = vadd.f32 %v521, %v4789
        %v4850 = vadd.f32 %v523, %v4790
        %v4851 = vadd.f32 %v594, %v4791
        %v4852 = vadd.f32 %v596, %v4792
        %v4853 = vadd.f32 %v527, %v4793
        %v4854 = vadd.f32 %v529, %v4794
        %v4855 = vadd.f32 %v600, %v4795
        %v4856 = vadd.f32 %v602, %v4796
        %v4857 = vadd.f32 %v531, %v4797
        %v4858 = vadd.f32 %v533, %v4798
        %v4859 = vadd.f32 %v604, %v4799
        %v4860 = vadd.f32 %v606, %v4800
        %v4861 = vadd.f32 %v537, %v4801
        %v4862 = vadd.f32 %v539, %v4802
        %v4863 = vadd.f32 %v610, %v4803
        %v4864 = vadd.f32 %v612, %v4804
        %v4865 = vadd.f32 %v541, %v4805
        %v4866 = vadd.f32 %v543, %v4806
        %v4867 = vadd.f32 %v614, %v4807
        %v4868 = vadd.f32 %v616, %v4808
        %v4869 = vadd.f32 %v547, %v4734
        %v4870 = vadd.f32 %v549, %v4736
        %v4871 = vadd.f32 %v620, %v4775
        %v4872 = vadd.f32 %v622, %v4777
        %v4873 = vadd.f32 %v551, %v4809
        %v4874 = vadd.f32 %v553, %v4810
        %v4875 = vadd.f32 %v624, %v4811
        %v4876 = vadd.f32 %v626, %v4812
        %v4877 = vxor.u32 %v4845, 2147483648
        %v4878 = vxor.u32 %v4849, 2147483648
        %v4879 = vxor.u32 %v4853, 2147483648
        %v4880 = vxor.u32 %v4857, 2147483648
        %v4881 = vxor.u32 %v4861, 2147483648
        %v4882 = vxor.u32 %v4865, 2147483648
        %v4883 = vxor.u32 %v4869, 2147483648
        %v4884 = vxor.u32 %v4873, 2147483648
        %v4885 = vmul.f32 %v4877, 1.442695
        %v4886 = vpow.pop %v4885
        %v4887 = vmul.f32 %v4878, 1.442695
        %v4888 = vpow.pop %v4887
        %v4889 = vmul.f32 %v4879, 1.442695
        %v4890 = vpow.pop %v4889
        %v4891 = vmul.f32 %v4880, 1.442695
        %v4892 = vpow.pop %v4891
        %v4893 = vmul.f32 %v4881, 1.442695
        %v4894 = vpow.pop %v4893
        %v4895 = vmul.f32 %v4882, 1.442695
        %v4896 = vpow.pop %v4895
        %v4897 = vmul.f32 %v4883, 1.442695
        %v4898 = vpow.pop %v4897
        %v4899 = vmul.f32 %v4884, 1.442695
        %v4900 = vpow.pop %v4899
        %v4901 = vadd.f32 %v4886, 1.0
        %v4902 = vadd.f32 %v4888, 1.0
        %v4903 = vadd.f32 %v4890, 1.0
        %v4904 = vadd.f32 %v4892, 1.0
        %v4905 = vadd.f32 %v4894, 1.0
        %v4906 = vadd.f32 %v4896, 1.0
        %v4907 = vadd.f32 %v4898, 1.0
        %v4908 = vadd.f32 %v4900, 1.0
        %v4909 = vrcp.pop %v4901
        %v4910 = vmul.f32 1.0, %v4909
        %v4911 = vrcp.pop %v4902
        %v4912 = vmul.f32 1.0, %v4911
        %v4913 = vrcp.pop %v4903
        %v4914 = vmul.f32 1.0, %v4913
        %v4915 = vrcp.pop %v4904
        %v4916 = vmul.f32 1.0, %v4915
        %v4917 = vrcp.pop %v4905
        %v4918 = vmul.f32 1.0, %v4917
        %v4919 = vrcp.pop %v4906
        %v4920 = vmul.f32 1.0, %v4919
        %v4921 = vrcp.pop %v4907
        %v4922 = vmul.f32 1.0, %v4921
        %v4923 = vrcp.pop %v4908
        %v4924 = vmul.f32 1.0, %v4923
        %v4925 = vxor.u32 %v4846, 2147483648
        %v4926 = vxor.u32 %v4850, 2147483648
        %v4927 = vxor.u32 %v4854, 2147483648
        %v4928 = vxor.u32 %v4858, 2147483648
        %v4929 = vxor.u32 %v4862, 2147483648
        %v4930 = vxor.u32 %v4866, 2147483648
        %v4931 = vxor.u32 %v4870, 2147483648
        %v4932 = vxor.u32 %v4874, 2147483648
        %v4933 = vmul.f32 %v4925, 1.442695
        %v4934 = vpow.pop %v4933
        %v4935 = vmul.f32 %v4926, 1.442695
        %v4936 = vpow.pop %v4935
        %v4937 = vmul.f32 %v4927, 1.442695
        %v4938 = vpow.pop %v4937
        %v4939 = vmul.f32 %v4928, 1.442695
        %v4940 = vpow.pop %v4939
        %v4941 = vmul.f32 %v4929, 1.442695
        %v4942 = vpow.pop %v4941
        %v4943 = vmul.f32 %v4930, 1.442695
        %v4944 = vpow.pop %v4943
        %v4945 = vmul.f32 %v4931, 1.442695
        %v4946 = vpow.pop %v4945
        %v4947 = vmul.f32 %v4932, 1.442695
        %v4948 = vpow.pop %v4947
        %v4949 = vadd.f32 %v4934, 1.0
        %v4950 = vadd.f32 %v4936, 1.0
        %v4951 = vadd.f32 %v4938, 1.0
        %v4952 = vadd.f32 %v4940, 1.0
        %v4953 = vadd.f32 %v4942, 1.0
        %v4954 = vadd.f32 %v4944, 1.0
        %v4955 = vadd.f32 %v4946, 1.0
        %v4956 = vadd.f32 %v4948, 1.0
        %v4957 = vrcp.pop %v4949
        %v4958 = vmul.f32 1.0, %v4957
        %v4959 = vrcp.pop %v4950
        %v4960 = vmul.f32 1.0, %v4959
        %v4961 = vrcp.pop %v4951
        %v4962 = vmul.f32 1.0, %v4961
        %v4963 = vrcp.pop %v4952
        %v4964 = vmul.f32 1.0, %v4963
        %v4965 = vrcp.pop %v4953
        %v4966 = vmul.f32 1.0, %v4965
        %v4967 = vrcp.pop %v4954
        %v4968 = vmul.f32 1.0, %v4967
        %v4969 = vrcp.pop %v4955
        %v4970 = vmul.f32 1.0, %v4969
        %v4971 = vrcp.pop %v4956
        %v4972 = vmul.f32 1.0, %v4971
        %v4973 = vtanh.pop %v4847
        %v4974 = vtanh.pop %v4851
        %v4975 = vtanh.pop %v4855
        %v4976 = vtanh.pop %v4859
        %v4977 = vtanh.pop %v4863
        %v4978 = vtanh.pop %v4867
        %v4979 = vtanh.pop %v4871
        %v4980 = vtanh.pop %v4875
        %v4981 = vxor.u32 %v4848, 2147483648
        %v4982 = vxor.u32 %v4852, 2147483648
        %v4983 = vxor.u32 %v4856, 2147483648
        %v4984 = vxor.u32 %v4860, 2147483648
        %v4985 = vxor.u32 %v4864, 2147483648
        %v4986 = vxor.u32 %v4868, 2147483648
        %v4987 = vxor.u32 %v4872, 2147483648
        %v4988 = vxor.u32 %v4876, 2147483648
        %v4989 = vmul.f32 %v4981, 1.442695
        %v4990 = vpow.pop %v4989
        %v4991 = vmul.f32 %v4982, 1.442695
        %v4992 = vpow.pop %v4991
        %v4993 = vmul.f32 %v4983, 1.442695
        %v4994 = vpow.pop %v4993
        %v4995 = vmul.f32 %v4984, 1.442695
        %v4996 = vpow.pop %v4995
        %v4997 = vmul.f32 %v4985, 1.442695
        %v4998 = vpow.pop %v4997
        %v4999 = vmul.f32 %v4986, 1.442695
        %v5000 = vpow.pop %v4999
        %v5001 = vmul.f32 %v4987, 1.442695
        %v5002 = vpow.pop %v5001
        %v5003 = vmul.f32 %v4988, 1.442695
        %v5004 = vpow.pop %v5003
        %v5005 = vadd.f32 %v4990, 1.0
        %v5006 = vadd.f32 %v4992, 1.0
        %v5007 = vadd.f32 %v4994, 1.0
        %v5008 = vadd.f32 %v4996, 1.0
        %v5009 = vadd.f32 %v4998, 1.0
        %v5010 = vadd.f32 %v5000, 1.0
        %v5011 = vadd.f32 %v5002, 1.0
        %v5012 = vadd.f32 %v5004, 1.0
        %v5013 = vrcp.pop %v5005
        %v5014 = vmul.f32 1.0, %v5013
        %v5015 = vrcp.pop %v5006
        %v5016 = vmul.f32 1.0, %v5015
        %v5017 = vrcp.pop %v5007
        %v5018 = vmul.f32 1.0, %v5017
        %v5019 = vrcp.pop %v5008
        %v5020 = vmul.f32 1.0, %v5019
        %v5021 = vrcp.pop %v5009
        %v5022 = vmul.f32 1.0, %v5021
        %v5023 = vrcp.pop %v5010
        %v5024 = vmul.f32 1.0, %v5023
        %v5025 = vrcp.pop %v5011
        %v5026 = vmul.f32 1.0, %v5025
        %v5027 = vrcp.pop %v5012
        %v5028 = vmul.f32 1.0, %v5027
        %v5037 = vrot.slane %v4483, 7
        %v5038 = vrot.slane %v4484, 7
        %v5039 = vrot.slane %v4485, 7
        %v5040 = vrot.slane %v4486, 7
        %v5041 = vrot.slane %v4487, 7
        %v5042 = vrot.slane %v4488, 7
        %v5043 = vrot.slane %v4489, 7
        %v5044 = vrot.slane %v4490, 7
        %v5053 = vmul.f32 %v4958, %v5037
        %v5054 = vmul.f32 %v4960, %v5038
        %v5055 = vmul.f32 %v4962, %v5039
        %v5056 = vmul.f32 %v4964, %v5040
        %v5057 = vmul.f32 %v4966, %v5041
        %v5058 = vmul.f32 %v4968, %v5042
        %v5059 = vmul.f32 %v4970, %v5043
        %v5060 = vmul.f32 %v4972, %v5044
        %v5061 = vmul.f32 %v4910, %v4973
        %v5062 = vmul.f32 %v4912, %v4974
        %v5063 = vmul.f32 %v4914, %v4975
        %v5064 = vmul.f32 %v4916, %v4976
        %v5065 = vmul.f32 %v4918, %v4977
        %v5066 = vmul.f32 %v4920, %v4978
        %v5067 = vmul.f32 %v4922, %v4979
        %v5068 = vmul.f32 %v4924, %v4980
        %v5069 = vadd.f32 %v5053, %v5061
        %v5070 = vadd.f32 %v5054, %v5062
        %v5071 = vadd.f32 %v5055, %v5063
        %v5072 = vadd.f32 %v5056, %v5064
        %v5073 = vadd.f32 %v5057, %v5065
        %v5074 = vadd.f32 %v5058, %v5066
        %v5075 = vadd.f32 %v5059, %v5067
        %v5076 = vadd.f32 %v5060, %v5068
        %v5077 = vtanh.pop %v5069
        %v5078 = vtanh.pop %v5070
        %v5079 = vtanh.pop %v5071
        %v5080 = vtanh.pop %v5072
        %v5081 = vtanh.pop %v5073
        %v5082 = vtanh.pop %v5074
        %v5083 = vtanh.pop %v5075
        %v5084 = vtanh.pop %v5076
        %v5085 = vmul.f32 %v5014, %v5077
        %v5086 = vmul.f32 %v5016, %v5078
        %v5087 = vmul.f32 %v5018, %v5079
        %v5088 = vmul.f32 %v5020, %v5080
        %v5089 = vmul.f32 %v5022, %v5081
        %v5090 = vmul.f32 %v5024, %v5082
        %v5091 = vmul.f32 %v5026, %v5083
        %v5092 = vmul.f32 %v5028, %v5084
        %v5101 = vrot.slane %v5086, 7
        %v5102 = vsel %vm1324, %v5101, %v5085
        %v5103 = vrot.slane %v5087, 6
        %v5104 = vrot.slane %v5088, 5
        %v5105 = vsel %vm1306, %v5104, %v5103
        %v5106 = vrot.slane %v5089, 4
        %v5107 = vsel %vm1309, %v5106, %v5105
        %v5108 = vrot.slane %v5090, 3
        %v5109 = vsel %vm1312, %v5108, %v5107
        %v5110 = vrot.slane %v5091, 2
        %v5111 = vsel %vm1315, %v5110, %v5109
        %v5112 = vrot.slane %v5092, 1
        %v5113 = vsel %vm1318, %v5112, %v5111
        %v5117 = vrot.slane %v4658, 2
        %v5119 = vpack.c.bf16 %v5113, %v5102
        %v5120 = vpack.c.bf16 %v5117, %v5117
        %v5123 = vrot.slane %v5119, 3
        %v5124 = vrot.slane %v5120, 3
        %5127 = vmatprep.subr.bf16.mxu0 %v1522
        %5128 = vmatpush1.bf16.msra.mxu0 %v1521
        %5129 = vmatprep.subr.bf16.mxu0 %v1526
        %5130 = vmatpush1.bf16.msra.mxu0 %v1525
        %5131 = vmatprep.subr.bf16.mxu0 %v1530
        %5132 = vmatpush1.bf16.msra.mxu0 %v1529
        %5133 = vmatprep.subr.bf16.mxu0 %v1534
        %5134 = vmatpush1.bf16.msra.mxu0 %v1533
        %5135 = vmatprep.subr.bf16.mxu0 %v1538
        %5136 = vmatpush1.bf16.msra.mxu0 %v1537
        %5137 = vmatprep.subr.bf16.mxu0 %v1542
        %5138 = vmatpush1.bf16.msra.mxu0 %v1541
        %5139 = vmatprep.subr.bf16.mxu0 %v1546
        %5140 = vmatpush1.bf16.msra.mxu0 %v1545
        %5141 = vmatprep.subr.bf16.mxu0 %v1550
        %5142 = vmatpush1.bf16.msra.mxu0 %v1549
        %5143 = vmatprep.subr.bf16.mxu0 %v1554
        %5144 = vmatpush1.bf16.msra.mxu0 %v1553
        %5145 = vmatprep.subr.bf16.mxu0 %v1558
        %5146 = vmatpush1.bf16.msra.mxu0 %v1557
        %5147 = vmatprep.subr.bf16.mxu0 %v1562
        %5148 = vmatpush1.bf16.msra.mxu0 %v1561
        %5149 = vmatprep.subr.bf16.mxu0 %v1566
        %5150 = vmatpush1.bf16.msra.mxu0 %v1565
        %5151 = vmatprep.subr.bf16.mxu0 %v1570
        %5152 = vmatpush1.bf16.msra.mxu0 %v1569
        %5153 = vmatprep.subr.bf16.mxu0 %v1574
        %5154 = vmatpush1.bf16.msra.mxu0 %v1573
        %5155 = vmatprep.subr.bf16.mxu0 %v1578
        %5156 = vmatpush1.bf16.msra.mxu0 %v1577
        %5157 = vmatprep.subr.bf16.mxu0 %v1582
        %5158 = vmatpush1.bf16.msra.mxu0 %v1581
        %5159 = vmatprep.mubr.bf16.mxu0 %v5124
        %5160 = vmatmul.mubr.bf16.gmra.mrb[0].mxu0 %v5123
        %v5161 = vpop.f32.mrb[0].mxu0
        %v5162 = vadd.f32 %v729, %v5161
        %v5163 = vpop.f32.mrb[0].mxu0
        %v5164 = vadd.f32 %v733, %v5163
        %v5165 = vpop.f32.mrb[0].mxu0
        %v5166 = vpop.f32.mrb[0].mxu0
        %5167 = vdwg.mxu0
        %5168 = vmatprep.subr.bf16.mxu0 %v1524
        %5169 = vmatpush1.bf16.msra.mxu0 %v1523
        %5170 = vmatprep.subr.bf16.mxu0 %v1528
        %5171 = vmatpush1.bf16.msra.mxu0 %v1527
        %5172 = vmatprep.subr.bf16.mxu0 %v1532
        %5173 = vmatpush1.bf16.msra.mxu0 %v1531
        %5174 = vmatprep.subr.bf16.mxu0 %v1536
        %5175 = vmatpush1.bf16.msra.mxu0 %v1535
        %5176 = vmatprep.subr.bf16.mxu0 %v1540
        %5177 = vmatpush1.bf16.msra.mxu0 %v1539
        %5178 = vmatprep.subr.bf16.mxu0 %v1544
        %5179 = vmatpush1.bf16.msra.mxu0 %v1543
        %5180 = vmatprep.subr.bf16.mxu0 %v1548
        %5181 = vmatpush1.bf16.msra.mxu0 %v1547
        %5182 = vmatprep.subr.bf16.mxu0 %v1552
        %5183 = vmatpush1.bf16.msra.mxu0 %v1551
        %5184 = vmatprep.subr.bf16.mxu0 %v1556
        %5185 = vmatpush1.bf16.msra.mxu0 %v1555
        %5186 = vmatprep.subr.bf16.mxu0 %v1560
        %5187 = vmatpush1.bf16.msra.mxu0 %v1559
        %5188 = vmatprep.subr.bf16.mxu0 %v1564
        %5189 = vmatpush1.bf16.msra.mxu0 %v1563
        %5190 = vmatprep.subr.bf16.mxu0 %v1568
        %5191 = vmatpush1.bf16.msra.mxu0 %v1567
        %5192 = vmatprep.subr.bf16.mxu0 %v1572
        %5193 = vmatpush1.bf16.msra.mxu0 %v1571
        %5194 = vmatprep.subr.bf16.mxu0 %v1576
        %5195 = vmatpush1.bf16.msra.mxu0 %v1575
        %5196 = vmatprep.subr.bf16.mxu0 %v1580
        %5197 = vmatpush1.bf16.msra.mxu0 %v1579
        %5198 = vmatprep.subr.bf16.mxu0 %v1584
        %5199 = vmatpush1.bf16.msra.mxu0 %v1583
        %5200 = vmatprep.mubr.bf16.mxu0 %v5124
        %5201 = vmatmul.mubr.bf16.gmra.mrb[0].mxu0 %v5123
        %v5202 = vpop.f32.mrb[0].mxu0
        %v5203 = vadd.f32 %v737, %v5202
        %v5204 = vpop.f32.mrb[0].mxu0
        %v5205 = vadd.f32 %v741, %v5204
        %v5206 = vpop.f32.mrb[0].mxu0
        %v5207 = vpop.f32.mrb[0].mxu0
        %5208 = vdwg.mxu0
        %v5209 = vxor.u32 %v5162, 2147483648
        %v5210 = vmul.f32 %v5209, 1.442695
        %v5211 = vpow.pop %v5210
        %v5212 = vadd.f32 %v5211, 1.0
        %v5213 = vrcp.pop %v5212
        %v5214 = vmul.f32 1.0, %v5213
        %v5215 = vxor.u32 %v5164, 2147483648
        %v5216 = vmul.f32 %v5215, 1.442695
        %v5217 = vpow.pop %v5216
        %v5218 = vadd.f32 %v5217, 1.0
        %v5219 = vrcp.pop %v5218
        %v5220 = vmul.f32 1.0, %v5219
        %v5221 = vtanh.pop %v5203
        %v5222 = vxor.u32 %v5205, 2147483648
        %v5223 = vmul.f32 %v5222, 1.442695
        %v5224 = vpow.pop %v5223
        %v5225 = vadd.f32 %v5224, 1.0
        %v5226 = vrcp.pop %v5225
        %v5227 = vmul.f32 1.0, %v5226
        %v5228 = vmul.f32 %v5220, %v4656
        %v5229 = vmul.f32 %v5214, %v5221
        %v5230 = vadd.f32 %v5228, %v5229
        %v5231 = vtanh.pop %v5230
        %v5232 = vmul.f32 %v5227, %v5231
        %v5233 = vpack.c.bf16 %v5085, %v5085
        %v5234 = vpack.c.bf16 %v5086, %v5086
        %v5235 = vpack.c.bf16 %v5087, %v5087
        %v5236 = vpack.c.bf16 %v5088, %v5088
        %v5237 = vpack.c.bf16 %v5089, %v5089
        %v5238 = vpack.c.bf16 %v5090, %v5090
        %v5239 = vpack.c.bf16 %v5091, %v5091
        %v5240 = vpack.c.bf16 %v5092, %v5092
        %v5249 = vunpack.c.l.b16 %v5233
        %v5250 = vunpack.c.l.b16 %v5234
        %v5251 = vunpack.c.l.b16 %v5235
        %v5252 = vunpack.c.l.b16 %v5236
        %v5253 = vunpack.c.l.b16 %v5237
        %v5254 = vunpack.c.l.b16 %v5238
        %v5255 = vunpack.c.l.b16 %v5239
        %v5256 = vunpack.c.l.b16 %v5240
        %v5257 = vrot.slane %v5249, 6
        %v5258 = vrot.slane %v5250, 5
        %v5259 = vsel %vm1306, %v5258, %v5257
        %v5260 = vrot.slane %v5251, 4
        %v5261 = vsel %vm1309, %v5260, %v5259
        %v5262 = vrot.slane %v5252, 3
        %v5263 = vsel %vm1312, %v5262, %v5261
        %v5264 = vrot.slane %v5253, 2
        %v5265 = vsel %vm1315, %v5264, %v5263
        %v5266 = vrot.slane %v5254, 1
        %v5267 = vsel %vm1318, %v5266, %v5265
        %v5268 = vsel %vm1321, %v5255, %v5267
        %v5269 = vrot.slane %v5256, 7
        %v5270 = vsel %vm1324, %v5269, %v5268
        %v5271 = vpack.c.b16 %v5270, %v5270
        %5273 = vmatprep.subr.bf16.mxu0 %v848
        %5274 = vmatpush1.bf16.msra.mxu0 %v847
        %5275 = vmatprep.subr.bf16.mxu0 %v852
        %5276 = vmatpush1.bf16.msra.mxu0 %v851
        %5277 = vmatprep.subr.bf16.mxu0 %v856
        %5278 = vmatpush1.bf16.msra.mxu0 %v855
        %5279 = vmatprep.subr.bf16.mxu0 %v860
        %5280 = vmatpush1.bf16.msra.mxu0 %v859
        %5281 = vmatprep.subr.bf16.mxu0 %v864
        %5282 = vmatpush1.bf16.msra.mxu0 %v863
        %5283 = vmatprep.subr.bf16.mxu0 %v868
        %5284 = vmatpush1.bf16.msra.mxu0 %v867
        %5285 = vmatprep.subr.bf16.mxu0 %v872
        %5286 = vmatpush1.bf16.msra.mxu0 %v871
        %5287 = vmatprep.subr.bf16.mxu0 %v876
        %5288 = vmatpush1.bf16.msra.mxu0 %v875
        %5289 = vmatprep.subr.bf16.mxu0 0
        %5290 = vmatpush1.bf16.msra.mxu0 0
        %5291 = vmatprep.subr.bf16.mxu0 0
        %5292 = vmatpush1.bf16.msra.mxu0 0
        %5293 = vmatprep.subr.bf16.mxu0 0
        %5294 = vmatpush1.bf16.msra.mxu0 0
        %5295 = vmatprep.subr.bf16.mxu0 0
        %5296 = vmatpush1.bf16.msra.mxu0 0
        %5297 = vmatprep.subr.bf16.mxu0 0
        %5298 = vmatpush1.bf16.msra.mxu0 0
        %5299 = vmatprep.subr.bf16.mxu0 0
        %5300 = vmatpush1.bf16.msra.mxu0 0
        %5301 = vmatprep.subr.bf16.mxu0 0
        %5302 = vmatpush1.bf16.msra.mxu0 0
        %5303 = vmatprep.subr.bf16.mxu0 0
        %5304 = vmatpush1.bf16.msra.mxu0 0
        %5305 = vmatprep.mubr.bf16.mxu0 0
        %5306 = vmatmul.mubr.bf16.gmra.mrb[0].mxu0 %v5271
        %v5307 = vpop.f32.mrb[0].mxu0
        %v5308 = vadd.f32 0.0, %v5307
        %v5309 = vpop.f32.mrb[0].mxu0
        %v5310 = vadd.f32 0.0, %v5309
        %v5311 = vpop.f32.mrb[0].mxu0
        %v5312 = vpop.f32.mrb[0].mxu0
        %5313 = vdwg.mxu0
        %5314 = vmatprep.subr.bf16.mxu0 %v850
        %5315 = vmatpush1.bf16.msra.mxu0 %v849
        %5316 = vmatprep.subr.bf16.mxu0 %v854
        %5317 = vmatpush1.bf16.msra.mxu0 %v853
        %5318 = vmatprep.subr.bf16.mxu0 %v858
        %5319 = vmatpush1.bf16.msra.mxu0 %v857
        %5320 = vmatprep.subr.bf16.mxu0 %v862
        %5321 = vmatpush1.bf16.msra.mxu0 %v861
        %5322 = vmatprep.subr.bf16.mxu0 %v866
        %5323 = vmatpush1.bf16.msra.mxu0 %v865
        %5324 = vmatprep.subr.bf16.mxu0 %v870
        %5325 = vmatpush1.bf16.msra.mxu0 %v869
        %5326 = vmatprep.subr.bf16.mxu0 %v874
        %5327 = vmatpush1.bf16.msra.mxu0 %v873
        %5328 = vmatprep.subr.bf16.mxu0 %v878
        %5329 = vmatpush1.bf16.msra.mxu0 %v877
        %5330 = vmatprep.subr.bf16.mxu0 0
        %5331 = vmatpush1.bf16.msra.mxu0 0
        %5332 = vmatprep.subr.bf16.mxu0 0
        %5333 = vmatpush1.bf16.msra.mxu0 0
        %5334 = vmatprep.subr.bf16.mxu0 0
        %5335 = vmatpush1.bf16.msra.mxu0 0
        %5336 = vmatprep.subr.bf16.mxu0 0
        %5337 = vmatpush1.bf16.msra.mxu0 0
        %5338 = vmatprep.subr.bf16.mxu0 0
        %5339 = vmatpush1.bf16.msra.mxu0 0
        %5340 = vmatprep.subr.bf16.mxu0 0
        %5341 = vmatpush1.bf16.msra.mxu0 0
        %5342 = vmatprep.subr.bf16.mxu0 0
        %5343 = vmatpush1.bf16.msra.mxu0 0
        %5344 = vmatprep.subr.bf16.mxu0 0
        %5345 = vmatpush1.bf16.msra.mxu0 0
        %5346 = vmatprep.mubr.bf16.mxu0 0
        %5347 = vmatmul.mubr.bf16.gmra.mrb[0].mxu0 %v5271
        %v5348 = vpop.f32.mrb[0].mxu0
        %v5349 = vadd.f32 0.0, %v5348
        %v5350 = vpop.f32.mrb[0].mxu0
        %v5351 = vadd.f32 0.0, %v5350
        %v5352 = vpop.f32.mrb[0].mxu0
        %v5353 = vpop.f32.mrb[0].mxu0
        %5354 = vdwg.mxu0
        %v5359 = vrot.slane %v5308, 1
        %v5360 = vrot.slane %v5310, 1
        %v5361 = vrot.slane %v5349, 1
        %v5362 = vrot.slane %v5351, 1
        %v5363 = vrot.slane %v5308, 2
        %v5364 = vrot.slane %v5310, 2
        %v5365 = vrot.slane %v5349, 2
        %v5366 = vrot.slane %v5351, 2
        %v5367 = vrot.slane %v5308, 3
        %v5368 = vrot.slane %v5310, 3
        %v5369 = vrot.slane %v5349, 3
        %v5370 = vrot.slane %v5351, 3
        %v5371 = vrot.slane %v5308, 4
        %v5372 = vrot.slane %v5310, 4
        %v5373 = vrot.slane %v5349, 4
        %v5374 = vrot.slane %v5351, 4
        %v5375 = vrot.slane %v5308, 5
        %v5376 = vrot.slane %v5310, 5
        %v5377 = vrot.slane %v5349, 5
        %v5378 = vrot.slane %v5351, 5
        %v5379 = vrot.slane %v5308, 6
        %v5380 = vrot.slane %v5310, 6
        %v5381 = vrot.slane %v5349, 6
        %v5382 = vrot.slane %v5351, 6
        %v5383 = vrot.slane %v5308, 7
        %v5384 = vrot.slane %v5310, 7
        %v5385 = vrot.slane %v5349, 7
        %v5386 = vrot.slane %v5351, 7
        %v5419 = vadd.f32 %v517, %v5359
        %v5420 = vadd.f32 %v519, %v5360
        %v5421 = vadd.f32 %v590, %v5361
        %v5422 = vadd.f32 %v592, %v5362
        %v5423 = vadd.f32 %v521, %v5363
        %v5424 = vadd.f32 %v523, %v5364
        %v5425 = vadd.f32 %v594, %v5365
        %v5426 = vadd.f32 %v596, %v5366
        %v5427 = vadd.f32 %v527, %v5367
        %v5428 = vadd.f32 %v529, %v5368
        %v5429 = vadd.f32 %v600, %v5369
        %v5430 = vadd.f32 %v602, %v5370
        %v5431 = vadd.f32 %v531, %v5371
        %v5432 = vadd.f32 %v533, %v5372
        %v5433 = vadd.f32 %v604, %v5373
        %v5434 = vadd.f32 %v606, %v5374
        %v5435 = vadd.f32 %v537, %v5375
        %v5436 = vadd.f32 %v539, %v5376
        %v5437 = vadd.f32 %v610, %v5377
        %v5438 = vadd.f32 %v612, %v5378
        %v5439 = vadd.f32 %v541, %v5379
        %v5440 = vadd.f32 %v543, %v5380
        %v5441 = vadd.f32 %v614, %v5381
        %v5442 = vadd.f32 %v616, %v5382
        %v5443 = vadd.f32 %v547, %v5383
        %v5444 = vadd.f32 %v549, %v5384
        %v5445 = vadd.f32 %v620, %v5385
        %v5446 = vadd.f32 %v622, %v5386
        %v5447 = vadd.f32 %v551, %v5308
        %v5448 = vadd.f32 %v553, %v5310
        %v5449 = vadd.f32 %v624, %v5349
        %v5450 = vadd.f32 %v626, %v5351
        %v5451 = vxor.u32 %v5419, 2147483648
        %v5452 = vxor.u32 %v5423, 2147483648
        %v5453 = vxor.u32 %v5427, 2147483648
        %v5454 = vxor.u32 %v5431, 2147483648
        %v5455 = vxor.u32 %v5435, 2147483648
        %v5456 = vxor.u32 %v5439, 2147483648
        %v5457 = vxor.u32 %v5443, 2147483648
        %v5458 = vxor.u32 %v5447, 2147483648
        %v5459 = vmul.f32 %v5451, 1.442695
        %v5460 = vpow.pop %v5459
        %v5461 = vmul.f32 %v5452, 1.442695
        %v5462 = vpow.pop %v5461
        %v5463 = vmul.f32 %v5453, 1.442695
        %v5464 = vpow.pop %v5463
        %v5465 = vmul.f32 %v5454, 1.442695
        %v5466 = vpow.pop %v5465
        %v5467 = vmul.f32 %v5455, 1.442695
        %v5468 = vpow.pop %v5467
        %v5469 = vmul.f32 %v5456, 1.442695
        %v5470 = vpow.pop %v5469
        %v5471 = vmul.f32 %v5457, 1.442695
        %v5472 = vpow.pop %v5471
        %v5473 = vmul.f32 %v5458, 1.442695
        %v5474 = vpow.pop %v5473
        %v5475 = vadd.f32 %v5460, 1.0
        %v5476 = vadd.f32 %v5462, 1.0
        %v5477 = vadd.f32 %v5464, 1.0
        %v5478 = vadd.f32 %v5466, 1.0
        %v5479 = vadd.f32 %v5468, 1.0
        %v5480 = vadd.f32 %v5470, 1.0
        %v5481 = vadd.f32 %v5472, 1.0
        %v5482 = vadd.f32 %v5474, 1.0
        %v5483 = vrcp.pop %v5475
        %v5484 = vmul.f32 1.0, %v5483
        %v5485 = vrcp.pop %v5476
        %v5486 = vmul.f32 1.0, %v5485
        %v5487 = vrcp.pop %v5477
        %v5488 = vmul.f32 1.0, %v5487
        %v5489 = vrcp.pop %v5478
        %v5490 = vmul.f32 1.0, %v5489
        %v5491 = vrcp.pop %v5479
        %v5492 = vmul.f32 1.0, %v5491
        %v5493 = vrcp.pop %v5480
        %v5494 = vmul.f32 1.0, %v5493
        %v5495 = vrcp.pop %v5481
        %v5496 = vmul.f32 1.0, %v5495
        %v5497 = vrcp.pop %v5482
        %v5498 = vmul.f32 1.0, %v5497
        %v5499 = vxor.u32 %v5420, 2147483648
        %v5500 = vxor.u32 %v5424, 2147483648
        %v5501 = vxor.u32 %v5428, 2147483648
        %v5502 = vxor.u32 %v5432, 2147483648
        %v5503 = vxor.u32 %v5436, 2147483648
        %v5504 = vxor.u32 %v5440, 2147483648
        %v5505 = vxor.u32 %v5444, 2147483648
        %v5506 = vxor.u32 %v5448, 2147483648
        %v5507 = vmul.f32 %v5499, 1.442695
        %v5508 = vpow.pop %v5507
        %v5509 = vmul.f32 %v5500, 1.442695
        %v5510 = vpow.pop %v5509
        %v5511 = vmul.f32 %v5501, 1.442695
        %v5512 = vpow.pop %v5511
        %v5513 = vmul.f32 %v5502, 1.442695
        %v5514 = vpow.pop %v5513
        %v5515 = vmul.f32 %v5503, 1.442695
        %v5516 = vpow.pop %v5515
        %v5517 = vmul.f32 %v5504, 1.442695
        %v5518 = vpow.pop %v5517
        %v5519 = vmul.f32 %v5505, 1.442695
        %v5520 = vpow.pop %v5519
        %v5521 = vmul.f32 %v5506, 1.442695
        %v5522 = vpow.pop %v5521
        %v5523 = vadd.f32 %v5508, 1.0
        %v5524 = vadd.f32 %v5510, 1.0
        %v5525 = vadd.f32 %v5512, 1.0
        %v5526 = vadd.f32 %v5514, 1.0
        %v5527 = vadd.f32 %v5516, 1.0
        %v5528 = vadd.f32 %v5518, 1.0
        %v5529 = vadd.f32 %v5520, 1.0
        %v5530 = vadd.f32 %v5522, 1.0
        %v5531 = vrcp.pop %v5523
        %v5532 = vmul.f32 1.0, %v5531
        %v5533 = vrcp.pop %v5524
        %v5534 = vmul.f32 1.0, %v5533
        %v5535 = vrcp.pop %v5525
        %v5536 = vmul.f32 1.0, %v5535
        %v5537 = vrcp.pop %v5526
        %v5538 = vmul.f32 1.0, %v5537
        %v5539 = vrcp.pop %v5527
        %v5540 = vmul.f32 1.0, %v5539
        %v5541 = vrcp.pop %v5528
        %v5542 = vmul.f32 1.0, %v5541
        %v5543 = vrcp.pop %v5529
        %v5544 = vmul.f32 1.0, %v5543
        %v5545 = vrcp.pop %v5530
        %v5546 = vmul.f32 1.0, %v5545
        %v5547 = vtanh.pop %v5421
        %v5548 = vtanh.pop %v5425
        %v5549 = vtanh.pop %v5429
        %v5550 = vtanh.pop %v5433
        %v5551 = vtanh.pop %v5437
        %v5552 = vtanh.pop %v5441
        %v5553 = vtanh.pop %v5445
        %v5554 = vtanh.pop %v5449
        %v5555 = vxor.u32 %v5422, 2147483648
        %v5556 = vxor.u32 %v5426, 2147483648
        %v5557 = vxor.u32 %v5430, 2147483648
        %v5558 = vxor.u32 %v5434, 2147483648
        %v5559 = vxor.u32 %v5438, 2147483648
        %v5560 = vxor.u32 %v5442, 2147483648
        %v5561 = vxor.u32 %v5446, 2147483648
        %v5562 = vxor.u32 %v5450, 2147483648
        %v5563 = vmul.f32 %v5555, 1.442695
        %v5564 = vpow.pop %v5563
        %v5565 = vmul.f32 %v5556, 1.442695
        %v5566 = vpow.pop %v5565
        %v5567 = vmul.f32 %v5557, 1.442695
        %v5568 = vpow.pop %v5567
        %v5569 = vmul.f32 %v5558, 1.442695
        %v5570 = vpow.pop %v5569
        %v5571 = vmul.f32 %v5559, 1.442695
        %v5572 = vpow.pop %v5571
        %v5573 = vmul.f32 %v5560, 1.442695
        %v5574 = vpow.pop %v5573
        %v5575 = vmul.f32 %v5561, 1.442695
        %v5576 = vpow.pop %v5575
        %v5577 = vmul.f32 %v5562, 1.442695
        %v5578 = vpow.pop %v5577
        %v5579 = vadd.f32 %v5564, 1.0
        %v5580 = vadd.f32 %v5566, 1.0
        %v5581 = vadd.f32 %v5568, 1.0
        %v5582 = vadd.f32 %v5570, 1.0
        %v5583 = vadd.f32 %v5572, 1.0
        %v5584 = vadd.f32 %v5574, 1.0
        %v5585 = vadd.f32 %v5576, 1.0
        %v5586 = vadd.f32 %v5578, 1.0
        %v5587 = vrcp.pop %v5579
        %v5588 = vmul.f32 1.0, %v5587
        %v5589 = vrcp.pop %v5580
        %v5590 = vmul.f32 1.0, %v5589
        %v5591 = vrcp.pop %v5581
        %v5592 = vmul.f32 1.0, %v5591
        %v5593 = vrcp.pop %v5582
        %v5594 = vmul.f32 1.0, %v5593
        %v5595 = vrcp.pop %v5583
        %v5596 = vmul.f32 1.0, %v5595
        %v5597 = vrcp.pop %v5584
        %v5598 = vmul.f32 1.0, %v5597
        %v5599 = vrcp.pop %v5585
        %v5600 = vmul.f32 1.0, %v5599
        %v5601 = vrcp.pop %v5586
        %v5602 = vmul.f32 1.0, %v5601
        %v5611 = vrot.slane %v5069, 7
        %v5612 = vrot.slane %v5070, 7
        %v5613 = vrot.slane %v5071, 7
        %v5614 = vrot.slane %v5072, 7
        %v5615 = vrot.slane %v5073, 7
        %v5616 = vrot.slane %v5074, 7
        %v5617 = vrot.slane %v5075, 7
        %v5618 = vrot.slane %v5076, 7
        %v5627 = vmul.f32 %v5532, %v5611
        %v5628 = vmul.f32 %v5534, %v5612
        %v5629 = vmul.f32 %v5536, %v5613
        %v5630 = vmul.f32 %v5538, %v5614
        %v5631 = vmul.f32 %v5540, %v5615
        %v5632 = vmul.f32 %v5542, %v5616
        %v5633 = vmul.f32 %v5544, %v5617
        %v5634 = vmul.f32 %v5546, %v5618
        %v5635 = vmul.f32 %v5484, %v5547
        %v5636 = vmul.f32 %v5486, %v5548
        %v5637 = vmul.f32 %v5488, %v5549
        %v5638 = vmul.f32 %v5490, %v5550
        %v5639 = vmul.f32 %v5492, %v5551
        %v5640 = vmul.f32 %v5494, %v5552
        %v5641 = vmul.f32 %v5496, %v5553
        %v5642 = vmul.f32 %v5498, %v5554
        %v5643 = vadd.f32 %v5627, %v5635
        %v5644 = vadd.f32 %v5628, %v5636
        %v5645 = vadd.f32 %v5629, %v5637
        %v5646 = vadd.f32 %v5630, %v5638
        %v5647 = vadd.f32 %v5631, %v5639
        %v5648 = vadd.f32 %v5632, %v5640
        %v5649 = vadd.f32 %v5633, %v5641
        %v5650 = vadd.f32 %v5634, %v5642
        %v5651 = vtanh.pop %v5643
        %v5652 = vtanh.pop %v5644
        %v5653 = vtanh.pop %v5645
        %v5654 = vtanh.pop %v5646
        %v5655 = vtanh.pop %v5647
        %v5656 = vtanh.pop %v5648
        %v5657 = vtanh.pop %v5649
        %v5658 = vtanh.pop %v5650
        %v5659 = vmul.f32 %v5588, %v5651
        %v5660 = vmul.f32 %v5590, %v5652
        %v5661 = vmul.f32 %v5592, %v5653
        %v5662 = vmul.f32 %v5594, %v5654
        %v5663 = vmul.f32 %v5596, %v5655
        %v5664 = vmul.f32 %v5598, %v5656
        %v5665 = vmul.f32 %v5600, %v5657
        %v5666 = vmul.f32 %v5602, %v5658
        %v5675 = vrot.slane %v5660, 7
        %v5676 = vrot.slane %v5661, 6
        %v5677 = vsel %vm1306, %v5676, %v5675
        %v5678 = vrot.slane %v5662, 5
        %v5679 = vsel %vm1309, %v5678, %v5677
        %v5680 = vrot.slane %v5663, 4
        %v5681 = vsel %vm1312, %v5680, %v5679
        %v5682 = vrot.slane %v5664, 3
        %v5683 = vsel %vm1315, %v5682, %v5681
        %v5684 = vrot.slane %v5665, 2
        %v5685 = vsel %vm1318, %v5684, %v5683
        %v5686 = vrot.slane %v5666, 1
        %v5687 = vsel %vm1321, %v5686, %v5685
        %v5691 = vrot.slane %v5232, 1
        %v5693 = vpack.c.bf16 %v5687, %v5659
        %v5694 = vpack.c.bf16 %v5691, %v5691
        %v5696 = vshrl.u32 %v5693, 16
        %v5698 = vrot.slane %v5696, 3
        %v5699 = vshll.u32 %v5693, 16
        %v5701 = vrot.slane %v5699, 4
        %v5702 = vor.u32 %v5698, %v5701
        %v5704 = vshrl.u32 %v5694, 16
        %v5706 = vrot.slane %v5704, 3
        %v5707 = vshll.u32 %v5694, 16
        %v5709 = vrot.slane %v5707, 4
        %v5710 = vor.u32 %v5706, %v5709
        %5713 = vmatprep.subr.bf16.mxu0 %v1522
        %5714 = vmatpush1.bf16.msra.mxu0 %v1521
        %5715 = vmatprep.subr.bf16.mxu0 %v1526
        %5716 = vmatpush1.bf16.msra.mxu0 %v1525
        %5717 = vmatprep.subr.bf16.mxu0 %v1530
        %5718 = vmatpush1.bf16.msra.mxu0 %v1529
        %5719 = vmatprep.subr.bf16.mxu0 %v1534
        %5720 = vmatpush1.bf16.msra.mxu0 %v1533
        %5721 = vmatprep.subr.bf16.mxu0 %v1538
        %5722 = vmatpush1.bf16.msra.mxu0 %v1537
        %5723 = vmatprep.subr.bf16.mxu0 %v1542
        %5724 = vmatpush1.bf16.msra.mxu0 %v1541
        %5725 = vmatprep.subr.bf16.mxu0 %v1546
        %5726 = vmatpush1.bf16.msra.mxu0 %v1545
        %5727 = vmatprep.subr.bf16.mxu0 %v1550
        %5728 = vmatpush1.bf16.msra.mxu0 %v1549
        %5729 = vmatprep.subr.bf16.mxu0 %v1554
        %5730 = vmatpush1.bf16.msra.mxu0 %v1553
        %5731 = vmatprep.subr.bf16.mxu0 %v1558
        %5732 = vmatpush1.bf16.msra.mxu0 %v1557
        %5733 = vmatprep.subr.bf16.mxu0 %v1562
        %5734 = vmatpush1.bf16.msra.mxu0 %v1561
        %5735 = vmatprep.subr.bf16.mxu0 %v1566
        %5736 = vmatpush1.bf16.msra.mxu0 %v1565
        %5737 = vmatprep.subr.bf16.mxu0 %v1570
        %5738 = vmatpush1.bf16.msra.mxu0 %v1569
        %5739 = vmatprep.subr.bf16.mxu0 %v1574
        %5740 = vmatpush1.bf16.msra.mxu0 %v1573
        %5741 = vmatprep.subr.bf16.mxu0 %v1578
        %5742 = vmatpush1.bf16.msra.mxu0 %v1577
        %5743 = vmatprep.subr.bf16.mxu0 %v1582
        %5744 = vmatpush1.bf16.msra.mxu0 %v1581
        %5745 = vmatprep.mubr.bf16.mxu0 %v5710
        %5746 = vmatmul.mubr.bf16.gmra.mrb[0].mxu0 %v5702
        %v5747 = vpop.f32.mrb[0].mxu0
        %v5748 = vadd.f32 %v729, %v5747
        %v5749 = vpop.f32.mrb[0].mxu0
        %v5750 = vadd.f32 %v733, %v5749
        %v5751 = vpop.f32.mrb[0].mxu0
        %v5752 = vpop.f32.mrb[0].mxu0
        %5753 = vdwg.mxu0
        %5754 = vmatprep.subr.bf16.mxu0 %v1524
        %5755 = vmatpush1.bf16.msra.mxu0 %v1523
        %5756 = vmatprep.subr.bf16.mxu0 %v1528
        %5757 = vmatpush1.bf16.msra.mxu0 %v1527
        %5758 = vmatprep.subr.bf16.mxu0 %v1532
        %5759 = vmatpush1.bf16.msra.mxu0 %v1531
        %5760 = vmatprep.subr.bf16.mxu0 %v1536
        %5761 = vmatpush1.bf16.msra.mxu0 %v1535
        %5762 = vmatprep.subr.bf16.mxu0 %v1540
        %5763 = vmatpush1.bf16.msra.mxu0 %v1539
        %5764 = vmatprep.subr.bf16.mxu0 %v1544
        %5765 = vmatpush1.bf16.msra.mxu0 %v1543
        %5766 = vmatprep.subr.bf16.mxu0 %v1548
        %5767 = vmatpush1.bf16.msra.mxu0 %v1547
        %5768 = vmatprep.subr.bf16.mxu0 %v1552
        %5769 = vmatpush1.bf16.msra.mxu0 %v1551
        %5770 = vmatprep.subr.bf16.mxu0 %v1556
        %5771 = vmatpush1.bf16.msra.mxu0 %v1555
        %5772 = vmatprep.subr.bf16.mxu0 %v1560
        %5773 = vmatpush1.bf16.msra.mxu0 %v1559
        %5774 = vmatprep.subr.bf16.mxu0 %v1564
        %5775 = vmatpush1.bf16.msra.mxu0 %v1563
        %5776 = vmatprep.subr.bf16.mxu0 %v1568
        %5777 = vmatpush1.bf16.msra.mxu0 %v1567
        %5778 = vmatprep.subr.bf16.mxu0 %v1572
        %5779 = vmatpush1.bf16.msra.mxu0 %v1571
        %5780 = vmatprep.subr.bf16.mxu0 %v1576
        %5781 = vmatpush1.bf16.msra.mxu0 %v1575
        %5782 = vmatprep.subr.bf16.mxu0 %v1580
        %5783 = vmatpush1.bf16.msra.mxu0 %v1579
        %5784 = vmatprep.subr.bf16.mxu0 %v1584
        %5785 = vmatpush1.bf16.msra.mxu0 %v1583
        %5786 = vmatprep.mubr.bf16.mxu0 %v5710
        %5787 = vmatmul.mubr.bf16.gmra.mrb[0].mxu0 %v5702
        %v5788 = vpop.f32.mrb[0].mxu0
        %v5789 = vadd.f32 %v737, %v5788
        %v5790 = vpop.f32.mrb[0].mxu0
        %v5791 = vadd.f32 %v741, %v5790
        %v5792 = vpop.f32.mrb[0].mxu0
        %v5793 = vpop.f32.mrb[0].mxu0
        %5794 = vdwg.mxu0
        %v5795 = vxor.u32 %v5748, 2147483648
        %v5796 = vmul.f32 %v5795, 1.442695
        %v5797 = vpow.pop %v5796
        %v5798 = vadd.f32 %v5797, 1.0
        %v5799 = vrcp.pop %v5798
        %v5800 = vmul.f32 1.0, %v5799
        %v5801 = vxor.u32 %v5750, 2147483648
        %v5802 = vmul.f32 %v5801, 1.442695
        %v5803 = vpow.pop %v5802
        %v5804 = vadd.f32 %v5803, 1.0
        %v5805 = vrcp.pop %v5804
        %v5806 = vmul.f32 1.0, %v5805
        %v5807 = vtanh.pop %v5789
        %v5808 = vxor.u32 %v5791, 2147483648
        %v5809 = vmul.f32 %v5808, 1.442695
        %v5810 = vpow.pop %v5809
        %v5811 = vadd.f32 %v5810, 1.0
        %v5812 = vrcp.pop %v5811
        %v5813 = vmul.f32 1.0, %v5812
        %v5814 = vmul.f32 %v5806, %v5230
        %v5815 = vmul.f32 %v5800, %v5807
        %v5816 = vadd.f32 %v5814, %v5815
        %v5817 = vtanh.pop %v5816
        %v5818 = vmul.f32 %v5813, %v5817
        %5819 = vst [vmem:[#allocation2 - $0x7] sm:$0x80] %v5659
        %5820 = vst [vmem:[#allocation2 + $0x1] sm:$0x7f] %v5687
        %v5829 = vrot.slane %v5644, 7
        %v5830 = vrot.slane %v5645, 6
        %v5831 = vsel %vm1306, %v5830, %v5829
        %v5832 = vrot.slane %v5646, 5
        %v5833 = vsel %vm1309, %v5832, %v5831
        %v5834 = vrot.slane %v5647, 4
        %v5835 = vsel %vm1312, %v5834, %v5833
        %v5836 = vrot.slane %v5648, 3
        %v5837 = vsel %vm1315, %v5836, %v5835
        %v5838 = vrot.slane %v5649, 2
        %v5839 = vsel %vm1318, %v5838, %v5837
        %v5840 = vrot.slane %v5650, 1
        %v5841 = vsel %vm1321, %v5840, %v5839
        %5844 = vst [vmem:[#allocation3 - $0x7] sm:$0x80] %v5643
        %5845 = vst [vmem:[#allocation3 + $0x1] sm:$0x7f] %v5841
        %5846 = vst [vmem:[#allocation4] sm:$0xff] %v5818
        %5847 = vst [vmem:[#allocation5] sm:$0xff] %v5816
        %p5848 = scmp.eq.s32.totalorder %s27, 1
        // Predicated region
        $region99: #{tpu_custom_call.1} parent=85 // pred_check
          %p5849 = pneg %p5848
        $region100: #{tpu_custom_call.1} parent=85 // pred_check_branch
          %5851 = sbr.rel (%p5849) target = $region102
        $region101: #{tpu_custom_call.1} parent=85 // pred_region
          %v5852 = vld [vmem:[%s6] sm:$0x1]
          %v5854 = vlaneseq
          %v5855 = vshrl.u32 %v5854, 7
          %v5856 = vsub.s32 0, %v5855
          %v5857 = vrot.slane %v5852, %v5856
          %v5859 = vmul.f32 %v5818, %v5857
          %5860 = vadd.xlane.f32.xlu0 %v5859
          %v5861 = vpop.xlane.xlu0 %5860
          %v5862 = vld [vmem:[#allocation6] sm:$0x1]
          %v5864 = vlaneseq
          %v5865 = vshrl.u32 %v5864, 7
          %v5866 = vsub.s32 0, %v5865
          %v5867 = vrot.slane %v5862, %v5866
          %v5869 = vadd.f32 %v5861, %v5867
          %vm5870 = vcmask 7168
          %5871 = vst.msk [vmem:[%s400] sm:$0xff] %vm5870, %v5869
        $region102: #{tpu_custom_call.1} parent=85 // pred_fallthru
          _
        %p5872 = scmp.lt.s32.totalorder %s26, 1
        %s5873 = scalar_select %p5872, %s26, 1
        %s5874 = smul.addr %s5873, 8
        %s5875 = scalar_lea.vmem %s8, %s5874
        // Predicated region
        $region103: #{tpu_custom_call.1} parent=85 // pred_check
          %p5876 = pneg %p227
        $region104: #{tpu_custom_call.1} parent=85 // pred_check_branch
          %5878 = sbr.rel (%p5876) target = $region106
        $region105: #{tpu_custom_call.1} parent=85 // pred_region
          _
        $region106: #{tpu_custom_call.1} parent=85 // pred_fallthru
          _
      $region86: #{tpu_custom_call.1} parent=5 // pred_fallthru
        _
      %p5879 = scmp.le.s32.totalorder 2, %s17
      // Predicated region
      $region107: #{tpu_custom_call.1} parent=5 // pred_check
        %p5880 = pneg %p5879
      $region108: #{tpu_custom_call.1} parent=5 // pred_check_branch
        %5882 = sbr.rel (%p5880) target = $region110
      $region109: #{tpu_custom_call.1} parent=5 // pred_region
        %s5883 = ssub.s32 %s17, 2
        // Predicated region
        $region111: #{tpu_custom_call.1} parent=109 // pred_check
          %p5884 = pneg %p233
        $region112: #{tpu_custom_call.1} parent=109 // pred_check_branch
          %5886 = sbr.rel (%p5884) target = $region114
        $region113: #{tpu_custom_call.1} parent=109 // pred_region
          %p5887 = scmp.lt.s32.totalorder %s28, 1
          %s5888 = scalar_select %p5887, %s28, 1
          %s5889 = smul.addr %s5888, 8
          %s5890 = scalar_lea.vmem %s8, %s5889
        $region114: #{tpu_custom_call.1} parent=109 // pred_fallthru
          _
      $region110: #{tpu_custom_call.1} parent=5 // pred_fallthru
        _
    $region6: #{tpu_custom_call.1} parent=1 // loop_footer
      %s21 = sadd.s32 1, %s17
    $region7: #{tpu_custom_call.1} parent=1 // loop_footer_branch
      %16 = sbr.rel target = $region3
    $region8: #{tpu_custom_call.1} parent=1 // loop_exit
      _
    %5891 = vsyncpa [#allocation9], 1
    %s5892 = scalar_lea.sflag [#allocation9], 1
    %5893 = vsyncpa %s5892, 1

</llo_original>
